<compile_context>
chip_gen: v5e
topology: v5e:2x2
jax: 0.10.0
libtpu: 0.0.40
codegen_flags: <defaults>
</compile_context>

<pallas_src>
import functools

import jax
import jax.numpy as jnp
from jax.experimental import pallas as pl
from jax.experimental.pallas import tpu as pltpu

F32 = jnp.float32
BF16 = jnp.bfloat16


# ----------------------------- kernel helpers -------------------------------

def _gelu_exact(x):
    # PyTorch nn.GELU() default (erf-based, exact), kept in f32.
    return 0.5 * x * (1.0 + jax.lax.erf(x * 0.7071067811865476))


# ------------------------------ fused kernel ---------------------------------
# grid = (B, NK32):  axis 0 "parallel" (megacore on v7x), axis 1 "arbitrary"
# (K-chunks of the 1/32 stand-in patch embed; pe32_w streams while k==0 computes).

def _fused_kernel(
    tok16_ref, tok32_ref, pe16_w_ref, pe32_w_ref,
    w128_ref, w64_ref, vec128_ref, vec64_ref, misc_ref, prm_ref,
    fea32_ref, head_ref, prompt_ref,
    acc32_ref,
    *, dmid, d2, d3, E, nt3, nt4,
):
    f32 = jnp.float32
    k = pl.program_id(1)
    nk = pl.num_programs(1)

    # static row offsets into the packed 128-lane weight slab
    o_m32w1 = 0
    o_m32w2 = o_m32w1 + d3
    o_m1w1 = o_m32w2 + d2
    o_m1w2 = o_m1w1 + dmid
    o_head = o_m1w2 + E
    o_path = o_head + E                      # start of per-path prompt weights
    path_stride = 2 * E + d3 + 4 * E         # W1p + W2p + W4 + W_low

    def w128(off, n):
        # static slice of the bf16 slab, upcast at use site (dots accumulate f32)
        return w128_ref[off:off + n, :].astype(f32)

    # ---- 1/32 branch: K-chunked stand-in patch embed accumulation ------------
    @pl.when(k == 0)
    def _init():
        acc32_ref[...] = jnp.zeros_like(acc32_ref)

    acc32_ref[...] += jnp.dot(tok32_ref[0], pe32_w_ref[...],
                              preferred_element_type=f32)

    # ---- everything independent of pe32_w: once per batch block (k == 0) -----
    @pl.when(k == 0)
    def _main():
        # 1/16 branch: stand-in patch embed -> mlp16 -> norm1 -> mlp1 -> packed head
        x16 = jnp.dot(tok16_ref[0], pe16_w_ref[...], preferred_element_type=f32)
        x16 = x16 + vec128_ref[0:1, :]                               # pe16 bias
        h = _gelu_exact(jnp.dot(x16, w64_ref[0:d2, :],
                                preferred_element_type=f32) + vec64_ref[0:1, :])
        x = jnp.dot(h, w64_ref[d2:d2 + dmid, :],
                    preferred_element_type=f32) + vec64_ref[1:2, :]
        # TODO(synk): fuse_32_16 (decoder_module) is external/undefined; the 1/16
        # tokens pass straight into norm1 in this stand-in.

        # norm1 (nn.LayerNorm, eps=1e-5), f32
        mu = jnp.mean(x, axis=-1, keepdims=True)
        xc = x - mu
        var = jnp.mean(xc * xc, axis=-1, keepdims=True)
        x = xc * jax.lax.rsqrt(var + 1e-5) * vec64_ref[2:3, :] + vec64_ref[3:4, :]

        # mlp1
        h = _gelu_exact(jnp.dot(x, w128(o_m1w1, dmid),
                                preferred_element_type=f32) + vec128_ref[3:4, :])
        x = jnp.dot(h, w128(o_m1w2, E), preferred_element_type=f32) + vec128_ref[4:5, :]

        # TODO(synk): Transformer / token_Transformer / Decoder are external/undefined;
        # stand-in packed (saliency, edge) head, lanes 0/1 meaningful (lane-dense store).
        logits = jnp.dot(x, w128(o_head, E),
                         preferred_element_type=f32) + vec128_ref[5:6, :]
        head_ref[0] = logits.astype(head_ref.dtype)

        # low-level prompt pathway (S and E) — batch independent, tiny
        rows = []
        for s in range(2):                                   # s=0 -> S, s=1 -> E
            base = o_path + s * path_stride
            vb = 6 + 4 * s
            pb = (2 + nt3) * s
            p1 = prm_ref[pb + 0:pb + 1, :]                   # zero-padded beyond d0
            p2 = prm_ref[pb + 1:pb + 2, :]                   # zero-padded beyond d1
            p3 = prm_ref[pb + 2:pb + 2 + nt3, :]
            p4 = misc_ref[1 + nt4 * s:1 + nt4 * (s + 1), :]
            a1 = jnp.dot(p1, w128(base, E),
                         preferred_element_type=f32) + vec128_ref[vb:vb + 1, :]
            a2 = jnp.dot(p2, w128(base + E, E),
                         preferred_element_type=f32) + vec128_ref[vb + 1:vb + 2, :]
            a3 = jnp.mean(p3, axis=0, keepdims=True)
            a4 = jnp.mean(jnp.dot(p4, w128(base + 2 * E, d3),
                                  preferred_element_type=f32)
                          + vec128_ref[vb + 2:vb + 3, :], axis=0, keepdims=True)
            wl = base + 2 * E + d3
            acc = vec128_ref[vb + 3:vb + 4, :]               # linear{S,E}_low bias
            acc = acc + jnp.dot(a1, w128(wl + 0 * E, E), preferred_element_type=f32)
            acc = acc + jnp.dot(a2, w128(wl + 1 * E, E), preferred_element_type=f32)
            acc = acc + jnp.dot(a3, w128(wl + 2 * E, E), preferred_element_type=f32)
            acc = acc + jnp.dot(a4, w128(wl + 3 * E, E), preferred_element_type=f32)
            rows.append(acc)
        prompt_ref[0] = jnp.concatenate(rows, axis=0).astype(prompt_ref.dtype)

    # ---- mlp32 tail once the full 1/32 patch embed has accumulated ------------
    @pl.when(k == nk - 1)
    def _fin32():
        x32 = acc32_ref[...] + misc_ref[0:1, :]              # pe32 bias
        h = _gelu_exact(jnp.dot(x32, w128(o_m32w1, d3),
                                preferred_element_type=f32) + vec128_ref[1:2, :])
        y = jnp.dot(h, w128(o_m32w2, d2),
                    preferred_element_type=f32) + vec128_ref[2:3, :]
        fea32_ref[0] = y.astype(fea32_ref.dtype)
        # TODO(synk): fea32 would feed fuse_32_16 (decoder_module), external/undefined.


# ------------------------------- glue helpers --------------------------------

def patchify(x_nchw, patch):
    B, C, H, W = x_nchw.shape
    x = x_nchw.reshape(B, C, H // patch, patch, W // patch, patch)
    x = x.transpose(0, 2, 4, 1, 3, 5)
    return x.reshape(B, (H // patch) * (W // patch), C * patch * patch)


# ------------------------------- model config --------------------------------

class Args:
    task_num = [1, 1, 2, 2]           # task_num[0]==task_num[1]==1 (required by the dim=2 concat)
    encoder_dim = [32, 64, 128, 256]  # encoder_dim[2] must equal embed_dim (4*E concat)
    dim = 64
    embed_dim = 128
    batchsize = 2
    trainsize = 64


def init_params(key, args):
    keys = iter(jax.random.split(key, 40))
    p = {}
    for i in range(4):
        p[f"task_promptS_{i + 1}"] = jax.random.normal(
            next(keys), (1, args.task_num[i], args.encoder_dim[i]), F32)
        p[f"task_promptE_{i + 1}"] = jax.random.normal(
            next(keys), (1, args.task_num[i], args.encoder_dim[i]), F32)

    def lin(fi, fo):
        return {"w": jax.random.normal(next(keys), (fi, fo), F32) * 0.02,
                "b": jnp.zeros((fo,), F32)}

    d0, d1, d2, d3 = args.encoder_dim
    p["mlp32"] = {"l1": lin(d3, d2), "l2": lin(d2, d2)}
    p["mlp16"] = {"l1": lin(d2, args.dim), "l2": lin(args.dim, args.dim)}
    p["mlp1"] = {"l1": lin(args.dim, args.embed_dim), "l2": lin(args.embed_dim, args.embed_dim)}
    p["norm1"] = {"g": jnp.ones((args.dim,), F32), "b": jnp.zeros((args.dim,), F32)}
    p["linearS1"] = lin(d0, args.embed_dim)
    p["linearS2"] = lin(d1, args.embed_dim)
    p["linearS4"] = lin(d3, args.embed_dim)
    p["linearE1"] = lin(d0, args.embed_dim)
    p["linearE2"] = lin(d1, args.embed_dim)
    p["linearE4"] = lin(d3, args.embed_dim)
    p["linearS_low"] = lin(args.embed_dim * 4, args.embed_dim)
    p["linearE_low"] = lin(args.embed_dim * 4, args.embed_dim)
    # TODO(synk): swin backbone is external/undefined; stand-in patch embeds only for
    # the scales consumed by MTPNet's own defined modules (1/16 and 1/32).
    p["patch_embed16"] = lin(3 * 16 * 16, d2)
    p["patch_embed32"] = lin(3 * 32 * 32, d3)
    # TODO(synk): Transformer/token_Transformer/Decoder are external/undefined;
    # stand-in packed (saliency, edge) projection head.
    p["head_se"] = lin(args.embed_dim, 2)
    return p


# ----------------------- one-time weight packing (bf16) -----------------------

def pack_params(params, args):
    """Pack the many small MTPNet tensors into a few lane-dense arrays (done ONCE,
    outside the jitted forward, so the per-call kernel reads fewer/smaller DMAs)."""
    d0, d1, d2, d3 = args.encoder_dim
    dim, E = args.dim, args.embed_dim
    nt3, nt4 = args.task_num[2], args.task_num[3]
    assert args.task_num[0] == 1 and args.task_num[1] == 1, "dim=2 concat needs task_num[0:2]==1"
    assert d2 == E, "torch concat width 4*embed_dim requires encoder_dim[2] == embed_dim"

    def padrows(w, rows):
        return jnp.zeros((rows, w.shape[1]), F32).at[:w.shape[0]].set(w)

    def padcols(v, width):
        return jnp.zeros((v.shape[0], width), F32).at[:, :v.shape[1]].set(v)

    # packed (saliency, edge) head, lane-padded to 128 -> unmasked stores
    head_w = jnp.zeros((E, 128), F32).at[:, :2].set(params["head_se"]["w"])
    head_b = jnp.zeros((128,), F32).at[:2].set(params["head_se"]["b"])

    # --- 128-lane weight slab (matmul-only -> bf16) ---
    blocks = [
        params["mlp32"]["l1"]["w"],           # (d3, d2)
        params["mlp32"]["l2"]["w"],           # (d2, d2)
        params["mlp1"]["l1"]["w"],            # (dim, E)
        params["mlp1"]["l2"]["w"],            # (E, E)
        head_w,                               # (E, 128)
    ]
    for t in ("S", "E"):
        blocks += [
            padrows(params[f"linear{t}1"]["w"], E),   # (d0,E) -> zero-padded rows
            padrows(params[f"linear{t}2"]["w"], E),   # (d1,E) -> zero-padded rows
            params[f"linear{t}4"]["w"],               # (d3, E)
            params[f"linear{t}_low"]["w"],            # (4E, E)
        ]
    w128 = jnp.concatenate(blocks, axis=0).astype(BF16)
    assert w128.shape[0] == d3 + d2 + dim + E + E + 2 * (2 * E + d3 + 4 * E)

    # --- 64-lane weight slab (mlp16, tiny -> keep f32) ---
    w64 = jnp.concatenate([params["mlp16"]["l1"]["w"],
                           params["mlp16"]["l2"]["w"]], axis=0).astype(F32)

    # --- 128-wide bias/vector pack (f32) ---
    v128 = [
        params["patch_embed16"]["b"], params["mlp32"]["l1"]["b"], params["mlp32"]["l2"]["b"],
        params["mlp1"]["l1"]["b"], params["mlp1"]["l2"]["b"], head_b,
    ]
    for t in ("S", "E"):
        v128 += [params[f"linear{t}1"]["b"], params[f"linear{t}2"]["b"],
                 params[f"linear{t}4"]["b"], params[f"linear{t}_low"]["b"]]
    vec128 = jnp.zeros((16, 128), F32).at[:len(v128)].set(jnp.stack(v128, axis=0))

    # --- 64-wide vector pack (f32): mlp16 biases + norm1 ---
    v64 = jnp.stack([params["mlp16"]["l1"]["b"], params["mlp16"]["l2"]["b"],
                     params["norm1"]["g"], params["norm1"]["b"]], axis=0)
    vec64 = jnp.zeros((8, dim), F32).at[:4].set(v64)

    # --- 256-wide pack (f32): pe32 bias + P4_S + P4_E ---
    m256 = jnp.concatenate([params["patch_embed32"]["b"].reshape(1, d3),
                            params["task_promptS_4"][0], params["task_promptE_4"][0]], axis=0)
    misc256 = jnp.zeros((8, d3), F32).at[:1 + 2 * nt4].set(m256)

    # --- 128-wide prompt pack (f32): [P1, P2, P3-rows] per path, zero lane-padded ---
    prm = jnp.concatenate([
        padcols(params["task_promptS_1"][0], 128), padcols(params["task_promptS_2"][0], 128),
        params["task_promptS_3"][0],
        padcols(params["task_promptE_1"][0], 128), padcols(params["task_promptE_2"][0], 128),
        params["task_promptE_3"][0],
    ], axis=0).astype(F32)                                   # (2*(2+nt3), 128)

    return {
        "pe16_w": params["patch_embed16"]["w"].astype(BF16),
        "pe32_w": params["patch_embed32"]["w"].astype(BF16),
        "w128": w128, "w64": w64, "vec128": vec128, "vec64": vec64,
        "misc256": misc256, "prompt": prm,
    }


# ------------------------------- forward pass --------------------------------

def mtpnet_forward(params, packed, x, args):
    B = args.batchsize
    half = B // 2
    E = args.embed_dim
    d2, d3 = args.encoder_dim[2], args.encoder_dim[3]
    assert args.trainsize % 32 == 0
    T16 = (args.trainsize // 16) ** 2
    T32 = (args.trainsize // 32) ** 2

    # TODO(synk): swin_transformer backbone is external/undefined; stand-in = per-scale
    # non-overlapping patch embed (only 1/16 and 1/32 are consumed by defined modules).
    tok16 = patchify(x, 16).astype(BF16)          # (B, T16, 3*16*16)
    tok32 = patchify(x, 32).astype(BF16)          # (B, T32, 3*32*32)
    K16, K32 = tok16.shape[-1], tok32.shape[-1]

    # K-chunk the 1/32 contraction so the big pe32_w DMA overlaps the k==0 compute.
    NK32 = 4 if (K32 % (4 * 128) == 0) else (2 if K32 % (2 * 128) == 0 else 1)
    KCHUNK = K32 // NK32

    kern = functools.partial(
        _fused_kernel, dmid=args.dim, d2=d2, d3=d3, E=E,
        nt3=args.task_num[2], nt4=args.task_num[3])

    fea32, head, prompt = pl.pallas_call(
        kern,
        grid=(B, NK32),
        in_specs=[
            pl.BlockSpec((1, T16, K16), lambda b, k: (b, 0, 0)),       # tok16 (bf16)
            pl.BlockSpec((1, T32, KCHUNK), lambda b, k: (b, 0, k)),    # tok32 (bf16, K-chunked)
            pl.BlockSpec((K16, d2), lambda b, k: (0, 0)),              # pe16_w (bf16)
            pl.BlockSpec((KCHUNK, d3), lambda b, k: (k, 0)),           # pe32_w (bf16, K-chunked)
            pl.BlockSpec(packed["w128"].shape, lambda b, k: (0, 0)),   # packed bf16 weights
            pl.BlockSpec(packed["w64"].shape, lambda b, k: (0, 0)),    # mlp16 weights (f32)
            pl.BlockSpec(packed["vec128"].shape, lambda b, k: (0, 0)),
            pl.BlockSpec(packed["vec64"].shape, lambda b, k: (0, 0)),
            pl.BlockSpec(packed["misc256"].shape, lambda b, k: (0, 0)),
            pl.BlockSpec(packed["prompt"].shape, lambda b, k: (0, 0)),
        ],
        out_specs=(
            pl.BlockSpec((1, T32, d2), lambda b, k: (b, 0, 0)),        # mlp32 output
            pl.BlockSpec((1, T16, 128), lambda b, k: (b, 0, 0)),       # packed head logits
            pl.BlockSpec((1, 2, E), lambda b, k: (b, 0, 0)),           # prompt S/E rows
        ),
        out_shape=(
            jax.ShapeDtypeStruct((B, T32, d2), F32),
            jax.ShapeDtypeStruct((B, T16, 128), F32),
            jax.ShapeDtypeStruct((B, 2, E), F32),
        ),
        scratch_shapes=[pltpu.VMEM((T32, d3), jnp.float32)],           # 1/32 K-accumulator
        compiler_params=pltpu.CompilerParams(
            dimension_semantics=("parallel", "arbitrary")),
    )(tok16, tok32, packed["pe16_w"], packed["pe32_w"],
      packed["w128"], packed["w64"], packed["vec128"], packed["vec64"],
      packed["misc256"], packed["prompt"])

    del fea32  # TODO(synk): would feed fuse_32_16 (decoder_module), external/undefined.

    h16 = args.trainsize // 16
    sal = head[:, :, 0].reshape(B, 1, h16, h16)
    edg = head[:, :, 1].reshape(B, 1, h16, h16)
    outputs_saliency, outputs_edg = sal, edg
    outputs_saliency_s, outputs_edg_s = sal, edg

    # TODO(synk): Transformer / token_Transformer / Decoder are external/undefined; the
    # placeholder fea_1_1 is a 16x nearest-neighbour upsample of sigmoid(saliency logits)
    # (sigmoid∘NN-upsample == NN-upsample∘sigmoid, so sigmoid runs on the tiny map).
    sal_sig = jax.nn.sigmoid(sal)
    fea_1_1_sig = jnp.repeat(jnp.repeat(sal_sig, 16, axis=2), 16, axis=3)
    all_dict = {"fea_1_1": fea_1_1_sig}

    # TODO(synk): task_prompt_total1 comes from token_Transformer (undefined); stand-in
    # is the same tiled prompt list that would have been fed to the backbone.
    pS = [params[f"task_promptS_{i + 1}"] for i in range(4)]
    pE = [params[f"task_promptE_{i + 1}"] for i in range(4)]
    task_prompt_total1 = [
        jnp.concatenate([jnp.tile(pS[i], (half, 1, 1)), jnp.tile(pE[i], (half, 1, 1))], axis=0)
        for i in range(4)
    ]

    task_promptS = prompt[0, 0:1].reshape(1, 1, E)
    task_promptE = prompt[0, 1:2].reshape(1, 1, E)
    task_prompt_total2 = [task_promptS, task_promptE]

    return (task_prompt_total2, task_prompt_total1, outputs_saliency, outputs_edg,
            outputs_saliency_s, outputs_edg_s, all_dict)


# ----------------------------------- main -------------------------------------

if __name__ == "__main__":
    args = Args()
    key = jax.random.PRNGKey(0)
    kp, kx = jax.random.split(key)
    params = init_params(kp, args)
    packed = pack_params(params, args)        # one-time packing / bf16 cast (outside jit)
    x = jax.random.normal(kx, (args.batchsize, 3, args.trainsize, args.trainsize), F32)

    fwd = jax.jit(functools.partial(mtpnet_forward, args=args))
    outs = fwd(params, packed, x)
    jax.block_until_ready(outs)
    print("KERNEL_OK")
</pallas_src>

<mosaic_0001>
module attributes {stable_mosaic.version = 11 : i64} {
  func.func @_fused_kernel(%arg0: i32, %arg1: i32, %arg2: memref<1x16x768xbf16, #tpu.memory_space<vmem>>, %arg3: memref<1x4x768xbf16, #tpu.memory_space<vmem>>, %arg4: memref<768x128xbf16, #tpu.memory_space<vmem>>, %arg5: memref<768x256xbf16, #tpu.memory_space<vmem>>, %arg6: memref<2752x128xbf16, #tpu.memory_space<vmem>>, %arg7: memref<192x64xf32, #tpu.memory_space<vmem>>, %arg8: memref<16x128xf32, #tpu.memory_space<vmem>>, %arg9: memref<8x64xf32, #tpu.memory_space<vmem>>, %arg10: memref<8x256xf32, #tpu.memory_space<vmem>>, %arg11: memref<8x128xf32, #tpu.memory_space<vmem>>, %arg12: memref<1x4x128xf32, #tpu.memory_space<vmem>>, %arg13: memref<1x16x128xf32, #tpu.memory_space<vmem>>, %arg14: memref<1x2x128xf32, #tpu.memory_space<vmem>>, %arg15: memref<4x256xf32, #tpu.memory_space<vmem>>) attributes {dimension_semantics = [#tpu.dimension_semantics<parallel>, #tpu.dimension_semantics<arbitrary>], iteration_bounds = array<i64: 2, 4>, scalar_prefetch = 0 : i64, scratch_operands = 1 : i64, tpu.core_type = #tpu.core_type<tc>, window_params = [{transform_indices = @transform_0, window_bounds = array<i64: 1, 16, 768>}, {transform_indices = @transform_1, window_bounds = array<i64: 1, 4, 768>}, {pipeline_mode = #tpu.pipeline_mode<synchronous>, transform_indices = @transform_2, window_bounds = array<i64: 768, 128>}, {transform_indices = @transform_3, window_bounds = array<i64: 768, 256>}, {pipeline_mode = #tpu.pipeline_mode<synchronous>, transform_indices = @transform_4, window_bounds = array<i64: 2752, 128>}, {pipeline_mode = #tpu.pipeline_mode<synchronous>, transform_indices = @transform_5, window_bounds = array<i64: 192, 64>}, {pipeline_mode = #tpu.pipeline_mode<synchronous>, transform_indices = @transform_6, window_bounds = array<i64: 16, 128>}, {pipeline_mode = #tpu.pipeline_mode<synchronous>, transform_indices = @transform_7, window_bounds = array<i64: 8, 64>}, {pipeline_mode = #tpu.pipeline_mode<synchronous>, transform_indices = @transform_8, window_bounds = array<i64: 8, 256>}, {pipeline_mode = #tpu.pipeline_mode<synchronous>, transform_indices = @transform_9, window_bounds = array<i64: 8, 128>}, {transform_indices = @transform_10, window_bounds = array<i64: 1, 4, 128>}, {transform_indices = @transform_11, window_bounds = array<i64: 1, 16, 128>}, {transform_indices = @transform_12, window_bounds = array<i64: 1, 2, 128>}]} {
    %c0_i32 = arith.constant 0 : i32
    %0 = arith.cmpi eq, %arg1, %c0_i32 : i32
    %1 = arith.extui %0 : i1 to i32
    %c0_i32_0 = arith.constant 0 : i32
    %2 = arith.cmpi ne, %1, %c0_i32_0 : i32
    scf.if %2 {
      %cst_12 = arith.constant 0.000000e+00 : f32
      %16 = vector.broadcast %cst_12 : f32 to vector<4x256xf32>
      %c0_13 = arith.constant 0 : index
      %c0_14 = arith.constant 0 : index
      %17 = vector.load %arg15[%c0_13, %c0_14] : memref<4x256xf32, #tpu.memory_space<vmem>>, vector<4x256xf32>
      tpu.vector_store %arg15[%c0_13, %c0_14], %16 {strides = array<i32>} : memref<4x256xf32, #tpu.memory_space<vmem>>, vector<4x256xf32>,
    } else {
    }
    %c0 = arith.constant 0 : index
    %c0_1 = arith.constant 0 : index
    %3 = vector.load %arg15[%c0, %c0_1] : memref<4x256xf32, #tpu.memory_space<vmem>>, vector<4x256xf32>
    %c0_2 = arith.constant 0 : index
    %c0_3 = arith.constant 0 : index
    %c0_4 = arith.constant 0 : index
    %4 = vector.load %arg3[%c0_2, %c0_3, %c0_4] : memref<1x4x768xbf16, #tpu.memory_space<vmem>>, vector<1x4x768xbf16>
    %5 = vector.shape_cast %4 : vector<1x4x768xbf16> to vector<4x768xbf16>
    %c0_5 = arith.constant 0 : index
    %c0_6 = arith.constant 0 : index
    %6 = vector.load %arg5[%c0_5, %c0_6] : memref<768x256xbf16, #tpu.memory_space<vmem>>, vector<768x256xbf16>
    %cst = arith.constant dense<0.000000e+00> : vector<4x256xf32>
    %7 = tpu.matmul %5, %6, %cst {dimension_numbers = #tpu.dot_dimension_numbers<[1], [0], [0], [1], [0, 0, 1, 1], [], []>} : vector<4x768xbf16>, vector<768x256xbf16>, vector<4x256xf32> -> vector<4x256xf32>
    %8 = arith.addf %3, %7 : vector<4x256xf32>
    %c0_7 = arith.constant 0 : index
    %c0_8 = arith.constant 0 : index
    %9 = vector.load %arg15[%c0_7, %c0_8] : memref<4x256xf32, #tpu.memory_space<vmem>>, vector<4x256xf32>
    tpu.vector_store %arg15[%c0_7, %c0_8], %8 {strides = array<i32>} : memref<4x256xf32, #tpu.memory_space<vmem>>, vector<4x256xf32>,
    %c0_i32_9 = arith.constant 0 : i32
    %10 = arith.cmpi eq, %arg1, %c0_i32_9 : i32
    %11 = arith.extui %10 : i1 to i32
    %c0_i32_10 = arith.constant 0 : i32
    %12 = arith.cmpi ne, %11, %c0_i32_10 : i32
    scf.if %12 {
      %c0_12 = arith.constant 0 : index
      %c0_13 = arith.constant 0 : index
      %c0_14 = arith.constant 0 : index
      %16 = vector.load %arg2[%c0_12, %c0_13, %c0_14] : memref<1x16x768xbf16, #tpu.memory_space<vmem>>, vector<1x16x768xbf16>
      %17 = vector.shape_cast %16 : vector<1x16x768xbf16> to vector<16x768xbf16>
      %c0_15 = arith.constant 0 : index
      %c0_16 = arith.constant 0 : index
      %18 = vector.load %arg4[%c0_15, %c0_16] : memref<768x128xbf16, #tpu.memory_space<vmem>>, vector<768x128xbf16>
      %cst_17 = arith.constant dense<0.000000e+00> : vector<16x128xf32>
      %19 = tpu.matmul %17, %18, %cst_17 {dimension_numbers = #tpu.dot_dimension_numbers<[1], [0], [0], [1], [0, 0, 1, 1], [], []>} : vector<16x768xbf16>, vector<768x128xbf16>, vector<16x128xf32> -> vector<16x128xf32>
      %c0_18 = arith.constant 0 : index
      %c0_19 = arith.constant 0 : index
      %20 = vector.load %arg8[%c0_18, %c0_19] : memref<16x128xf32, #tpu.memory_space<vmem>>, vector<1x128xf32>
      %21 = vector.broadcast %20 : vector<1x128xf32> to vector<16x128xf32>
      %22 = arith.addf %19, %21 : vector<16x128xf32>
      %c0_20 = arith.constant 0 : index
      %c0_21 = arith.constant 0 : index
      %23 = vector.load %arg7[%c0_20, %c0_21] : memref<192x64xf32, #tpu.memory_space<vmem>>, vector<128x64xf32>
      %cst_22 = arith.constant dense<0.000000e+00> : vector<16x64xf32>
      %24 = tpu.matmul %22, %23, %cst_22 {dimension_numbers = #tpu.dot_dimension_numbers<[1], [0], [0], [1], [0, 0, 1, 1], [], []>} : vector<16x128xf32>, vector<128x64xf32>, vector<16x64xf32> -> vector<16x64xf32>
      %c0_23 = arith.constant 0 : index
      %c0_24 = arith.constant 0 : index
      %25 = vector.load %arg9[%c0_23, %c0_24] : memref<8x64xf32, #tpu.memory_space<vmem>>, vector<1x64xf32>
      %26 = vector.broadcast %25 : vector<1x64xf32> to vector<16x64xf32>
      %27 = arith.addf %24, %26 : vector<16x64xf32>
      %cst_25 = arith.constant 5.000000e-01 : f32
      %28 = vector.broadcast %cst_25 : f32 to vector<16x64xf32>
      %29 = arith.mulf %28, %27 : vector<16x64xf32>
      %cst_26 = arith.constant 0.707106769 : f32
      %30 = vector.broadcast %cst_26 : f32 to vector<16x64xf32>
      %31 = arith.mulf %27, %30 : vector<16x64xf32>
      %32 = math.erf %31 : vector<16x64xf32>
      %cst_27 = arith.constant 1.000000e+00 : f32
      %33 = vector.broadcast %cst_27 : f32 to vector<16x64xf32>
      %34 = arith.addf %33, %32 : vector<16x64xf32>
      %35 = arith.mulf %29, %34 : vector<16x64xf32>
      %c128 = arith.constant 128 : index
      %c0_28 = arith.constant 0 : index
      %36 = vector.load %arg7[%c128, %c0_28] : memref<192x64xf32, #tpu.memory_space<vmem>>, vector<64x64xf32>
      %cst_29 = arith.constant dense<0.000000e+00> : vector<16x64xf32>
      %37 = tpu.matmul %35, %36, %cst_29 {dimension_numbers = #tpu.dot_dimension_numbers<[1], [0], [0], [1], [0, 0, 1, 1], [], []>} : vector<16x64xf32>, vector<64x64xf32>, vector<16x64xf32> -> vector<16x64xf32>
      %c1 = arith.constant 1 : index
      %c0_30 = arith.constant 0 : index
      %38 = vector.load %arg9[%c1, %c0_30] : memref<8x64xf32, #tpu.memory_space<vmem>>, vector<1x64xf32>
      %39 = vector.broadcast %38 : vector<1x64xf32> to vector<16x64xf32>
      %40 = arith.addf %37, %39 : vector<16x64xf32>
      %cst_31 = arith.constant dense<0.000000e+00> : vector<16xf32>
      %41 = vector.multi_reduction <add>, %40, %cst_31 [1] : vector<16x64xf32> to vector<16xf32>
      %42 = vector.shape_cast %41 : vector<16xf32> to vector<16x1xf32>
      %cst_32 = arith.constant 6.400000e+01 : f32
      %43 = vector.broadcast %cst_32 : f32 to vector<16x1xf32>
      %44 = arith.divf %42, %43 : vector<16x1xf32>
      %45 = vector.broadcast %44 : vector<16x1xf32> to vector<16x64xf32>
      %46 = arith.subf %40, %45 : vector<16x64xf32>
      %47 = arith.mulf %46, %46 : vector<16x64xf32>
      %cst_33 = arith.constant dense<0.000000e+00> : vector<16xf32>
      %48 = vector.multi_reduction <add>, %47, %cst_33 [1] : vector<16x64xf32> to vector<16xf32>
      %49 = vector.shape_cast %48 : vector<16xf32> to vector<16x1xf32>
      %cst_34 = arith.constant 6.400000e+01 : f32
      %50 = vector.broadcast %cst_34 : f32 to vector<16x1xf32>
      %51 = arith.divf %49, %50 : vector<16x1xf32>
      %cst_35 = arith.constant 9.99999974E-6 : f32
      %52 = vector.broadcast %cst_35 : f32 to vector<16x1xf32>
      %53 = arith.addf %51, %52 : vector<16x1xf32>
      %54 = math.rsqrt %53 : vector<16x1xf32>
      %55 = vector.broadcast %54 : vector<16x1xf32> to vector<16x64xf32>
      %56 = arith.mulf %46, %55 : vector<16x64xf32>
      %c2 = arith.constant 2 : index
      %c0_36 = arith.constant 0 : index
      %57 = vector.load %arg9[%c2, %c0_36] : memref<8x64xf32, #tpu.memory_space<vmem>>, vector<1x64xf32>
      %58 = vector.broadcast %57 : vector<1x64xf32> to vector<16x64xf32>
      %59 = arith.mulf %56, %58 : vector<16x64xf32>
      %c3 = arith.constant 3 : index
      %c0_37 = arith.constant 0 : index
      %60 = vector.load %arg9[%c3, %c0_37] : memref<8x64xf32, #tpu.memory_space<vmem>>, vector<1x64xf32>
      %61 = vector.broadcast %60 : vector<1x64xf32> to vector<16x64xf32>
      %62 = arith.addf %59, %61 : vector<16x64xf32>
      %c384 = arith.constant 384 : index
      %c0_38 = arith.constant 0 : index
      %63 = vector.load %arg6[%c384, %c0_38] : memref<2752x128xbf16, #tpu.memory_space<vmem>>, vector<64x128xbf16>
      %64 = arith.extf %63 : vector<64x128xbf16> to vector<64x128xf32>
      %cst_39 = arith.constant dense<0.000000e+00> : vector<16x128xf32>
      %65 = tpu.matmul %62, %64, %cst_39 {dimension_numbers = #tpu.dot_dimension_numbers<[1], [0], [0], [1], [0, 0, 1, 1], [], []>} : vector<16x64xf32>, vector<64x128xf32>, vector<16x128xf32> -> vector<16x128xf32>
      %c3_40 = arith.constant 3 : index
      %c0_41 = arith.constant 0 : index
      %66 = vector.load %arg8[%c3_40, %c0_41] : memref<16x128xf32, #tpu.memory_space<vmem>>, vector<1x128xf32>
      %67 = vector.broadcast %66 : vector<1x128xf32> to vector<16x128xf32>
      %68 = arith.addf %65, %67 : vector<16x128xf32>
      %cst_42 = arith.constant 5.000000e-01 : f32
      %69 = vector.broadcast %cst_42 : f32 to vector<16x128xf32>
      %70 = arith.mulf %69, %68 : vector<16x128xf32>
      %cst_43 = arith.constant 0.707106769 : f32
      %71 = vector.broadcast %cst_43 : f32 to vector<16x128xf32>
      %72 = arith.mulf %68, %71 : vector<16x128xf32>
      %73 = math.erf %72 : vector<16x128xf32>
      %cst_44 = arith.constant 1.000000e+00 : f32
      %74 = vector.broadcast %cst_44 : f32 to vector<16x128xf32>
      %75 = arith.addf %74, %73 : vector<16x128xf32>
      %76 = arith.mulf %70, %75 : vector<16x128xf32>
      %c448 = arith.constant 448 : index
      %c0_45 = arith.constant 0 : index
      %77 = vector.load %arg6[%c448, %c0_45] : memref<2752x128xbf16, #tpu.memory_space<vmem>>, vector<128x128xbf16>
      %78 = arith.extf %77 : vector<128x128xbf16> to vector<128x128xf32>
      %cst_46 = arith.constant dense<0.000000e+00> : vector<16x128xf32>
      %79 = tpu.matmul %76, %78, %cst_46 {dimension_numbers = #tpu.dot_dimension_numbers<[1], [0], [0], [1], [0, 0, 1, 1], [], []>} : vector<16x128xf32>, vector<128x128xf32>, vector<16x128xf32> -> vector<16x128xf32>
      %c4 = arith.constant 4 : index
      %c0_47 = arith.constant 0 : index
      %80 = vector.load %arg8[%c4, %c0_47] : memref<16x128xf32, #tpu.memory_space<vmem>>, vector<1x128xf32>
      %81 = vector.broadcast %80 : vector<1x128xf32> to vector<16x128xf32>
      %82 = arith.addf %79, %81 : vector<16x128xf32>
      %c576 = arith.constant 576 : index
      %c0_48 = arith.constant 0 : index
      %83 = vector.load %arg6[%c576, %c0_48] : memref<2752x128xbf16, #tpu.memory_space<vmem>>, vector<128x128xbf16>
      %84 = arith.extf %83 : vector<128x128xbf16> to vector<128x128xf32>
      %cst_49 = arith.constant dense<0.000000e+00> : vector<16x128xf32>
      %85 = tpu.matmul %82, %84, %cst_49 {dimension_numbers = #tpu.dot_dimension_numbers<[1], [0], [0], [1], [0, 0, 1, 1], [], []>} : vector<16x128xf32>, vector<128x128xf32>, vector<16x128xf32> -> vector<16x128xf32>
      %c5 = arith.constant 5 : index
      %c0_50 = arith.constant 0 : index
      %86 = vector.load %arg8[%c5, %c0_50] : memref<16x128xf32, #tpu.memory_space<vmem>>, vector<1x128xf32>
      %87 = vector.broadcast %86 : vector<1x128xf32> to vector<16x128xf32>
      %88 = arith.addf %85, %87 : vector<16x128xf32>
      %c0_51 = arith.constant 0 : index
      %c0_52 = arith.constant 0 : index
      %c0_53 = arith.constant 0 : index
      %89 = vector.load %arg13[%c0_51, %c0_52, %c0_53] : memref<1x16x128xf32, #tpu.memory_space<vmem>>, vector<1x16x128xf32>
      %90 = vector.shape_cast %89 : vector<1x16x128xf32> to vector<16x128xf32>
      %91 = vector.shape_cast %88 : vector<16x128xf32> to vector<1x16x128xf32>
      tpu.vector_store %arg13[%c0_51, %c0_52, %c0_53], %91 {strides = array<i32>} : memref<1x16x128xf32, #tpu.memory_space<vmem>>, vector<1x16x128xf32>,
      %c0_54 = arith.constant 0 : index
      %c0_55 = arith.constant 0 : index
      %92 = vector.load %arg11[%c0_54, %c0_55] : memref<8x128xf32, #tpu.memory_space<vmem>>, vector<1x128xf32>
      %c1_56 = arith.constant 1 : index
      %c0_57 = arith.constant 0 : index
      %93 = vector.load %arg11[%c1_56, %c0_57] : memref<8x128xf32, #tpu.memory_space<vmem>>, vector<1x128xf32>
      %c2_58 = arith.constant 2 : index
      %c0_59 = arith.constant 0 : index
      %94 = vector.load %arg11[%c2_58, %c0_59] : memref<8x128xf32, #tpu.memory_space<vmem>>, vector<2x128xf32>
      %c1_60 = arith.constant 1 : index
      %c0_61 = arith.constant 0 : index
      %95 = vector.load %arg10[%c1_60, %c0_61] : memref<8x256xf32, #tpu.memory_space<vmem>>, vector<2x256xf32>
      %c704 = arith.constant 704 : index
      %c0_62 = arith.constant 0 : index
      %96 = vector.load %arg6[%c704, %c0_62] : memref<2752x128xbf16, #tpu.memory_space<vmem>>, vector<128x128xbf16>
      %97 = arith.extf %96 : vector<128x128xbf16> to vector<128x128xf32>
      %cst_63 = arith.constant dense<0.000000e+00> : vector<1x128xf32>
      %98 = tpu.matmul %92, %97, %cst_63 {dimension_numbers = #tpu.dot_dimension_numbers<[1], [0], [0], [1], [0, 0, 1, 1], [], []>} : vector<1x128xf32>, vector<128x128xf32>, vector<1x128xf32> -> vector<1x128xf32>
      %c6 = arith.constant 6 : index
      %c0_64 = arith.constant 0 : index
      %99 = vector.load %arg8[%c6, %c0_64] : memref<16x128xf32, #tpu.memory_space<vmem>>, vector<1x128xf32>
      %100 = arith.addf %98, %99 : vector<1x128xf32>
      %c832 = arith.constant 832 : index
      %c0_65 = arith.constant 0 : index
      %101 = vector.load %arg6[%c832, %c0_65] : memref<2752x128xbf16, #tpu.memory_space<vmem>>, vector<128x128xbf16>
      %102 = arith.extf %101 : vector<128x128xbf16> to vector<128x128xf32>
      %cst_66 = arith.constant dense<0.000000e+00> : vector<1x128xf32>
      %103 = tpu.matmul %93, %102, %cst_66 {dimension_numbers = #tpu.dot_dimension_numbers<[1], [0], [0], [1], [0, 0, 1, 1], [], []>} : vector<1x128xf32>, vector<128x128xf32>, vector<1x128xf32> -> vector<1x128xf32>
      %c7 = arith.constant 7 : index
      %c0_67 = arith.constant 0 : index
      %104 = vector.load %arg8[%c7, %c0_67] : memref<16x128xf32, #tpu.memory_space<vmem>>, vector<1x128xf32>
      %105 = arith.addf %103, %104 : vector<1x128xf32>
      %cst_68 = arith.constant dense<0.000000e+00> : vector<128xf32>
      %106 = vector.multi_reduction <add>, %94, %cst_68 [0] : vector<2x128xf32> to vector<128xf32>
      %107 = vector.shape_cast %106 : vector<128xf32> to vector<1x128xf32>
      %cst_69 = arith.constant 2.000000e+00 : f32
      %108 = vector.broadcast %cst_69 : f32 to vector<1x128xf32>
      %109 = arith.divf %107, %108 : vector<1x128xf32>
      %c960 = arith.constant 960 : index
      %c0_70 = arith.constant 0 : index
      %110 = vector.load %arg6[%c960, %c0_70] : memref<2752x128xbf16, #tpu.memory_space<vmem>>, vector<256x128xbf16>
      %111 = arith.extf %110 : vector<256x128xbf16> to vector<256x128xf32>
      %cst_71 = arith.constant dense<0.000000e+00> : vector<2x128xf32>
      %112 = tpu.matmul %95, %111, %cst_71 {dimension_numbers = #tpu.dot_dimension_numbers<[1], [0], [0], [1], [0, 0, 1, 1], [], []>} : vector<2x256xf32>, vector<256x128xf32>, vector<2x128xf32> -> vector<2x128xf32>
      %c8 = arith.constant 8 : index
      %c0_72 = arith.constant 0 : index
      %113 = vector.load %arg8[%c8, %c0_72] : memref<16x128xf32, #tpu.memory_space<vmem>>, vector<1x128xf32>
      %114 = vector.broadcast %113 : vector<1x128xf32> to vector<2x128xf32>
      %115 = arith.addf %112, %114 : vector<2x128xf32>
      %cst_73 = arith.constant dense<0.000000e+00> : vector<128xf32>
      %116 = vector.multi_reduction <add>, %115, %cst_73 [0] : vector<2x128xf32> to vector<128xf32>
      %117 = vector.shape_cast %116 : vector<128xf32> to vector<1x128xf32>
      %cst_74 = arith.constant 2.000000e+00 : f32
      %118 = vector.broadcast %cst_74 : f32 to vector<1x128xf32>
      %119 = arith.divf %117, %118 : vector<1x128xf32>
      %c9 = arith.constant 9 : index
      %c0_75 = arith.constant 0 : index
      %120 = vector.load %arg8[%c9, %c0_75] : memref<16x128xf32, #tpu.memory_space<vmem>>, vector<1x128xf32>
      %c1216 = arith.constant 1216 : index
      %c0_76 = arith.constant 0 : index
      %121 = vector.load %arg6[%c1216, %c0_76] : memref<2752x128xbf16, #tpu.memory_space<vmem>>, vector<128x128xbf16>
      %122 = arith.extf %121 : vector<128x128xbf16> to vector<128x128xf32>
      %cst_77 = arith.constant dense<0.000000e+00> : vector<1x128xf32>
      %123 = tpu.matmul %100, %122, %cst_77 {dimension_numbers = #tpu.dot_dimension_numbers<[1], [0], [0], [1], [0, 0, 1, 1], [], []>} : vector<1x128xf32>, vector<128x128xf32>, vector<1x128xf32> -> vector<1x128xf32>
      %124 = arith.addf %120, %123 : vector<1x128xf32>
      %c1344 = arith.constant 1344 : index
      %c0_78 = arith.constant 0 : index
      %125 = vector.load %arg6[%c1344, %c0_78] : memref<2752x128xbf16, #tpu.memory_space<vmem>>, vector<128x128xbf16>
      %126 = arith.extf %125 : vector<128x128xbf16> to vector<128x128xf32>
      %cst_79 = arith.constant dense<0.000000e+00> : vector<1x128xf32>
      %127 = tpu.matmul %105, %126, %cst_79 {dimension_numbers = #tpu.dot_dimension_numbers<[1], [0], [0], [1], [0, 0, 1, 1], [], []>} : vector<1x128xf32>, vector<128x128xf32>, vector<1x128xf32> -> vector<1x128xf32>
      %128 = arith.addf %124, %127 : vector<1x128xf32>
      %c1472 = arith.constant 1472 : index
      %c0_80 = arith.constant 0 : index
      %129 = vector.load %arg6[%c1472, %c0_80] : memref<2752x128xbf16, #tpu.memory_space<vmem>>, vector<128x128xbf16>
      %130 = arith.extf %129 : vector<128x128xbf16> to vector<128x128xf32>
      %cst_81 = arith.constant dense<0.000000e+00> : vector<1x128xf32>
      %131 = tpu.matmul %109, %130, %cst_81 {dimension_numbers = #tpu.dot_dimension_numbers<[1], [0], [0], [1], [0, 0, 1, 1], [], []>} : vector<1x128xf32>, vector<128x128xf32>, vector<1x128xf32> -> vector<1x128xf32>
      %132 = arith.addf %128, %131 : vector<1x128xf32>
      %c1600 = arith.constant 1600 : index
      %c0_82 = arith.constant 0 : index
      %133 = vector.load %arg6[%c1600, %c0_82] : memref<2752x128xbf16, #tpu.memory_space<vmem>>, vector<128x128xbf16>
      %134 = arith.extf %133 : vector<128x128xbf16> to vector<128x128xf32>
      %cst_83 = arith.constant dense<0.000000e+00> : vector<1x128xf32>
      %135 = tpu.matmul %119, %134, %cst_83 {dimension_numbers = #tpu.dot_dimension_numbers<[1], [0], [0], [1], [0, 0, 1, 1], [], []>} : vector<1x128xf32>, vector<128x128xf32>, vector<1x128xf32> -> vector<1x128xf32>
      %136 = arith.addf %132, %135 : vector<1x128xf32>
      %c4_84 = arith.constant 4 : index
      %c0_85 = arith.constant 0 : index
      %137 = vector.load %arg11[%c4_84, %c0_85] : memref<8x128xf32, #tpu.memory_space<vmem>>, vector<1x128xf32>
      %c5_86 = arith.constant 5 : index
      %c0_87 = arith.constant 0 : index
      %138 = vector.load %arg11[%c5_86, %c0_87] : memref<8x128xf32, #tpu.memory_space<vmem>>, vector<1x128xf32>
      %c6_88 = arith.constant 6 : index
      %c0_89 = arith.constant 0 : index
      %139 = vector.load %arg11[%c6_88, %c0_89] : memref<8x128xf32, #tpu.memory_space<vmem>>, vector<2x128xf32>
      %c3_90 = arith.constant 3 : index
      %c0_91 = arith.constant 0 : index
      %140 = vector.load %arg10[%c3_90, %c0_91] : memref<8x256xf32, #tpu.memory_space<vmem>>, vector<2x256xf32>
      %c1728 = arith.constant 1728 : index
      %c0_92 = arith.constant 0 : index
      %141 = vector.load %arg6[%c1728, %c0_92] : memref<2752x128xbf16, #tpu.memory_space<vmem>>, vector<128x128xbf16>
      %142 = arith.extf %141 : vector<128x128xbf16> to vector<128x128xf32>
      %cst_93 = arith.constant dense<0.000000e+00> : vector<1x128xf32>
      %143 = tpu.matmul %137, %142, %cst_93 {dimension_numbers = #tpu.dot_dimension_numbers<[1], [0], [0], [1], [0, 0, 1, 1], [], []>} : vector<1x128xf32>, vector<128x128xf32>, vector<1x128xf32> -> vector<1x128xf32>
      %c10 = arith.constant 10 : index
      %c0_94 = arith.constant 0 : index
      %144 = vector.load %arg8[%c10, %c0_94] : memref<16x128xf32, #tpu.memory_space<vmem>>, vector<1x128xf32>
      %145 = arith.addf %143, %144 : vector<1x128xf32>
      %c1856 = arith.constant 1856 : index
      %c0_95 = arith.constant 0 : index
      %146 = vector.load %arg6[%c1856, %c0_95] : memref<2752x128xbf16, #tpu.memory_space<vmem>>, vector<128x128xbf16>
      %147 = arith.extf %146 : vector<128x128xbf16> to vector<128x128xf32>
      %cst_96 = arith.constant dense<0.000000e+00> : vector<1x128xf32>
      %148 = tpu.matmul %138, %147, %cst_96 {dimension_numbers = #tpu.dot_dimension_numbers<[1], [0], [0], [1], [0, 0, 1, 1], [], []>} : vector<1x128xf32>, vector<128x128xf32>, vector<1x128xf32> -> vector<1x128xf32>
      %c11 = arith.constant 11 : index
      %c0_97 = arith.constant 0 : index
      %149 = vector.load %arg8[%c11, %c0_97] : memref<16x128xf32, #tpu.memory_space<vmem>>, vector<1x128xf32>
      %150 = arith.addf %148, %149 : vector<1x128xf32>
      %cst_98 = arith.constant dense<0.000000e+00> : vector<128xf32>
      %151 = vector.multi_reduction <add>, %139, %cst_98 [0] : vector<2x128xf32> to vector<128xf32>
      %152 = vector.shape_cast %151 : vector<128xf32> to vector<1x128xf32>
      %cst_99 = arith.constant 2.000000e+00 : f32
      %153 = vector.broadcast %cst_99 : f32 to vector<1x128xf32>
      %154 = arith.divf %152, %153 : vector<1x128xf32>
      %c1984 = arith.constant 1984 : index
      %c0_100 = arith.constant 0 : index
      %155 = vector.load %arg6[%c1984, %c0_100] : memref<2752x128xbf16, #tpu.memory_space<vmem>>, vector<256x128xbf16>
      %156 = arith.extf %155 : vector<256x128xbf16> to vector<256x128xf32>
      %cst_101 = arith.constant dense<0.000000e+00> : vector<2x128xf32>
      %157 = tpu.matmul %140, %156, %cst_101 {dimension_numbers = #tpu.dot_dimension_numbers<[1], [0], [0], [1], [0, 0, 1, 1], [], []>} : vector<2x256xf32>, vector<256x128xf32>, vector<2x128xf32> -> vector<2x128xf32>
      %c12 = arith.constant 12 : index
      %c0_102 = arith.constant 0 : index
      %158 = vector.load %arg8[%c12, %c0_102] : memref<16x128xf32, #tpu.memory_space<vmem>>, vector<1x128xf32>
      %159 = vector.broadcast %158 : vector<1x128xf32> to vector<2x128xf32>
      %160 = arith.addf %157, %159 : vector<2x128xf32>
      %cst_103 = arith.constant dense<0.000000e+00> : vector<128xf32>
      %161 = vector.multi_reduction <add>, %160, %cst_103 [0] : vector<2x128xf32> to vector<128xf32>
      %162 = vector.shape_cast %161 : vector<128xf32> to vector<1x128xf32>
      %cst_104 = arith.constant 2.000000e+00 : f32
      %163 = vector.broadcast %cst_104 : f32 to vector<1x128xf32>
      %164 = arith.divf %162, %163 : vector<1x128xf32>
      %c13 = arith.constant 13 : index
      %c0_105 = arith.constant 0 : index
      %165 = vector.load %arg8[%c13, %c0_105] : memref<16x128xf32, #tpu.memory_space<vmem>>, vector<1x128xf32>
      %c2240 = arith.constant 2240 : index
      %c0_106 = arith.constant 0 : index
      %166 = vector.load %arg6[%c2240, %c0_106] : memref<2752x128xbf16, #tpu.memory_space<vmem>>, vector<128x128xbf16>
      %167 = arith.extf %166 : vector<128x128xbf16> to vector<128x128xf32>
      %cst_107 = arith.constant dense<0.000000e+00> : vector<1x128xf32>
      %168 = tpu.matmul %145, %167, %cst_107 {dimension_numbers = #tpu.dot_dimension_numbers<[1], [0], [0], [1], [0, 0, 1, 1], [], []>} : vector<1x128xf32>, vector<128x128xf32>, vector<1x128xf32> -> vector<1x128xf32>
      %169 = arith.addf %165, %168 : vector<1x128xf32>
      %c2368 = arith.constant 2368 : index
      %c0_108 = arith.constant 0 : index
      %170 = vector.load %arg6[%c2368, %c0_108] : memref<2752x128xbf16, #tpu.memory_space<vmem>>, vector<128x128xbf16>
      %171 = arith.extf %170 : vector<128x128xbf16> to vector<128x128xf32>
      %cst_109 = arith.constant dense<0.000000e+00> : vector<1x128xf32>
      %172 = tpu.matmul %150, %171, %cst_109 {dimension_numbers = #tpu.dot_dimension_numbers<[1], [0], [0], [1], [0, 0, 1, 1], [], []>} : vector<1x128xf32>, vector<128x128xf32>, vector<1x128xf32> -> vector<1x128xf32>
      %173 = arith.addf %169, %172 : vector<1x128xf32>
      %c2496 = arith.constant 2496 : index
      %c0_110 = arith.constant 0 : index
      %174 = vector.load %arg6[%c2496, %c0_110] : memref<2752x128xbf16, #tpu.memory_space<vmem>>, vector<128x128xbf16>
      %175 = arith.extf %174 : vector<128x128xbf16> to vector<128x128xf32>
      %cst_111 = arith.constant dense<0.000000e+00> : vector<1x128xf32>
      %176 = tpu.matmul %154, %175, %cst_111 {dimension_numbers = #tpu.dot_dimension_numbers<[1], [0], [0], [1], [0, 0, 1, 1], [], []>} : vector<1x128xf32>, vector<128x128xf32>, vector<1x128xf32> -> vector<1x128xf32>
      %177 = arith.addf %173, %176 : vector<1x128xf32>
      %c2624 = arith.constant 2624 : index
      %c0_112 = arith.constant 0 : index
      %178 = vector.load %arg6[%c2624, %c0_112] : memref<2752x128xbf16, #tpu.memory_space<vmem>>, vector<128x128xbf16>
      %179 = arith.extf %178 : vector<128x128xbf16> to vector<128x128xf32>
      %cst_113 = arith.constant dense<0.000000e+00> : vector<1x128xf32>
      %180 = tpu.matmul %164, %179, %cst_113 {dimension_numbers = #tpu.dot_dimension_numbers<[1], [0], [0], [1], [0, 0, 1, 1], [], []>} : vector<1x128xf32>, vector<128x128xf32>, vector<1x128xf32> -> vector<1x128xf32>
      %181 = arith.addf %177, %180 : vector<1x128xf32>
      %182 = tpu.concatenate %136, %181 in 0 : vector<1x128xf32>, vector<1x128xf32> -> vector<2x128xf32>
      %c0_114 = arith.constant 0 : index
      %c0_115 = arith.constant 0 : index
      %c0_116 = arith.constant 0 : index
      %183 = vector.load %arg14[%c0_114, %c0_115, %c0_116] : memref<1x2x128xf32, #tpu.memory_space<vmem>>, vector<1x2x128xf32>
      %184 = vector.shape_cast %183 : vector<1x2x128xf32> to vector<2x128xf32>
      %185 = vector.shape_cast %182 : vector<2x128xf32> to vector<1x2x128xf32>
      tpu.vector_store %arg14[%c0_114, %c0_115, %c0_116], %185 {strides = array<i32>} : memref<1x2x128xf32, #tpu.memory_space<vmem>>, vector<1x2x128xf32>,
    } else {
    }
    %c3_i32 = arith.constant 3 : i32
    %13 = arith.cmpi eq, %arg1, %c3_i32 : i32
    %14 = arith.extui %13 : i1 to i32
    %c0_i32_11 = arith.constant 0 : i32
    %15 = arith.cmpi ne, %14, %c0_i32_11 : i32
    scf.if %15 {
      %c0_12 = arith.constant 0 : index
      %c0_13 = arith.constant 0 : index
      %16 = vector.load %arg15[%c0_12, %c0_13] : memref<4x256xf32, #tpu.memory_space<vmem>>, vector<4x256xf32>
      %c0_14 = arith.constant 0 : index
      %c0_15 = arith.constant 0 : index
      %17 = vector.load %arg10[%c0_14, %c0_15] : memref<8x256xf32, #tpu.memory_space<vmem>>, vector<1x256xf32>
      %18 = vector.broadcast %17 : vector<1x256xf32> to vector<4x256xf32>
      %19 = arith.addf %16, %18 : vector<4x256xf32>
      %c0_16 = arith.constant 0 : index
      %c0_17 = arith.constant 0 : index
      %20 = vector.load %arg6[%c0_16, %c0_17] : memref<2752x128xbf16, #tpu.memory_space<vmem>>, vector<256x128xbf16>
      %21 = arith.extf %20 : vector<256x128xbf16> to vector<256x128xf32>
      %cst_18 = arith.constant dense<0.000000e+00> : vector<4x128xf32>
      %22 = tpu.matmul %19, %21, %cst_18 {dimension_numbers = #tpu.dot_dimension_numbers<[1], [0], [0], [1], [0, 0, 1, 1], [], []>} : vector<4x256xf32>, vector<256x128xf32>, vector<4x128xf32> -> vector<4x128xf32>
      %c1 = arith.constant 1 : index
      %c0_19 = arith.constant 0 : index
      %23 = vector.load %arg8[%c1, %c0_19] : memref<16x128xf32, #tpu.memory_space<vmem>>, vector<1x128xf32>
      %24 = vector.broadcast %23 : vector<1x128xf32> to vector<4x128xf32>
      %25 = arith.addf %22, %24 : vector<4x128xf32>
      %cst_20 = arith.constant 5.000000e-01 : f32
      %26 = vector.broadcast %cst_20 : f32 to vector<4x128xf32>
      %27 = arith.mulf %26, %25 : vector<4x128xf32>
      %cst_21 = arith.constant 0.707106769 : f32
      %28 = vector.broadcast %cst_21 : f32 to vector<4x128xf32>
      %29 = arith.mulf %25, %28 : vector<4x128xf32>
      %30 = math.erf %29 : vector<4x128xf32>
      %cst_22 = arith.constant 1.000000e+00 : f32
      %31 = vector.broadcast %cst_22 : f32 to vector<4x128xf32>
      %32 = arith.addf %31, %30 : vector<4x128xf32>
      %33 = arith.mulf %27, %32 : vector<4x128xf32>
      %c256 = arith.constant 256 : index
      %c0_23 = arith.constant 0 : index
      %34 = vector.load %arg6[%c256, %c0_23] : memref<2752x128xbf16, #tpu.memory_space<vmem>>, vector<128x128xbf16>
      %35 = arith.extf %34 : vector<128x128xbf16> to vector<128x128xf32>
      %cst_24 = arith.constant dense<0.000000e+00> : vector<4x128xf32>
      %36 = tpu.matmul %33, %35, %cst_24 {dimension_numbers = #tpu.dot_dimension_numbers<[1], [0], [0], [1], [0, 0, 1, 1], [], []>} : vector<4x128xf32>, vector<128x128xf32>, vector<4x128xf32> -> vector<4x128xf32>
      %c2 = arith.constant 2 : index
      %c0_25 = arith.constant 0 : index
      %37 = vector.load %arg8[%c2, %c0_25] : memref<16x128xf32, #tpu.memory_space<vmem>>, vector<1x128xf32>
      %38 = vector.broadcast %37 : vector<1x128xf32> to vector<4x128xf32>
      %39 = arith.addf %36, %38 : vector<4x128xf32>
      %c0_26 = arith.constant 0 : index
      %c0_27 = arith.constant 0 : index
      %c0_28 = arith.constant 0 : index
      %40 = vector.load %arg12[%c0_26, %c0_27, %c0_28] : memref<1x4x128xf32, #tpu.memory_space<vmem>>, vector<1x4x128xf32>
      %41 = vector.shape_cast %40 : vector<1x4x128xf32> to vector<4x128xf32>
      %42 = vector.shape_cast %39 : vector<4x128xf32> to vector<1x4x128xf32>
      tpu.vector_store %arg12[%c0_26, %c0_27, %c0_28], %42 {strides = array<i32>} : memref<1x4x128xf32, #tpu.memory_space<vmem>>, vector<1x4x128xf32>,
    } else {
    }
    return
  }
  func.func @transform_0(%arg0: i32, %arg1: i32) -> (i32, i32, i32) {
    %c0_i32 = arith.constant 0 : i32
    %c0_i32_0 = arith.constant 0 : i32
    %c0_i32_1 = arith.constant 0 : i32
    return %arg0, %c0_i32, %c0_i32_0 : i32, i32, i32
  }
  func.func @transform_1(%arg0: i32, %arg1: i32) -> (i32, i32, i32) {
    %c0_i32 = arith.constant 0 : i32
    %c0_i32_0 = arith.constant 0 : i32
    return %arg0, %c0_i32, %arg1 : i32, i32, i32
  }
  func.func @transform_2(%arg0: i32, %arg1: i32) -> (i32, i32) {
    %c0_i32 = arith.constant 0 : i32
    %c0_i32_0 = arith.constant 0 : i32
    %c0_i32_1 = arith.constant 0 : i32
    return %c0_i32, %c0_i32_0 : i32, i32
  }
  func.func @transform_3(%arg0: i32, %arg1: i32) -> (i32, i32) {
    %c0_i32 = arith.constant 0 : i32
    %c0_i32_0 = arith.constant 0 : i32
    return %arg1, %c0_i32 : i32, i32
  }
  func.func @transform_4(%arg0: i32, %arg1: i32) -> (i32, i32) {
    %c0_i32 = arith.constant 0 : i32
    %c0_i32_0 = arith.constant 0 : i32
    %c0_i32_1 = arith.constant 0 : i32
    return %c0_i32, %c0_i32_0 : i32, i32
  }
  func.func @transform_5(%arg0: i32, %arg1: i32) -> (i32, i32) {
    %c0_i32 = arith.constant 0 : i32
    %c0_i32_0 = arith.constant 0 : i32
    %c0_i32_1 = arith.constant 0 : i32
    return %c0_i32, %c0_i32_0 : i32, i32
  }
  func.func @transform_6(%arg0: i32, %arg1: i32) -> (i32, i32) {
    %c0_i32 = arith.constant 0 : i32
    %c0_i32_0 = arith.constant 0 : i32
    %c0_i32_1 = arith.constant 0 : i32
    return %c0_i32, %c0_i32_0 : i32, i32
  }
  func.func @transform_7(%arg0: i32, %arg1: i32) -> (i32, i32) {
    %c0_i32 = arith.constant 0 : i32
    %c0_i32_0 = arith.constant 0 : i32
    %c0_i32_1 = arith.constant 0 : i32
    return %c0_i32, %c0_i32_0 : i32, i32
  }
  func.func @transform_8(%arg0: i32, %arg1: i32) -> (i32, i32) {
    %c0_i32 = arith.constant 0 : i32
    %c0_i32_0 = arith.constant 0 : i32
    %c0_i32_1 = arith.constant 0 : i32
    return %c0_i32, %c0_i32_0 : i32, i32
  }
  func.func @transform_9(%arg0: i32, %arg1: i32) -> (i32, i32) {
    %c0_i32 = arith.constant 0 : i32
    %c0_i32_0 = arith.constant 0 : i32
    %c0_i32_1 = arith.constant 0 : i32
    return %c0_i32, %c0_i32_0 : i32, i32
  }
  func.func @transform_10(%arg0: i32, %arg1: i32) -> (i32, i32, i32) {
    %c0_i32 = arith.constant 0 : i32
    %c0_i32_0 = arith.constant 0 : i32
    %c0_i32_1 = arith.constant 0 : i32
    return %arg0, %c0_i32, %c0_i32_0 : i32, i32, i32
  }
  func.func @transform_11(%arg0: i32, %arg1: i32) -> (i32, i32, i32) {
    %c0_i32 = arith.constant 0 : i32
    %c0_i32_0 = arith.constant 0 : i32
    %c0_i32_1 = arith.constant 0 : i32
    return %arg0, %c0_i32, %c0_i32_0 : i32, i32, i32
  }
  func.func @transform_12(%arg0: i32, %arg1: i32) -> (i32, i32, i32) {
    %c0_i32 = arith.constant 0 : i32
    %c0_i32_0 = arith.constant 0 : i32
    %c0_i32_1 = arith.constant 0 : i32
    return %arg0, %c0_i32, %c0_i32_0 : i32, i32, i32
  }
}

</mosaic_0001>

<llo_original>
// kernel: squeeze.2
$region0: #{squeeze.2}
  %s0 = inlined_call_operand.vmem [shape: f32[2,16], index: 0, kind: input, shape index: {}]
  %s1 = inlined_call_operand.vmem [shape: f32[2,1,4,4], index: 1, kind: output, shape index: {}]
  $region1: #{squeeze.2} parent=0
    #allocation0 [shape = 'u8[8192]{0}', space=vmem, size = 0x2000, scoped, tag = 'scoped mem for output reshape']
    #allocation1 [shape = 'u8[4096]{0}', space=vmem, size = 0x1000, scoped, tag = 'scoped mem for input reshape']
    %s3 = ssub.s32 4, 1
    %v4 = vld [vmem:[%s0] sm:%s3]
    %5 = vst [vmem:[#allocation1] sm:%s3] %v4
    %v6 = vld [vmem:[#allocation1] sm:$0x3]
    %vm7 = vcmask 31744
    %8 = vst.msk [vmem:[#allocation0] ss:$8 sm:$0x3] %vm7, %v6
    %v9 = vld [vmem:[#allocation1] sm:$0x3]
    %10 = vrot.lane.b32.xlu0 %v9, 124
    %v11 = vpop.permute.xlu0 %10
    %vm12 = vcmask 31744
    %s13 = scalar_lea.vmem [#allocation0], 1
    %14 = vst.msk [vmem:[%s13] ss:$8 sm:$0x3] %vm12, %v11
    %v15 = vld [vmem:[#allocation1] sm:$0x3]
    %16 = vrot.lane.b32.xlu0 %v15, 120
    %v17 = vpop.permute.xlu0 %16
    %vm18 = vcmask 31744
    %s19 = scalar_lea.vmem [#allocation0], 2
    %20 = vst.msk [vmem:[%s19] ss:$8 sm:$0x3] %vm18, %v17
    %v21 = vld [vmem:[#allocation1] sm:$0x3]
    %22 = vrot.lane.b32.xlu0 %v21, 116
    %v23 = vpop.permute.xlu0 %22
    %vm24 = vcmask 31744
    %s25 = scalar_lea.vmem [#allocation0], 3
    %26 = vst.msk [vmem:[%s25] ss:$8 sm:$0x3] %vm24, %v23
    %s28 = ssub.s32 16, 1
    %v29 = vld [vmem:[#allocation0] sm:%s28]
    %s31 = ssub.s32 16, 1
    %32 = vst [vmem:[%s1] sm:%s31] %v29
    %s33 = scalar_lea.vmem [#allocation0], 8
    %v34 = vld [vmem:[%s33] sm:%s28]
    %s36 = ssub.s32 16, 1
    %s37 = scalar_lea.vmem %s1, 4
    %38 = vst [vmem:[%s37] sm:%s36] %v34

// kernel: mtpnet_forward.1
$region0: #{mtpnet_forward.1}
  #allocation0 [shape = 'u32[]', space=smem, size = 0x4, offset = 0x4, fixed_abs, tag = 'smem constant byte address 0x4 - core index']
  #allocation1 [shape = 'u32[72,128]{1,0:T(1,128)}', space=vmem, size = 0x9000, scoped, tag = 'internal scratch']
  #allocation2 [shape = 'f32[4,256]{1,0:T(4,128)}', space=vmem, size = 0x1000, scoped, tag = 'scratch operand']
  %s0 = inlined_call_operand.vmem [shape: bf16[2,16,768], index: 0, kind: input, shape index: {}]
  %s1 = inlined_call_operand.vmem [shape: bf16[2,4,3072], index: 1, kind: input, shape index: {}]
  %s2 = inlined_call_operand.vmem [shape: bf16[768,128], index: 2, kind: input, shape index: {}]
  %s3 = inlined_call_operand.vmem [shape: bf16[3072,256], index: 3, kind: input, shape index: {}]
  %s4 = inlined_call_operand.vmem [shape: bf16[2752,128], index: 4, kind: input, shape index: {}]
  %s5 = inlined_call_operand.vmem [shape: f32[192,64], index: 5, kind: input, shape index: {}]
  %s6 = inlined_call_operand.vmem [shape: f32[16,128], index: 6, kind: input, shape index: {}]
  %s7 = inlined_call_operand.vmem [shape: f32[8,64], index: 7, kind: input, shape index: {}]
  %s8 = inlined_call_operand.vmem [shape: f32[8,256], index: 8, kind: input, shape index: {}]
  %s9 = inlined_call_operand.vmem [shape: f32[8,128], index: 9, kind: input, shape index: {}]
  %s10 = inlined_call_operand.hbm [shape: f32[2,4,128], index: 10, kind: output, shape index: {0}]
  %s11 = inlined_call_operand.vmem [shape: f32[2,16,128], index: 11, kind: output, shape index: {1}]
  %s12 = inlined_call_operand.vmem [shape: f32[2,2,128], index: 12, kind: output, shape index: {2}]
  %13 = xla_tuple %s10, %s11, %s12
  %s14 = sld [smem:[#allocation0]]
  $region101: #{mtpnet_forward.1} parent=0
    _
  %s16 = ssub.s32 1, %s14
  %s17 = scalar_select 0, %s16, %s14
  $region1: #{mtpnet_forward.1} parent=0
    #allocation3 [shape = 'u8[4096]{0}', space=vmem, size = 0x1000, scoped, tag = 'output window, operand 0']
    #allocation4 [shape = 's32[2]{0}', space=sflag, size = 0x8, scoped, tag = 'scoped memory for mtpnet_forward.1']
    %18 = vsyncpa [#allocation4], 0
    %s19 = scalar_lea.sflag [#allocation4], 1
    %20 = vsyncpa %s19, 0
    loop: start=0, step=1, limit=10
    $region2: #{mtpnet_forward.1} parent=1 // loop_pre_header
      _
    $region3: #{mtpnet_forward.1} parent=1 // loop_header
      %s22 = sphi 0, %s26
      %p23 = scmp.ge.s32.totalorder %s22, 10
      %s29 = sphi 0, %s41
      %s30 = sphi 0, %s37
      %s31 = sphi 0, %s29
      %s32 = sphi 0, %s30
      %s33 = sphi 0, %s31
      %s34 = sphi 0, %s32
      %s44 = sphi 0, %s46
      %s47 = sphi 0, %s44
      %s48 = sphi 0, %s47
      %s64 = sphi 0, %s48
      %s72 = sphi 0, %s74
      %s75 = sphi 0, %s72
      %s76 = sphi 0, %s75
      %s92 = sphi 0, %s76
      %s96 = sphi 0, %s96
      %s98 = sphi 0, %s96
      %s99 = sphi 0, %s98
      %s113 = sphi 0, %s99
      %s119 = sphi 0, %s121
      %s122 = sphi 0, %s119
      %s123 = sphi 0, %s122
      %s139 = sphi 0, %s123
      %s143 = sphi 0, %s143
      %s145 = sphi 0, %s143
      %s146 = sphi 0, %s145
      %s160 = sphi 0, %s146
      %s164 = sphi 0, %s164
      %s166 = sphi 0, %s164
      %s167 = sphi 0, %s166
      %s181 = sphi 0, %s167
      %s185 = sphi 0, %s185
      %s187 = sphi 0, %s185
      %s188 = sphi 0, %s187
      %s202 = sphi 0, %s188
      %s206 = sphi 0, %s206
      %s208 = sphi 0, %s206
      %s209 = sphi 0, %s208
      %s223 = sphi 0, %s209
      %s227 = sphi 0, %s227
      %s229 = sphi 0, %s227
      %s230 = sphi 0, %s229
      %s244 = sphi 0, %s230
      %s248 = sphi 0, %s248
      %s250 = sphi 0, %s248
      %s251 = sphi 0, %s250
      %s265 = sphi 0, %s251
      %s271 = sphi 0, %s273
      %s274 = sphi 0, %s271
      %s275 = sphi 0, %s274
      %s291 = sphi 0, %s275
      %s297 = sphi 0, %s299
      %s300 = sphi 0, %s297
      %s301 = sphi 0, %s300
      %s317 = sphi 0, %s301
      %s323 = sphi 0, %s325
      %s326 = sphi 0, %s323
      %s327 = sphi 0, %s326
      %s343 = sphi 0, %s327
    $region4: #{mtpnet_forward.1} parent=1 // loop_header_branch
      %25 = sbr.rel (%p23) target = $region8
    $region5: #{mtpnet_forward.1} parent=1 // loop_body
      %s27 = ssub.s32 %s22, 1
      %s28 = ssub.s32 %s22, 2
      %s35 = sadd.s32 1, %s30
      %p36 = scmp.ge.s32.totalorder %s35, 4
      %s37 = scalar_select %p36, 0, %s35
      %s38 = sadd.s32 1, %s29
      %s39 = scalar_select %p36, %s38, %s29
      %p40 = scmp.ge.s32.totalorder %s39, 2
      %s41 = scalar_select %p40, 0, %s39
      %s42 = ssub.s32 %s29, %s41
      %p43 = scmp.eq.s32.totalorder %s42, 0
      %s45 = sadd.s32 %s44, 1
      %s46 = scalar_select %p43, %s44, %s45
      %p49 = pneg %p43
      %p50 = scmp.eq.s32.totalorder %s22, 7
      %p51 = por %p49, %p50
      %p52 = scmp.ne.s32.totalorder %s44, %s47
      %p53 = scmp.eq.s32.totalorder %s22, 0
      %p54 = por %p52, %p53
      %p55 = scmp.ne.s32.totalorder %s44, %s47
      %p56 = scmp.eq.s32.totalorder %s27, 7
      %p57 = por %p55, %p56
      %p58 = scmp.ne.s32.totalorder %s47, %s48
      %p59 = scmp.eq.s32.totalorder %s27, 0
      %p60 = por %p58, %p59
      %p61 = scmp.ne.s32.totalorder %s47, %s48
      %p62 = scmp.eq.s32.totalorder %s28, 7
      %p63 = por %p61, %p62
      %p65 = scmp.ne.s32.totalorder %s48, %s64
      %p66 = scmp.eq.s32.totalorder %s28, 0
      %p67 = por %p65, %p66
      %s68 = ssub.s32 %s29, %s41
      %s69 = ssub.s32 %s30, %s37
      %s70 = sor.u32 %s68, %s69
      %p71 = scmp.eq.s32.totalorder %s70, 0
      %s73 = sadd.s32 %s72, 1
      %s74 = scalar_select %p71, %s72, %s73
      %p77 = pneg %p71
      %p78 = scmp.eq.s32.totalorder %s22, 7
      %p79 = por %p77, %p78
      %p80 = scmp.ne.s32.totalorder %s72, %s75
      %p81 = scmp.eq.s32.totalorder %s22, 0
      %p82 = por %p80, %p81
      %p83 = scmp.ne.s32.totalorder %s72, %s75
      %p84 = scmp.eq.s32.totalorder %s27, 7
      %p85 = por %p83, %p84
      %p86 = scmp.ne.s32.totalorder %s75, %s76
      %p87 = scmp.eq.s32.totalorder %s27, 0
      %p88 = por %p86, %p87
      %p89 = scmp.ne.s32.totalorder %s75, %s76
      %p90 = scmp.eq.s32.totalorder %s28, 7
      %p91 = por %p89, %p90
      %p93 = scmp.ne.s32.totalorder %s76, %s92
      %p94 = scmp.eq.s32.totalorder %s28, 0
      %p95 = por %p93, %p94
      %s97 = sadd.s32 %s96, 1
      %p100 = scmp.eq.s32.totalorder %s22, 7
      %p101 = scmp.ne.s32.totalorder %s96, %s98
      %p102 = scmp.eq.s32.totalorder %s22, 0
      %p103 = por %p101, %p102
      %p104 = scmp.ne.s32.totalorder %s96, %s98
      %p105 = scmp.eq.s32.totalorder %s27, 7
      %p106 = por %p104, %p105
      %p107 = scmp.ne.s32.totalorder %s98, %s99
      %p108 = scmp.eq.s32.totalorder %s27, 0
      %p109 = por %p107, %p108
      %p110 = scmp.ne.s32.totalorder %s98, %s99
      %p111 = scmp.eq.s32.totalorder %s28, 7
      %p112 = por %p110, %p111
      %p114 = scmp.ne.s32.totalorder %s99, %s113
      %p115 = scmp.eq.s32.totalorder %s28, 0
      %p116 = por %p114, %p115
      %s117 = ssub.s32 %s30, %s37
      %p118 = scmp.eq.s32.totalorder %s117, 0
      %s120 = sadd.s32 %s119, 1
      %s121 = scalar_select %p118, %s119, %s120
      %p124 = pneg %p118
      %p125 = scmp.eq.s32.totalorder %s22, 7
      %p126 = por %p124, %p125
      %p127 = scmp.ne.s32.totalorder %s119, %s122
      %p128 = scmp.eq.s32.totalorder %s22, 0
      %p129 = por %p127, %p128
      %p130 = scmp.ne.s32.totalorder %s119, %s122
      %p131 = scmp.eq.s32.totalorder %s27, 7
      %p132 = por %p130, %p131
      %p133 = scmp.ne.s32.totalorder %s122, %s123
      %p134 = scmp.eq.s32.totalorder %s27, 0
      %p135 = por %p133, %p134
      %p136 = scmp.ne.s32.totalorder %s122, %s123
      %p137 = scmp.eq.s32.totalorder %s28, 7
      %p138 = por %p136, %p137
      %p140 = scmp.ne.s32.totalorder %s123, %s139
      %p141 = scmp.eq.s32.totalorder %s28, 0
      %p142 = por %p140, %p141
      %s144 = sadd.s32 %s143, 1
      %p147 = scmp.eq.s32.totalorder %s22, 7
      %p148 = scmp.ne.s32.totalorder %s143, %s145
      %p149 = scmp.eq.s32.totalorder %s22, 0
      %p150 = por %p148, %p149
      %p151 = scmp.ne.s32.totalorder %s143, %s145
      %p152 = scmp.eq.s32.totalorder %s27, 7
      %p153 = por %p151, %p152
      %p154 = scmp.ne.s32.totalorder %s145, %s146
      %p155 = scmp.eq.s32.totalorder %s27, 0
      %p156 = por %p154, %p155
      %p157 = scmp.ne.s32.totalorder %s145, %s146
      %p158 = scmp.eq.s32.totalorder %s28, 7
      %p159 = por %p157, %p158
      %p161 = scmp.ne.s32.totalorder %s146, %s160
      %p162 = scmp.eq.s32.totalorder %s28, 0
      %p163 = por %p161, %p162
      %s165 = sadd.s32 %s164, 1
      %p168 = scmp.eq.s32.totalorder %s22, 7
      %p169 = scmp.ne.s32.totalorder %s164, %s166
      %p170 = scmp.eq.s32.totalorder %s22, 0
      %p171 = por %p169, %p170
      %p172 = scmp.ne.s32.totalorder %s164, %s166
      %p173 = scmp.eq.s32.totalorder %s27, 7
      %p174 = por %p172, %p173
      %p175 = scmp.ne.s32.totalorder %s166, %s167
      %p176 = scmp.eq.s32.totalorder %s27, 0
      %p177 = por %p175, %p176
      %p178 = scmp.ne.s32.totalorder %s166, %s167
      %p179 = scmp.eq.s32.totalorder %s28, 7
      %p180 = por %p178, %p179
      %p182 = scmp.ne.s32.totalorder %s167, %s181
      %p183 = scmp.eq.s32.totalorder %s28, 0
      %p184 = por %p182, %p183
      %s186 = sadd.s32 %s185, 1
      %p189 = scmp.eq.s32.totalorder %s22, 7
      %p190 = scmp.ne.s32.totalorder %s185, %s187
      %p191 = scmp.eq.s32.totalorder %s22, 0
      %p192 = por %p190, %p191
      %p193 = scmp.ne.s32.totalorder %s185, %s187
      %p194 = scmp.eq.s32.totalorder %s27, 7
      %p195 = por %p193, %p194
      %p196 = scmp.ne.s32.totalorder %s187, %s188
      %p197 = scmp.eq.s32.totalorder %s27, 0
      %p198 = por %p196, %p197
      %p199 = scmp.ne.s32.totalorder %s187, %s188
      %p200 = scmp.eq.s32.totalorder %s28, 7
      %p201 = por %p199, %p200
      %p203 = scmp.ne.s32.totalorder %s188, %s202
      %p204 = scmp.eq.s32.totalorder %s28, 0
      %p205 = por %p203, %p204
      %s207 = sadd.s32 %s206, 1
      %p210 = scmp.eq.s32.totalorder %s22, 7
      %p211 = scmp.ne.s32.totalorder %s206, %s208
      %p212 = scmp.eq.s32.totalorder %s22, 0
      %p213 = por %p211, %p212
      %p214 = scmp.ne.s32.totalorder %s206, %s208
      %p215 = scmp.eq.s32.totalorder %s27, 7
      %p216 = por %p214, %p215
      %p217 = scmp.ne.s32.totalorder %s208, %s209
      %p218 = scmp.eq.s32.totalorder %s27, 0
      %p219 = por %p217, %p218
      %p220 = scmp.ne.s32.totalorder %s208, %s209
      %p221 = scmp.eq.s32.totalorder %s28, 7
      %p222 = por %p220, %p221
      %p224 = scmp.ne.s32.totalorder %s209, %s223
      %p225 = scmp.eq.s32.totalorder %s28, 0
      %p226 = por %p224, %p225
      %s228 = sadd.s32 %s227, 1
      %p231 = scmp.eq.s32.totalorder %s22, 7
      %p232 = scmp.ne.s32.totalorder %s227, %s229
      %p233 = scmp.eq.s32.totalorder %s22, 0
      %p234 = por %p232, %p233
      %p235 = scmp.ne.s32.totalorder %s227, %s229
      %p236 = scmp.eq.s32.totalorder %s27, 7
      %p237 = por %p235, %p236
      %p238 = scmp.ne.s32.totalorder %s229, %s230
      %p239 = scmp.eq.s32.totalorder %s27, 0
      %p240 = por %p238, %p239
      %p241 = scmp.ne.s32.totalorder %s229, %s230
      %p242 = scmp.eq.s32.totalorder %s28, 7
      %p243 = por %p241, %p242
      %p245 = scmp.ne.s32.totalorder %s230, %s244
      %p246 = scmp.eq.s32.totalorder %s28, 0
      %p247 = por %p245, %p246
      %s249 = sadd.s32 %s248, 1
      %p252 = scmp.eq.s32.totalorder %s22, 7
      %p253 = scmp.ne.s32.totalorder %s248, %s250
      %p254 = scmp.eq.s32.totalorder %s22, 0
      %p255 = por %p253, %p254
      %p256 = scmp.ne.s32.totalorder %s248, %s250
      %p257 = scmp.eq.s32.totalorder %s27, 7
      %p258 = por %p256, %p257
      %p259 = scmp.ne.s32.totalorder %s250, %s251
      %p260 = scmp.eq.s32.totalorder %s27, 0
      %p261 = por %p259, %p260
      %p262 = scmp.ne.s32.totalorder %s250, %s251
      %p263 = scmp.eq.s32.totalorder %s28, 7
      %p264 = por %p262, %p263
      %p266 = scmp.ne.s32.totalorder %s251, %s265
      %p267 = scmp.eq.s32.totalorder %s28, 0
      %p268 = por %p266, %p267
      %s269 = ssub.s32 %s29, %s41
      %p270 = scmp.eq.s32.totalorder %s269, 0
      %s272 = sadd.s32 %s271, 1
      %s273 = scalar_select %p270, %s271, %s272
      %p276 = pneg %p270
      %p277 = scmp.eq.s32.totalorder %s22, 7
      %p278 = por %p276, %p277
      %p279 = scmp.ne.s32.totalorder %s271, %s274
      %p280 = scmp.eq.s32.totalorder %s22, 0
      %p281 = por %p279, %p280
      %p282 = scmp.ne.s32.totalorder %s271, %s274
      %p283 = scmp.eq.s32.totalorder %s27, 7
      %p284 = por %p282, %p283
      %p285 = scmp.ne.s32.totalorder %s274, %s275
      %p286 = scmp.eq.s32.totalorder %s27, 0
      %p287 = por %p285, %p286
      %p288 = scmp.ne.s32.totalorder %s274, %s275
      %p289 = scmp.eq.s32.totalorder %s28, 7
      %p290 = por %p288, %p289
      %p292 = scmp.ne.s32.totalorder %s275, %s291
      %p293 = scmp.eq.s32.totalorder %s28, 0
      %p294 = por %p292, %p293
      %s295 = ssub.s32 %s29, %s41
      %p296 = scmp.eq.s32.totalorder %s295, 0
      %s298 = sadd.s32 %s297, 1
      %s299 = scalar_select %p296, %s297, %s298
      %p302 = pneg %p296
      %p303 = scmp.eq.s32.totalorder %s22, 7
      %p304 = por %p302, %p303
      %p305 = scmp.ne.s32.totalorder %s297, %s300
      %p306 = scmp.eq.s32.totalorder %s22, 0
      %p307 = por %p305, %p306
      %p308 = scmp.ne.s32.totalorder %s297, %s300
      %p309 = scmp.eq.s32.totalorder %s27, 7
      %p310 = por %p308, %p309
      %p311 = scmp.ne.s32.totalorder %s300, %s301
      %p312 = scmp.eq.s32.totalorder %s27, 0
      %p313 = por %p311, %p312
      %p314 = scmp.ne.s32.totalorder %s300, %s301
      %p315 = scmp.eq.s32.totalorder %s28, 7
      %p316 = por %p314, %p315
      %p318 = scmp.ne.s32.totalorder %s301, %s317
      %p319 = scmp.eq.s32.totalorder %s28, 0
      %p320 = por %p318, %p319
      %s321 = ssub.s32 %s29, %s41
      %p322 = scmp.eq.s32.totalorder %s321, 0
      %s324 = sadd.s32 %s323, 1
      %s325 = scalar_select %p322, %s323, %s324
      %p328 = pneg %p322
      %p329 = scmp.eq.s32.totalorder %s22, 7
      %p330 = por %p328, %p329
      %p331 = scmp.ne.s32.totalorder %s323, %s326
      %p332 = scmp.eq.s32.totalorder %s22, 0
      %p333 = por %p331, %p332
      %p334 = scmp.ne.s32.totalorder %s323, %s326
      %p335 = scmp.eq.s32.totalorder %s27, 7
      %p336 = por %p334, %p335
      %p337 = scmp.ne.s32.totalorder %s326, %s327
      %p338 = scmp.eq.s32.totalorder %s27, 0
      %p339 = por %p337, %p338
      %p340 = scmp.ne.s32.totalorder %s326, %s327
      %p341 = scmp.eq.s32.totalorder %s28, 7
      %p342 = por %p340, %p341
      %p344 = scmp.ne.s32.totalorder %s327, %s343
      %p345 = scmp.eq.s32.totalorder %s28, 0
      %p346 = por %p344, %p345
      %p347 = scmp.le.s32.totalorder 1, %s22
      %p348 = scmp.lt.s32.totalorder %s22, 9
      %p349 = pnand %p347, %p348
      %p350 = pneg %p349
      // Predicated region
      $region9: #{mtpnet_forward.1} parent=5 // pred_check
        _
      $region10: #{mtpnet_forward.1} parent=5 // pred_check_branch
        %352 = sbr.rel (%p349) target = $region12
      $region11: #{mtpnet_forward.1} parent=5 // pred_region
        %s353 = ssub.s32 %s22, 1
        // Predicated region
        $region13: #{mtpnet_forward.1} parent=11 // pred_check
          %p354 = pneg %p109
        $region14: #{mtpnet_forward.1} parent=11 // pred_check_branch
          %356 = sbr.rel (%p354) target = $region16
        $region15: #{mtpnet_forward.1} parent=11 // pred_region
          _
        $region16: #{mtpnet_forward.1} parent=11 // pred_fallthru
          _
        // Predicated region
        $region17: #{mtpnet_forward.1} parent=11 // pred_check
          %p357 = pneg %p156
        $region18: #{mtpnet_forward.1} parent=11 // pred_check_branch
          %359 = sbr.rel (%p357) target = $region20
        $region19: #{mtpnet_forward.1} parent=11 // pred_region
          _
        $region20: #{mtpnet_forward.1} parent=11 // pred_fallthru
          _
        // Predicated region
        $region21: #{mtpnet_forward.1} parent=11 // pred_check
          %p360 = pneg %p177
        $region22: #{mtpnet_forward.1} parent=11 // pred_check_branch
          %362 = sbr.rel (%p360) target = $region24
        $region23: #{mtpnet_forward.1} parent=11 // pred_region
          _
        $region24: #{mtpnet_forward.1} parent=11 // pred_fallthru
          _
        // Predicated region
        $region25: #{mtpnet_forward.1} parent=11 // pred_check
          %p363 = pneg %p198
        $region26: #{mtpnet_forward.1} parent=11 // pred_check_branch
          %365 = sbr.rel (%p363) target = $region28
        $region27: #{mtpnet_forward.1} parent=11 // pred_region
          _
        $region28: #{mtpnet_forward.1} parent=11 // pred_fallthru
          _
        // Predicated region
        $region29: #{mtpnet_forward.1} parent=11 // pred_check
          %p366 = pneg %p219
        $region30: #{mtpnet_forward.1} parent=11 // pred_check_branch
          %368 = sbr.rel (%p366) target = $region32
        $region31: #{mtpnet_forward.1} parent=11 // pred_region
          _
        $region32: #{mtpnet_forward.1} parent=11 // pred_fallthru
          _
        // Predicated region
        $region33: #{mtpnet_forward.1} parent=11 // pred_check
          %p369 = pneg %p240
        $region34: #{mtpnet_forward.1} parent=11 // pred_check_branch
          %371 = sbr.rel (%p369) target = $region36
        $region35: #{mtpnet_forward.1} parent=11 // pred_region
          _
        $region36: #{mtpnet_forward.1} parent=11 // pred_fallthru
          _
        // Predicated region
        $region37: #{mtpnet_forward.1} parent=11 // pred_check
          %p372 = pneg %p261
        $region38: #{mtpnet_forward.1} parent=11 // pred_check_branch
          %374 = sbr.rel (%p372) target = $region40
        $region39: #{mtpnet_forward.1} parent=11 // pred_region
          _
        $region40: #{mtpnet_forward.1} parent=11 // pred_fallthru
          _
      $region12: #{mtpnet_forward.1} parent=5 // pred_fallthru
        _
      %p375 = scmp.lt.s32.totalorder %s22, 8
      // Predicated region
      $region41: #{mtpnet_forward.1} parent=5 // pred_check
        %p376 = pneg %p375
      $region42: #{mtpnet_forward.1} parent=5 // pred_check_branch
        %378 = sbr.rel (%p376) target = $region44
      $region43: #{mtpnet_forward.1} parent=5 // pred_region
        // Predicated region
        $region45: #{mtpnet_forward.1} parent=43 // pred_check
          %p379 = pneg %p54
        $region46: #{mtpnet_forward.1} parent=43 // pred_check_branch
          %381 = sbr.rel (%p379) target = $region48
        $region47: #{mtpnet_forward.1} parent=43 // pred_region
          %p382 = scmp.lt.s32.totalorder %s29, 1
          %s383 = scalar_select %p382, %s29, 1
          %s384 = smul.addr %s383, 12
          %s385 = smul.addr %s384, 4
          %s386 = scalar_lea.vmem %s0, %s385
        $region48: #{mtpnet_forward.1} parent=43 // pred_fallthru
          _
        // Predicated region
        $region49: #{mtpnet_forward.1} parent=43 // pred_check
          %p387 = pneg %p82
        $region50: #{mtpnet_forward.1} parent=43 // pred_check_branch
          %389 = sbr.rel (%p387) target = $region52
        $region51: #{mtpnet_forward.1} parent=43 // pred_region
          %s390 = smul.u32 6, %s30
          %p391 = scmp.lt.s32.totalorder %s29, 1
          %s392 = scalar_select %p391, %s29, 1
          %p393 = scmp.lt.s32.totalorder %s390, 23
          %s394 = scalar_select %p393, %s390, 23
          %s395 = smul.addr %s392, 24
          %s396 = sadd.s32 %s394, %s395
          %s397 = smul.addr %s396, 2
          %s398 = scalar_lea.vmem %s1, %s397
          %s399 = smul.u32 6, %s30
        $region52: #{mtpnet_forward.1} parent=43 // pred_fallthru
          _
        // Predicated region
        $region53: #{mtpnet_forward.1} parent=43 // pred_check
          %p400 = pneg %p129
        $region54: #{mtpnet_forward.1} parent=43 // pred_check_branch
          %402 = sbr.rel (%p400) target = $region56
        $region55: #{mtpnet_forward.1} parent=43 // pred_region
          %s403 = smul.u32 96, %s30
          %p404 = scmp.lt.s32.totalorder %s403, 383
          %s405 = scalar_select %p404, %s403, 383
          %s406 = smul.addr %s405, 2
          %s407 = smul.addr %s406, 4
          %s408 = scalar_lea.vmem %s3, %s407
          %s409 = smul.u32 96, %s30
        $region56: #{mtpnet_forward.1} parent=43 // pred_fallthru
          _
      $region44: #{mtpnet_forward.1} parent=5 // pred_fallthru
        _
      %p410 = scmp.le.s32.totalorder 1, %s22
      %p411 = scmp.lt.s32.totalorder %s22, 9
      %p412 = pnand %p410, %p411
      %p413 = pneg %p412
      // Predicated region
      $region57: #{mtpnet_forward.1} parent=5 // pred_check
        _
      $region58: #{mtpnet_forward.1} parent=5 // pred_check_branch
        %415 = sbr.rel (%p412) target = $region60
      $region59: #{mtpnet_forward.1} parent=5 // pred_region
        %s416 = ssub.s32 %s22, 1
        %p417 = scmp.lt.s32.totalorder %s31, 1
        %s418 = scalar_select %p417, %s31, 1
        %s419 = smul.addr %s418, 12
        %s420 = smul.addr %s419, 4
        %s421 = scalar_lea.vmem %s0, %s420
        %p422 = pneg %p60
        %p423 = pneg %p57
        %s424 = smul.u32 6, %s32
        %p425 = scmp.lt.s32.totalorder %s31, 1
        %s426 = scalar_select %p425, %s31, 1
        %p427 = scmp.lt.s32.totalorder %s424, 23
        %s428 = scalar_select %p427, %s424, 23
        %s429 = smul.addr %s426, 24
        %s430 = sadd.s32 %s428, %s429
        %s431 = smul.addr %s430, 2
        %s432 = scalar_lea.vmem %s1, %s431
        %p433 = pneg %p88
        %p434 = pneg %p85
        %p435 = pneg %p109
        %p436 = pneg %p106
        %s437 = smul.u32 96, %s32
        %p438 = scmp.lt.s32.totalorder %s437, 383
        %s439 = scalar_select %p438, %s437, 383
        %s440 = smul.addr %s439, 2
        %s441 = smul.addr %s440, 4
        %s442 = scalar_lea.vmem %s3, %s441
        %p443 = pneg %p135
        %p444 = pneg %p132
        %p445 = pneg %p156
        %p446 = pneg %p153
        %p447 = pneg %p177
        %p448 = pneg %p174
        %p449 = pneg %p198
        %p450 = pneg %p195
        %p451 = pneg %p219
        %p452 = pneg %p216
        %p453 = pneg %p240
        %p454 = pneg %p237
        %p455 = pneg %p261
        %p456 = pneg %p258
        %p457 = pneg %p287
        %p458 = pneg %p284
        %s459 = sand.u32 %s274, 1
        %s460 = scalar_lea.sflag [#allocation4], %s459
        %s461 = sand.u32 %s274, 1
        %s462 = smul.addr %s461, 4
        %s463 = scalar_lea.vmem [#allocation3], %s462
        %p464 = pneg %p313
        %p465 = pneg %p310
        %p466 = scmp.lt.s32.totalorder %s31, 1
        %s467 = scalar_select %p466, %s31, 1
        %s468 = smul.addr %s467, 2
        %s469 = smul.addr %s468, 8
        %s470 = scalar_lea.vmem %s11, %s469
        %p471 = pneg %p339
        %p472 = pneg %p336
        %p473 = scmp.lt.s32.totalorder %s31, 1
        %s474 = scalar_select %p473, %s31, 1
        %s475 = smul.addr %s474, 2
        %s476 = scalar_lea.vmem %s12, %s475
        %p477 = scmp.lt.s32.totalorder %s31, 1
        %s478 = scalar_select %p477, %s31, 1
        %s479 = smul.addr %s478, 12
        %s480 = smul.addr %s479, 4
        %s481 = scalar_lea.vmem %s0, %s480
        %s482 = smul.u32 6, %s32
        %p483 = scmp.lt.s32.totalorder %s31, 1
        %s484 = scalar_select %p483, %s31, 1
        %p485 = scmp.lt.s32.totalorder %s482, 23
        %s486 = scalar_select %p485, %s482, 23
        %s487 = smul.addr %s484, 24
        %s488 = sadd.s32 %s486, %s487
        %s489 = smul.addr %s488, 2
        %s490 = scalar_lea.vmem %s1, %s489
        %s491 = smul.u32 6, %s32
        %s492 = smul.u32 96, %s32
        %p493 = scmp.lt.s32.totalorder %s492, 383
        %s494 = scalar_select %p493, %s492, 383
        %s495 = smul.addr %s494, 2
        %s496 = smul.addr %s495, 4
        %s497 = scalar_lea.vmem %s3, %s496
        %s498 = smul.u32 96, %s32
        %p499 = scmp.lt.s32.totalorder %s31, 1
        %s500 = scalar_select %p499, %s31, 1
        %s501 = smul.addr %s500, 2
        %s502 = smul.addr %s501, 8
        %s503 = scalar_lea.vmem %s11, %s502
        %p504 = scmp.lt.s32.totalorder %s31, 1
        %s505 = scalar_select %p504, %s31, 1
        %s506 = smul.addr %s505, 2
        %s507 = scalar_lea.vmem %s12, %s506
        %p508 = scmp.eq.s32.totalorder %s32, 0
        // Predicated region
        $region61: #{mtpnet_forward.1} parent=59 // pred_check
          %p509 = pneg %p508
        $region62: #{mtpnet_forward.1} parent=59 // pred_check_branch
          %511 = sbr.rel (%p509) target = $region64
        $region63: #{mtpnet_forward.1} parent=59 // pred_region
          %512 = vst [vmem:[#allocation2] sm:$0xff] 0.0
        $region64: #{mtpnet_forward.1} parent=59 // pred_fallthru
          _
        %v513 = vld [vmem:[#allocation2] sm:$0xff]
        %v514 = vld [vmem:[%s490] sm:$0xff]
        %v515 = vld [vmem:[%s490 + $0x8] sm:$0xf]
        %v516 = vld [vmem:[%s497] sm:$0xff]
        %v517 = vld [vmem:[%s497 + $0x8] sm:$0xff]
        %v518 = vld [vmem:[%s497 + $0x10] sm:$0xff]
        %v519 = vld [vmem:[%s497 + $0x18] sm:$0xff]
        %v520 = vld [vmem:[%s497 + $0x20] sm:$0xff]
        %v521 = vld [vmem:[%s497 + $0x28] sm:$0xff]
        %v522 = vld [vmem:[%s497 + $0x30] sm:$0xff]
        %v523 = vld [vmem:[%s497 + $0x38] sm:$0xff]
        %v524 = vld [vmem:[%s497 + $0x40] sm:$0xff]
        %v525 = vld [vmem:[%s497 + $0x48] sm:$0xff]
        %v526 = vld [vmem:[%s497 + $0x50] sm:$0xff]
        %v527 = vld [vmem:[%s497 + $0x58] sm:$0xff]
        %v528 = vld [vmem:[%s497 + $0x60] sm:$0xff]
        %v529 = vld [vmem:[%s497 + $0x68] sm:$0xff]
        %v530 = vld [vmem:[%s497 + $0x70] sm:$0xff]
        %v531 = vld [vmem:[%s497 + $0x78] sm:$0xff]
        %v532 = vld [vmem:[%s497 + $0x80] sm:$0xff]
        %v533 = vld [vmem:[%s497 + $0x88] sm:$0xff]
        %v534 = vld [vmem:[%s497 + $0x90] sm:$0xff]
        %v535 = vld [vmem:[%s497 + $0x98] sm:$0xff]
        %v536 = vld [vmem:[%s497 + $0xa0] sm:$0xff]
        %v537 = vld [vmem:[%s497 + $0xa8] sm:$0xff]
        %v538 = vld [vmem:[%s497 + $0xb0] sm:$0xff]
        %v539 = vld [vmem:[%s497 + $0xb8] sm:$0xff]
        %v540 = vld [vmem:[%s497 + $0xc0] sm:$0xff]
        %v541 = vld [vmem:[%s497 + $0xc8] sm:$0xff]
        %v542 = vld [vmem:[%s497 + $0xd0] sm:$0xff]
        %v543 = vld [vmem:[%s497 + $0xd8] sm:$0xff]
        %v544 = vld [vmem:[%s497 + $0xe0] sm:$0xff]
        %v545 = vld [vmem:[%s497 + $0xe8] sm:$0xff]
        %v546 = vld [vmem:[%s497 + $0xf0] sm:$0xff]
        %v547 = vld [vmem:[%s497 + $0xf8] sm:$0xff]
        %v548 = vld [vmem:[%s497 + $0x100] sm:$0xff]
        %v549 = vld [vmem:[%s497 + $0x108] sm:$0xff]
        %v550 = vld [vmem:[%s497 + $0x110] sm:$0xff]
        %v551 = vld [vmem:[%s497 + $0x118] sm:$0xff]
        %v552 = vld [vmem:[%s497 + $0x120] sm:$0xff]
        %v553 = vld [vmem:[%s497 + $0x128] sm:$0xff]
        %v554 = vld [vmem:[%s497 + $0x130] sm:$0xff]
        %v555 = vld [vmem:[%s497 + $0x138] sm:$0xff]
        %v556 = vld [vmem:[%s497 + $0x140] sm:$0xff]
        %v557 = vld [vmem:[%s497 + $0x148] sm:$0xff]
        %v558 = vld [vmem:[%s497 + $0x150] sm:$0xff]
        %v559 = vld [vmem:[%s497 + $0x158] sm:$0xff]
        %v560 = vld [vmem:[%s497 + $0x160] sm:$0xff]
        %v561 = vld [vmem:[%s497 + $0x168] sm:$0xff]
        %v562 = vld [vmem:[%s497 + $0x170] sm:$0xff]
        %v563 = vld [vmem:[%s497 + $0x178] sm:$0xff]
        %v564 = vld [vmem:[%s497 + $0x180] sm:$0xff]
        %v565 = vld [vmem:[%s497 + $0x188] sm:$0xff]
        %v566 = vld [vmem:[%s497 + $0x190] sm:$0xff]
        %v567 = vld [vmem:[%s497 + $0x198] sm:$0xff]
        %v568 = vld [vmem:[%s497 + $0x1a0] sm:$0xff]
        %v569 = vld [vmem:[%s497 + $0x1a8] sm:$0xff]
        %v570 = vld [vmem:[%s497 + $0x1b0] sm:$0xff]
        %v571 = vld [vmem:[%s497 + $0x1b8] sm:$0xff]
        %v572 = vld [vmem:[%s497 + $0x1c0] sm:$0xff]
        %v573 = vld [vmem:[%s497 + $0x1c8] sm:$0xff]
        %v574 = vld [vmem:[%s497 + $0x1d0] sm:$0xff]
        %v575 = vld [vmem:[%s497 + $0x1d8] sm:$0xff]
        %v576 = vld [vmem:[%s497 + $0x1e0] sm:$0xff]
        %v577 = vld [vmem:[%s497 + $0x1e8] sm:$0xff]
        %v578 = vld [vmem:[%s497 + $0x1f0] sm:$0xff]
        %v579 = vld [vmem:[%s497 + $0x1f8] sm:$0xff]
        %v580 = vld [vmem:[%s497 + $0x200] sm:$0xff]
        %v581 = vld [vmem:[%s497 + $0x208] sm:$0xff]
        %v582 = vld [vmem:[%s497 + $0x210] sm:$0xff]
        %v583 = vld [vmem:[%s497 + $0x218] sm:$0xff]
        %v584 = vld [vmem:[%s497 + $0x220] sm:$0xff]
        %v585 = vld [vmem:[%s497 + $0x228] sm:$0xff]
        %v586 = vld [vmem:[%s497 + $0x230] sm:$0xff]
        %v587 = vld [vmem:[%s497 + $0x238] sm:$0xff]
        %v588 = vld [vmem:[%s497 + $0x240] sm:$0xff]
        %v589 = vld [vmem:[%s497 + $0x248] sm:$0xff]
        %v590 = vld [vmem:[%s497 + $0x250] sm:$0xff]
        %v591 = vld [vmem:[%s497 + $0x258] sm:$0xff]
        %v592 = vld [vmem:[%s497 + $0x260] sm:$0xff]
        %v593 = vld [vmem:[%s497 + $0x268] sm:$0xff]
        %v594 = vld [vmem:[%s497 + $0x270] sm:$0xff]
        %v595 = vld [vmem:[%s497 + $0x278] sm:$0xff]
        %v596 = vld [vmem:[%s497 + $0x280] sm:$0xff]
        %v597 = vld [vmem:[%s497 + $0x288] sm:$0xff]
        %v598 = vld [vmem:[%s497 + $0x290] sm:$0xff]
        %v599 = vld [vmem:[%s497 + $0x298] sm:$0xff]
        %v600 = vld [vmem:[%s497 + $0x2a0] sm:$0xff]
        %v601 = vld [vmem:[%s497 + $0x2a8] sm:$0xff]
        %v602 = vld [vmem:[%s497 + $0x2b0] sm:$0xff]
        %v603 = vld [vmem:[%s497 + $0x2b8] sm:$0xff]
        %v604 = vld [vmem:[%s497 + $0x2c0] sm:$0xff]
        %v605 = vld [vmem:[%s497 + $0x2c8] sm:$0xff]
        %v606 = vld [vmem:[%s497 + $0x2d0] sm:$0xff]
        %v607 = vld [vmem:[%s497 + $0x2d8] sm:$0xff]
        %v608 = vld [vmem:[%s497 + $0x2e0] sm:$0xff]
        %v609 = vld [vmem:[%s497 + $0x2e8] sm:$0xff]
        %v610 = vld [vmem:[%s497 + $0x2f0] sm:$0xff]
        %v611 = vld [vmem:[%s497 + $0x2f8] sm:$0xff]
        %613 = vst [vmem:[#allocation1] ss:$4 sm:$0xff] %v514
        %s615 = scalar_lea.vmem [#allocation1], 32
        %616 = vst [vmem:[%s615] ss:$4 sm:$0xff] %v515
        %v617 = vld.sshfl [vmem:[#allocation1] sm:$0xff pattern:$0x73625140]
        %v618 = vld.sshfl [vmem:[#allocation1 + $0x8] sm:$0xff pattern:$0x73625140]
        %v619 = vld.sshfl [vmem:[#allocation1 + $0x10] sm:$0xff pattern:$0x73625140]
        %v620 = vld.sshfl [vmem:[#allocation1 + $0x18] sm:$0xff pattern:$0x73625140]
        %v621 = vld.sshfl [vmem:[#allocation1 + $0x20] sm:$0xff pattern:$0x73625140]
        %v622 = vld.sshfl [vmem:[#allocation1 + $0x28] sm:$0xff pattern:$0x73625140]
        %v725 = vunpack.c.l.b16 %v516
        %v726 = vunpack.c.h.b16 %v516
        %v727 = vunpack.c.l.b16 %v517
        %v728 = vunpack.c.h.b16 %v517
        %v729 = vunpack.c.l.b16 %v518
        %v730 = vunpack.c.h.b16 %v518
        %v731 = vunpack.c.l.b16 %v519
        %v732 = vunpack.c.h.b16 %v519
        %v733 = vunpack.c.l.b16 %v520
        %v734 = vunpack.c.h.b16 %v520
        %v735 = vunpack.c.l.b16 %v521
        %v736 = vunpack.c.h.b16 %v521
        %v737 = vunpack.c.l.b16 %v522
        %v738 = vunpack.c.h.b16 %v522
        %v739 = vunpack.c.l.b16 %v523
        %v740 = vunpack.c.h.b16 %v523
        %v741 = vunpack.c.l.b16 %v524
        %v742 = vunpack.c.h.b16 %v524
        %v743 = vunpack.c.l.b16 %v525
        %v744 = vunpack.c.h.b16 %v525
        %v745 = vunpack.c.l.b16 %v526
        %v746 = vunpack.c.h.b16 %v526
        %v747 = vunpack.c.l.b16 %v527
        %v748 = vunpack.c.h.b16 %v527
        %v749 = vunpack.c.l.b16 %v528
        %v750 = vunpack.c.h.b16 %v528
        %v751 = vunpack.c.l.b16 %v529
        %v752 = vunpack.c.h.b16 %v529
        %v753 = vunpack.c.l.b16 %v530
        %v754 = vunpack.c.h.b16 %v530
        %v755 = vunpack.c.l.b16 %v531
        %v756 = vunpack.c.h.b16 %v531
        %v757 = vunpack.c.l.b16 %v532
        %v758 = vunpack.c.h.b16 %v532
        %v759 = vunpack.c.l.b16 %v533
        %v760 = vunpack.c.h.b16 %v533
        %v761 = vunpack.c.l.b16 %v534
        %v762 = vunpack.c.h.b16 %v534
        %v763 = vunpack.c.l.b16 %v535
        %v764 = vunpack.c.h.b16 %v535
        %v765 = vunpack.c.l.b16 %v536
        %v766 = vunpack.c.h.b16 %v536
        %v767 = vunpack.c.l.b16 %v537
        %v768 = vunpack.c.h.b16 %v537
        %v769 = vunpack.c.l.b16 %v538
        %v770 = vunpack.c.h.b16 %v538
        %v771 = vunpack.c.l.b16 %v539
        %v772 = vunpack.c.h.b16 %v539
        %v773 = vunpack.c.l.b16 %v540
        %v774 = vunpack.c.h.b16 %v540
        %v775 = vunpack.c.l.b16 %v541
        %v776 = vunpack.c.h.b16 %v541
        %v777 = vunpack.c.l.b16 %v542
        %v778 = vunpack.c.h.b16 %v542
        %v779 = vunpack.c.l.b16 %v543
        %v780 = vunpack.c.h.b16 %v543
        %v781 = vunpack.c.l.b16 %v544
        %v782 = vunpack.c.h.b16 %v544
        %v783 = vunpack.c.l.b16 %v545
        %v784 = vunpack.c.h.b16 %v545
        %v785 = vunpack.c.l.b16 %v546
        %v786 = vunpack.c.h.b16 %v546
        %v787 = vunpack.c.l.b16 %v547
        %v788 = vunpack.c.h.b16 %v547
        %v789 = vunpack.c.l.b16 %v548
        %v790 = vunpack.c.h.b16 %v548
        %v791 = vunpack.c.l.b16 %v549
        %v792 = vunpack.c.h.b16 %v549
        %v793 = vunpack.c.l.b16 %v550
        %v794 = vunpack.c.h.b16 %v550
        %v795 = vunpack.c.l.b16 %v551
        %v796 = vunpack.c.h.b16 %v551
        %v797 = vunpack.c.l.b16 %v552
        %v798 = vunpack.c.h.b16 %v552
        %v799 = vunpack.c.l.b16 %v553
        %v800 = vunpack.c.h.b16 %v553
        %v801 = vunpack.c.l.b16 %v554
        %v802 = vunpack.c.h.b16 %v554
        %v803 = vunpack.c.l.b16 %v555
        %v804 = vunpack.c.h.b16 %v555
        %v805 = vunpack.c.l.b16 %v556
        %v806 = vunpack.c.h.b16 %v556
        %v807 = vunpack.c.l.b16 %v557
        %v808 = vunpack.c.h.b16 %v557
        %v809 = vunpack.c.l.b16 %v558
        %v810 = vunpack.c.h.b16 %v558
        %v811 = vunpack.c.l.b16 %v559
        %v812 = vunpack.c.h.b16 %v559
        %v813 = vunpack.c.l.b16 %v560
        %v814 = vunpack.c.h.b16 %v560
        %v815 = vunpack.c.l.b16 %v561
        %v816 = vunpack.c.h.b16 %v561
        %v817 = vunpack.c.l.b16 %v562
        %v818 = vunpack.c.h.b16 %v562
        %v819 = vunpack.c.l.b16 %v563
        %v820 = vunpack.c.h.b16 %v563
        %v821 = vunpack.c.l.b16 %v564
        %v822 = vunpack.c.h.b16 %v564
        %v823 = vunpack.c.l.b16 %v565
        %v824 = vunpack.c.h.b16 %v565
        %v825 = vunpack.c.l.b16 %v566
        %v826 = vunpack.c.h.b16 %v566
        %v827 = vunpack.c.l.b16 %v567
        %v828 = vunpack.c.h.b16 %v567
        %v829 = vunpack.c.l.b16 %v568
        %v830 = vunpack.c.h.b16 %v568
        %v831 = vunpack.c.l.b16 %v569
        %v832 = vunpack.c.h.b16 %v569
        %v833 = vunpack.c.l.b16 %v570
        %v834 = vunpack.c.h.b16 %v570
        %v835 = vunpack.c.l.b16 %v571
        %v836 = vunpack.c.h.b16 %v571
        %v837 = vunpack.c.l.b16 %v572
        %v838 = vunpack.c.h.b16 %v572
        %v839 = vunpack.c.l.b16 %v573
        %v840 = vunpack.c.h.b16 %v573
        %v841 = vunpack.c.l.b16 %v574
        %v842 = vunpack.c.h.b16 %v574
        %v843 = vunpack.c.l.b16 %v575
        %v844 = vunpack.c.h.b16 %v575
        %v845 = vunpack.c.l.b16 %v576
        %v846 = vunpack.c.h.b16 %v576
        %v847 = vunpack.c.l.b16 %v577
        %v848 = vunpack.c.h.b16 %v577
        %v849 = vunpack.c.l.b16 %v578
        %v850 = vunpack.c.h.b16 %v578
        %v851 = vunpack.c.l.b16 %v579
        %v852 = vunpack.c.h.b16 %v579
        %v853 = vunpack.c.l.b16 %v580
        %v854 = vunpack.c.h.b16 %v580
        %v855 = vunpack.c.l.b16 %v581
        %v856 = vunpack.c.h.b16 %v581
        %v857 = vunpack.c.l.b16 %v582
        %v858 = vunpack.c.h.b16 %v582
        %v859 = vunpack.c.l.b16 %v583
        %v860 = vunpack.c.h.b16 %v583
        %v861 = vunpack.c.l.b16 %v584
        %v862 = vunpack.c.h.b16 %v584
        %v863 = vunpack.c.l.b16 %v585
        %v864 = vunpack.c.h.b16 %v585
        %v865 = vunpack.c.l.b16 %v586
        %v866 = vunpack.c.h.b16 %v586
        %v867 = vunpack.c.l.b16 %v587
        %v868 = vunpack.c.h.b16 %v587
        %v869 = vunpack.c.l.b16 %v588
        %v870 = vunpack.c.h.b16 %v588
        %v871 = vunpack.c.l.b16 %v589
        %v872 = vunpack.c.h.b16 %v589
        %v873 = vunpack.c.l.b16 %v590
        %v874 = vunpack.c.h.b16 %v590
        %v875 = vunpack.c.l.b16 %v591
        %v876 = vunpack.c.h.b16 %v591
        %v877 = vunpack.c.l.b16 %v592
        %v878 = vunpack.c.h.b16 %v592
        %v879 = vunpack.c.l.b16 %v593
        %v880 = vunpack.c.h.b16 %v593
        %v881 = vunpack.c.l.b16 %v594
        %v882 = vunpack.c.h.b16 %v594
        %v883 = vunpack.c.l.b16 %v595
        %v884 = vunpack.c.h.b16 %v595
        %v885 = vunpack.c.l.b16 %v596
        %v886 = vunpack.c.h.b16 %v596
        %v887 = vunpack.c.l.b16 %v597
        %v888 = vunpack.c.h.b16 %v597
        %v889 = vunpack.c.l.b16 %v598
        %v890 = vunpack.c.h.b16 %v598
        %v891 = vunpack.c.l.b16 %v599
        %v892 = vunpack.c.h.b16 %v599
        %v893 = vunpack.c.l.b16 %v600
        %v894 = vunpack.c.h.b16 %v600
        %v895 = vunpack.c.l.b16 %v601
        %v896 = vunpack.c.h.b16 %v601
        %v897 = vunpack.c.l.b16 %v602
        %v898 = vunpack.c.h.b16 %v602
        %v899 = vunpack.c.l.b16 %v603
        %v900 = vunpack.c.h.b16 %v603
        %v901 = vunpack.c.l.b16 %v604
        %v902 = vunpack.c.h.b16 %v604
        %v903 = vunpack.c.l.b16 %v605
        %v904 = vunpack.c.h.b16 %v605
        %v905 = vunpack.c.l.b16 %v606
        %v906 = vunpack.c.h.b16 %v606
        %v907 = vunpack.c.l.b16 %v607
        %v908 = vunpack.c.h.b16 %v607
        %v909 = vunpack.c.l.b16 %v608
        %v910 = vunpack.c.h.b16 %v608
        %v911 = vunpack.c.l.b16 %v609
        %v912 = vunpack.c.h.b16 %v609
        %v913 = vunpack.c.l.b16 %v610
        %v914 = vunpack.c.h.b16 %v610
        %v915 = vunpack.c.l.b16 %v611
        %v916 = vunpack.c.h.b16 %v611
        %v917 = vpack.c.b16 %v727, %v725
        %v918 = vpack.c.b16 %v728, %v726
        %v919 = vpack.c.b16 %v731, %v729
        %v920 = vpack.c.b16 %v732, %v730
        %v921 = vpack.c.b16 %v735, %v733
        %v922 = vpack.c.b16 %v736, %v734
        %v923 = vpack.c.b16 %v739, %v737
        %v924 = vpack.c.b16 %v740, %v738
        %v925 = vpack.c.b16 %v743, %v741
        %v926 = vpack.c.b16 %v744, %v742
        %v927 = vpack.c.b16 %v747, %v745
        %v928 = vpack.c.b16 %v748, %v746
        %v929 = vpack.c.b16 %v751, %v749
        %v930 = vpack.c.b16 %v752, %v750
        %v931 = vpack.c.b16 %v755, %v753
        %v932 = vpack.c.b16 %v756, %v754
        %v933 = vpack.c.b16 %v759, %v757
        %v934 = vpack.c.b16 %v760, %v758
        %v935 = vpack.c.b16 %v763, %v761
        %v936 = vpack.c.b16 %v764, %v762
        %v937 = vpack.c.b16 %v767, %v765
        %v938 = vpack.c.b16 %v768, %v766
        %v939 = vpack.c.b16 %v771, %v769
        %v940 = vpack.c.b16 %v772, %v770
        %v941 = vpack.c.b16 %v775, %v773
        %v942 = vpack.c.b16 %v776, %v774
        %v943 = vpack.c.b16 %v779, %v777
        %v944 = vpack.c.b16 %v780, %v778
        %v945 = vpack.c.b16 %v783, %v781
        %v946 = vpack.c.b16 %v784, %v782
        %v947 = vpack.c.b16 %v787, %v785
        %v948 = vpack.c.b16 %v788, %v786
        %v949 = vpack.c.b16 %v791, %v789
        %v950 = vpack.c.b16 %v792, %v790
        %v951 = vpack.c.b16 %v795, %v793
        %v952 = vpack.c.b16 %v796, %v794
        %v953 = vpack.c.b16 %v799, %v797
        %v954 = vpack.c.b16 %v800, %v798
        %v955 = vpack.c.b16 %v803, %v801
        %v956 = vpack.c.b16 %v804, %v802
        %v957 = vpack.c.b16 %v807, %v805
        %v958 = vpack.c.b16 %v808, %v806
        %v959 = vpack.c.b16 %v811, %v809
        %v960 = vpack.c.b16 %v812, %v810
        %v961 = vpack.c.b16 %v815, %v813
        %v962 = vpack.c.b16 %v816, %v814
        %v963 = vpack.c.b16 %v819, %v817
        %v964 = vpack.c.b16 %v820, %v818
        %v965 = vpack.c.b16 %v823, %v821
        %v966 = vpack.c.b16 %v824, %v822
        %v967 = vpack.c.b16 %v827, %v825
        %v968 = vpack.c.b16 %v828, %v826
        %v969 = vpack.c.b16 %v831, %v829
        %v970 = vpack.c.b16 %v832, %v830
        %v971 = vpack.c.b16 %v835, %v833
        %v972 = vpack.c.b16 %v836, %v834
        %v973 = vpack.c.b16 %v839, %v837
        %v974 = vpack.c.b16 %v840, %v838
        %v975 = vpack.c.b16 %v843, %v841
        %v976 = vpack.c.b16 %v844, %v842
        %v977 = vpack.c.b16 %v847, %v845
        %v978 = vpack.c.b16 %v848, %v846
        %v979 = vpack.c.b16 %v851, %v849
        %v980 = vpack.c.b16 %v852, %v850
        %v981 = vpack.c.b16 %v855, %v853
        %v982 = vpack.c.b16 %v856, %v854
        %v983 = vpack.c.b16 %v859, %v857
        %v984 = vpack.c.b16 %v860, %v858
        %v985 = vpack.c.b16 %v863, %v861
        %v986 = vpack.c.b16 %v864, %v862
        %v987 = vpack.c.b16 %v867, %v865
        %v988 = vpack.c.b16 %v868, %v866
        %v989 = vpack.c.b16 %v871, %v869
        %v990 = vpack.c.b16 %v872, %v870
        %v991 = vpack.c.b16 %v875, %v873
        %v992 = vpack.c.b16 %v876, %v874
        %v993 = vpack.c.b16 %v879, %v877
        %v994 = vpack.c.b16 %v880, %v878
        %v995 = vpack.c.b16 %v883, %v881
        %v996 = vpack.c.b16 %v884, %v882
        %v997 = vpack.c.b16 %v887, %v885
        %v998 = vpack.c.b16 %v888, %v886
        %v999 = vpack.c.b16 %v891, %v889
        %v1000 = vpack.c.b16 %v892, %v890
        %v1001 = vpack.c.b16 %v895, %v893
        %v1002 = vpack.c.b16 %v896, %v894
        %v1003 = vpack.c.b16 %v899, %v897
        %v1004 = vpack.c.b16 %v900, %v898
        %v1005 = vpack.c.b16 %v903, %v901
        %v1006 = vpack.c.b16 %v904, %v902
        %v1007 = vpack.c.b16 %v907, %v905
        %v1008 = vpack.c.b16 %v908, %v906
        %v1009 = vpack.c.b16 %v911, %v909
        %v1010 = vpack.c.b16 %v912, %v910
        %v1011 = vpack.c.b16 %v915, %v913
        %v1012 = vpack.c.b16 %v916, %v914
        %1109 = vmatpush.bf16.msra.mxu0 %v931
        %1110 = vmatpush.bf16.msra.mxu0 %v929
        %1111 = vmatpush.bf16.msra.mxu0 %v927
        %1112 = vmatpush.bf16.msra.mxu0 %v925
        %1113 = vmatpush.bf16.msra.mxu0 %v923
        %1114 = vmatpush.bf16.msra.mxu0 %v921
        %1115 = vmatpush.bf16.msra.mxu0 %v919
        %1116 = vmatpush.bf16.msra.mxu0 %v917
        %1117 = vmatmul.bf16.gmra.mxu0 %v617
        %v1118 = vpop.f32.mrf.mxu0
        %v1119 = vadd.f32 0.0, %v1118
        %v1120 = vpop.f32.mrf.mxu0
        %1121 = vdwg.mxu0
        %1122 = vmatpush.bf16.msra.mxu0 %v947
        %1123 = vmatpush.bf16.msra.mxu0 %v945
        %1124 = vmatpush.bf16.msra.mxu0 %v943
        %1125 = vmatpush.bf16.msra.mxu0 %v941
        %1126 = vmatpush.bf16.msra.mxu0 %v939
        %1127 = vmatpush.bf16.msra.mxu0 %v937
        %1128 = vmatpush.bf16.msra.mxu0 %v935
        %1129 = vmatpush.bf16.msra.mxu0 %v933
        %1130 = vmatmul.bf16.gmra.mxu0 %v618
        %v1131 = vpop.f32.mrf.mxu0
        %v1132 = vadd.f32 %v1119, %v1131
        %v1133 = vpop.f32.mrf.mxu0
        %1134 = vdwg.mxu0
        %1135 = vmatpush.bf16.msra.mxu0 %v963
        %1136 = vmatpush.bf16.msra.mxu0 %v961
        %1137 = vmatpush.bf16.msra.mxu0 %v959
        %1138 = vmatpush.bf16.msra.mxu0 %v957
        %1139 = vmatpush.bf16.msra.mxu0 %v955
        %1140 = vmatpush.bf16.msra.mxu0 %v953
        %1141 = vmatpush.bf16.msra.mxu0 %v951
        %1142 = vmatpush.bf16.msra.mxu0 %v949
        %1143 = vmatmul.bf16.gmra.mxu0 %v619
        %v1144 = vpop.f32.mrf.mxu0
        %v1145 = vadd.f32 %v1132, %v1144
        %v1146 = vpop.f32.mrf.mxu0
        %1147 = vdwg.mxu0
        %1148 = vmatpush.bf16.msra.mxu0 %v979
        %1149 = vmatpush.bf16.msra.mxu0 %v977
        %1150 = vmatpush.bf16.msra.mxu0 %v975
        %1151 = vmatpush.bf16.msra.mxu0 %v973
        %1152 = vmatpush.bf16.msra.mxu0 %v971
        %1153 = vmatpush.bf16.msra.mxu0 %v969
        %1154 = vmatpush.bf16.msra.mxu0 %v967
        %1155 = vmatpush.bf16.msra.mxu0 %v965
        %1156 = vmatmul.bf16.gmra.mxu0 %v620
        %v1157 = vpop.f32.mrf.mxu0
        %v1158 = vadd.f32 %v1145, %v1157
        %v1159 = vpop.f32.mrf.mxu0
        %1160 = vdwg.mxu0
        %1161 = vmatpush.bf16.msra.mxu0 %v995
        %1162 = vmatpush.bf16.msra.mxu0 %v993
        %1163 = vmatpush.bf16.msra.mxu0 %v991
        %1164 = vmatpush.bf16.msra.mxu0 %v989
        %1165 = vmatpush.bf16.msra.mxu0 %v987
        %1166 = vmatpush.bf16.msra.mxu0 %v985
        %1167 = vmatpush.bf16.msra.mxu0 %v983
        %1168 = vmatpush.bf16.msra.mxu0 %v981
        %1169 = vmatmul.bf16.gmra.mxu0 %v621
        %v1170 = vpop.f32.mrf.mxu0
        %v1171 = vadd.f32 %v1158, %v1170
        %v1172 = vpop.f32.mrf.mxu0
        %1173 = vdwg.mxu0
        %1174 = vmatpush.bf16.msra.mxu0 %v1011
        %1175 = vmatpush.bf16.msra.mxu0 %v1009
        %1176 = vmatpush.bf16.msra.mxu0 %v1007
        %1177 = vmatpush.bf16.msra.mxu0 %v1005
        %1178 = vmatpush.bf16.msra.mxu0 %v1003
        %1179 = vmatpush.bf16.msra.mxu0 %v1001
        %1180 = vmatpush.bf16.msra.mxu0 %v999
        %1181 = vmatpush.bf16.msra.mxu0 %v997
        %1182 = vmatmul.bf16.gmra.mxu0 %v622
        %v1183 = vpop.f32.mrf.mxu0
        %v1184 = vadd.f32 %v1171, %v1183
        %v1185 = vpop.f32.mrf.mxu0
        %1186 = vdwg.mxu0
        %1187 = vmatpush.bf16.msra.mxu0 %v932
        %1188 = vmatpush.bf16.msra.mxu0 %v930
        %1189 = vmatpush.bf16.msra.mxu0 %v928
        %1190 = vmatpush.bf16.msra.mxu0 %v926
        %1191 = vmatpush.bf16.msra.mxu0 %v924
        %1192 = vmatpush.bf16.msra.mxu0 %v922
        %1193 = vmatpush.bf16.msra.mxu0 %v920
        %1194 = vmatpush.bf16.msra.mxu0 %v918
        %1195 = vmatmul.bf16.gmra.mxu0 %v617
        %v1196 = vpop.f32.mrf.mxu0
        %v1197 = vadd.f32 0.0, %v1196
        %v1198 = vpop.f32.mrf.mxu0
        %1199 = vdwg.mxu0
        %1200 = vmatpush.bf16.msra.mxu0 %v948
        %1201 = vmatpush.bf16.msra.mxu0 %v946
        %1202 = vmatpush.bf16.msra.mxu0 %v944
        %1203 = vmatpush.bf16.msra.mxu0 %v942
        %1204 = vmatpush.bf16.msra.mxu0 %v940
        %1205 = vmatpush.bf16.msra.mxu0 %v938
        %1206 = vmatpush.bf16.msra.mxu0 %v936
        %1207 = vmatpush.bf16.msra.mxu0 %v934
        %1208 = vmatmul.bf16.gmra.mxu0 %v618
        %v1209 = vpop.f32.mrf.mxu0
        %v1210 = vadd.f32 %v1197, %v1209
        %v1211 = vpop.f32.mrf.mxu0
        %1212 = vdwg.mxu0
        %1213 = vmatpush.bf16.msra.mxu0 %v964
        %1214 = vmatpush.bf16.msra.mxu0 %v962
        %1215 = vmatpush.bf16.msra.mxu0 %v960
        %1216 = vmatpush.bf16.msra.mxu0 %v958
        %1217 = vmatpush.bf16.msra.mxu0 %v956
        %1218 = vmatpush.bf16.msra.mxu0 %v954
        %1219 = vmatpush.bf16.msra.mxu0 %v952
        %1220 = vmatpush.bf16.msra.mxu0 %v950
        %1221 = vmatmul.bf16.gmra.mxu0 %v619
        %v1222 = vpop.f32.mrf.mxu0
        %v1223 = vadd.f32 %v1210, %v1222
        %v1224 = vpop.f32.mrf.mxu0
        %1225 = vdwg.mxu0
        %1226 = vmatpush.bf16.msra.mxu0 %v980
        %1227 = vmatpush.bf16.msra.mxu0 %v978
        %1228 = vmatpush.bf16.msra.mxu0 %v976
        %1229 = vmatpush.bf16.msra.mxu0 %v974
        %1230 = vmatpush.bf16.msra.mxu0 %v972
        %1231 = vmatpush.bf16.msra.mxu0 %v970
        %1232 = vmatpush.bf16.msra.mxu0 %v968
        %1233 = vmatpush.bf16.msra.mxu0 %v966
        %1234 = vmatmul.bf16.gmra.mxu0 %v620
        %v1235 = vpop.f32.mrf.mxu0
        %v1236 = vadd.f32 %v1223, %v1235
        %v1237 = vpop.f32.mrf.mxu0
        %1238 = vdwg.mxu0
        %1239 = vmatpush.bf16.msra.mxu0 %v996
        %1240 = vmatpush.bf16.msra.mxu0 %v994
        %1241 = vmatpush.bf16.msra.mxu0 %v992
        %1242 = vmatpush.bf16.msra.mxu0 %v990
        %1243 = vmatpush.bf16.msra.mxu0 %v988
        %1244 = vmatpush.bf16.msra.mxu0 %v986
        %1245 = vmatpush.bf16.msra.mxu0 %v984
        %1246 = vmatpush.bf16.msra.mxu0 %v982
        %1247 = vmatmul.bf16.gmra.mxu0 %v621
        %v1248 = vpop.f32.mrf.mxu0
        %v1249 = vadd.f32 %v1236, %v1248
        %v1250 = vpop.f32.mrf.mxu0
        %1251 = vdwg.mxu0
        %1252 = vmatpush.bf16.msra.mxu0 %v1012
        %1253 = vmatpush.bf16.msra.mxu0 %v1010
        %1254 = vmatpush.bf16.msra.mxu0 %v1008
        %1255 = vmatpush.bf16.msra.mxu0 %v1006
        %1256 = vmatpush.bf16.msra.mxu0 %v1004
        %1257 = vmatpush.bf16.msra.mxu0 %v1002
        %1258 = vmatpush.bf16.msra.mxu0 %v1000
        %1259 = vmatpush.bf16.msra.mxu0 %v998
        %1260 = vmatmul.bf16.gmra.mxu0 %v622
        %v1261 = vpop.f32.mrf.mxu0
        %v1262 = vadd.f32 %v1249, %v1261
        %v1263 = vpop.f32.mrf.mxu0
        %1264 = vdwg.mxu0
        %v1267 = vrot.slane %v1262, 4
        %vm1268 = vcmask 1043456
        %v1269 = vsel %vm1268, %v1184, %v1267
        %v1271 = vadd.f32 %v513, %v1269
        %1272 = vst [vmem:[#allocation2] sm:$0xff] %v1271
        // Predicated region
        $region65: #{mtpnet_forward.1} parent=59 // pred_check
          %p1273 = pneg %p508
        $region66: #{mtpnet_forward.1} parent=59 // pred_check_branch
          %1275 = sbr.rel (%p1273) target = $region68
        $region67: #{mtpnet_forward.1} parent=59 // pred_region
          %v1276 = vld [vmem:[%s481] sm:$0xff]
          %v1277 = vld [vmem:[%s481 + $0x8] sm:$0xff]
          %v1278 = vld [vmem:[%s481 + $0x10] sm:$0xff]
          %v1279 = vld [vmem:[%s481 + $0x18] sm:$0xff]
          %v1280 = vld [vmem:[%s481 + $0x20] sm:$0xff]
          %v1281 = vld [vmem:[%s481 + $0x28] sm:$0xff]
          %v1282 = vld [vmem:[%s2] sm:$0xf]
          %v1283 = vld [vmem:[%s2 + $0x4] sm:$0xf]
          %v1284 = vld [vmem:[%s2 + $0x8] sm:$0xf]
          %v1285 = vld [vmem:[%s2 + $0xc] sm:$0xf]
          %v1286 = vld [vmem:[%s2 + $0x10] sm:$0xf]
          %v1287 = vld [vmem:[%s2 + $0x14] sm:$0xf]
          %v1288 = vld [vmem:[%s2 + $0x18] sm:$0xf]
          %v1289 = vld [vmem:[%s2 + $0x1c] sm:$0xf]
          %v1290 = vld [vmem:[%s2 + $0x20] sm:$0xf]
          %v1291 = vld [vmem:[%s2 + $0x24] sm:$0xf]
          %v1292 = vld [vmem:[%s2 + $0x28] sm:$0xf]
          %v1293 = vld [vmem:[%s2 + $0x2c] sm:$0xf]
          %v1294 = vld [vmem:[%s2 + $0x30] sm:$0xf]
          %v1295 = vld [vmem:[%s2 + $0x34] sm:$0xf]
          %v1296 = vld [vmem:[%s2 + $0x38] sm:$0xf]
          %v1297 = vld [vmem:[%s2 + $0x3c] sm:$0xf]
          %v1298 = vld [vmem:[%s2 + $0x40] sm:$0xf]
          %v1299 = vld [vmem:[%s2 + $0x44] sm:$0xf]
          %v1300 = vld [vmem:[%s2 + $0x48] sm:$0xf]
          %v1301 = vld [vmem:[%s2 + $0x4c] sm:$0xf]
          %v1302 = vld [vmem:[%s2 + $0x50] sm:$0xf]
          %v1303 = vld [vmem:[%s2 + $0x54] sm:$0xf]
          %v1304 = vld [vmem:[%s2 + $0x58] sm:$0xf]
          %v1305 = vld [vmem:[%s2 + $0x5c] sm:$0xf]
          %v1306 = vld [vmem:[%s2 + $0x60] sm:$0xf]
          %v1307 = vld [vmem:[%s2 + $0x64] sm:$0xf]
          %v1308 = vld [vmem:[%s2 + $0x68] sm:$0xf]
          %v1309 = vld [vmem:[%s2 + $0x6c] sm:$0xf]
          %v1310 = vld [vmem:[%s2 + $0x70] sm:$0xf]
          %v1311 = vld [vmem:[%s2 + $0x74] sm:$0xf]
          %v1312 = vld [vmem:[%s2 + $0x78] sm:$0xf]
          %v1313 = vld [vmem:[%s2 + $0x7c] sm:$0xf]
          %v1314 = vld [vmem:[%s2 + $0x80] sm:$0xf]
          %v1315 = vld [vmem:[%s2 + $0x84] sm:$0xf]
          %v1316 = vld [vmem:[%s2 + $0x88] sm:$0xf]
          %v1317 = vld [vmem:[%s2 + $0x8c] sm:$0xf]
          %v1318 = vld [vmem:[%s2 + $0x90] sm:$0xf]
          %v1319 = vld [vmem:[%s2 + $0x94] sm:$0xf]
          %v1320 = vld [vmem:[%s2 + $0x98] sm:$0xf]
          %v1321 = vld [vmem:[%s2 + $0x9c] sm:$0xf]
          %v1322 = vld [vmem:[%s2 + $0xa0] sm:$0xf]
          %v1323 = vld [vmem:[%s2 + $0xa4] sm:$0xf]
          %v1324 = vld [vmem:[%s2 + $0xa8] sm:$0xf]
          %v1325 = vld [vmem:[%s2 + $0xac] sm:$0xf]
          %v1326 = vld [vmem:[%s2 + $0xb0] sm:$0xf]
          %v1327 = vld [vmem:[%s2 + $0xb4] sm:$0xf]
          %v1328 = vld [vmem:[%s2 + $0xb8] sm:$0xf]
          %v1329 = vld [vmem:[%s2 + $0xbc] sm:$0xf]
          %v1330 = vld [vmem:[%s2 + $0xc0] sm:$0xf]
          %v1331 = vld [vmem:[%s2 + $0xc4] sm:$0xf]
          %v1332 = vld [vmem:[%s2 + $0xc8] sm:$0xf]
          %v1333 = vld [vmem:[%s2 + $0xcc] sm:$0xf]
          %v1334 = vld [vmem:[%s2 + $0xd0] sm:$0xf]
          %v1335 = vld [vmem:[%s2 + $0xd4] sm:$0xf]
          %v1336 = vld [vmem:[%s2 + $0xd8] sm:$0xf]
          %v1337 = vld [vmem:[%s2 + $0xdc] sm:$0xf]
          %v1338 = vld [vmem:[%s2 + $0xe0] sm:$0xf]
          %v1339 = vld [vmem:[%s2 + $0xe4] sm:$0xf]
          %v1340 = vld [vmem:[%s2 + $0xe8] sm:$0xf]
          %v1341 = vld [vmem:[%s2 + $0xec] sm:$0xf]
          %v1342 = vld [vmem:[%s2 + $0xf0] sm:$0xf]
          %v1343 = vld [vmem:[%s2 + $0xf4] sm:$0xf]
          %v1344 = vld [vmem:[%s2 + $0xf8] sm:$0xf]
          %v1345 = vld [vmem:[%s2 + $0xfc] sm:$0xf]
          %v1346 = vld [vmem:[%s2 + $0x100] sm:$0xf]
          %v1347 = vld [vmem:[%s2 + $0x104] sm:$0xf]
          %v1348 = vld [vmem:[%s2 + $0x108] sm:$0xf]
          %v1349 = vld [vmem:[%s2 + $0x10c] sm:$0xf]
          %v1350 = vld [vmem:[%s2 + $0x110] sm:$0xf]
          %v1351 = vld [vmem:[%s2 + $0x114] sm:$0xf]
          %v1352 = vld [vmem:[%s2 + $0x118] sm:$0xf]
          %v1353 = vld [vmem:[%s2 + $0x11c] sm:$0xf]
          %v1354 = vld [vmem:[%s2 + $0x120] sm:$0xf]
          %v1355 = vld [vmem:[%s2 + $0x124] sm:$0xf]
          %v1356 = vld [vmem:[%s2 + $0x128] sm:$0xf]
          %v1357 = vld [vmem:[%s2 + $0x12c] sm:$0xf]
          %v1358 = vld [vmem:[%s2 + $0x130] sm:$0xf]
          %v1359 = vld [vmem:[%s2 + $0x134] sm:$0xf]
          %v1360 = vld [vmem:[%s2 + $0x138] sm:$0xf]
          %v1361 = vld [vmem:[%s2 + $0x13c] sm:$0xf]
          %v1362 = vld [vmem:[%s2 + $0x140] sm:$0xf]
          %v1363 = vld [vmem:[%s2 + $0x144] sm:$0xf]
          %v1364 = vld [vmem:[%s2 + $0x148] sm:$0xf]
          %v1365 = vld [vmem:[%s2 + $0x14c] sm:$0xf]
          %v1366 = vld [vmem:[%s2 + $0x150] sm:$0xf]
          %v1367 = vld [vmem:[%s2 + $0x154] sm:$0xf]
          %v1368 = vld [vmem:[%s2 + $0x158] sm:$0xf]
          %v1369 = vld [vmem:[%s2 + $0x15c] sm:$0xf]
          %v1370 = vld [vmem:[%s2 + $0x160] sm:$0xf]
          %v1371 = vld [vmem:[%s2 + $0x164] sm:$0xf]
          %v1372 = vld [vmem:[%s2 + $0x168] sm:$0xf]
          %v1373 = vld [vmem:[%s2 + $0x16c] sm:$0xf]
          %v1374 = vld [vmem:[%s2 + $0x170] sm:$0xf]
          %v1375 = vld [vmem:[%s2 + $0x174] sm:$0xf]
          %v1376 = vld [vmem:[%s2 + $0x178] sm:$0xf]
          %v1377 = vld [vmem:[%s2 + $0x17c] sm:$0xf]
          %v1378 = vld [vmem:[%s6] sm:$0x1]
          %v1379 = vperm.slane %v1378, 0
          %v1386 = vunpack.c.l.b16 %v1276
          %v1387 = vunpack.c.h.b16 %v1276
          %v1388 = vunpack.c.l.b16 %v1277
          %v1389 = vunpack.c.h.b16 %v1277
          %v1390 = vunpack.c.l.b16 %v1278
          %v1391 = vunpack.c.h.b16 %v1278
          %v1392 = vunpack.c.l.b16 %v1279
          %v1393 = vunpack.c.h.b16 %v1279
          %v1394 = vunpack.c.l.b16 %v1280
          %v1395 = vunpack.c.h.b16 %v1280
          %v1396 = vunpack.c.l.b16 %v1281
          %v1397 = vunpack.c.h.b16 %v1281
          %v1398 = vpack.c.b16 %v1392, %v1386
          %v1399 = vpack.c.b16 %v1393, %v1387
          %v1400 = vpack.c.b16 %v1394, %v1388
          %v1401 = vpack.c.b16 %v1395, %v1389
          %v1402 = vpack.c.b16 %v1396, %v1390
          %v1403 = vpack.c.b16 %v1397, %v1391
          %v1506 = vunpack.c.l.b16 %v1282
          %v1507 = vunpack.c.l.b16 %v1283
          %v1508 = vunpack.c.l.b16 %v1284
          %v1509 = vunpack.c.l.b16 %v1285
          %v1510 = vunpack.c.l.b16 %v1286
          %v1511 = vunpack.c.l.b16 %v1287
          %v1512 = vunpack.c.l.b16 %v1288
          %v1513 = vunpack.c.l.b16 %v1289
          %v1514 = vunpack.c.l.b16 %v1290
          %v1515 = vunpack.c.l.b16 %v1291
          %v1516 = vunpack.c.l.b16 %v1292
          %v1517 = vunpack.c.l.b16 %v1293
          %v1518 = vunpack.c.l.b16 %v1294
          %v1519 = vunpack.c.l.b16 %v1295
          %v1520 = vunpack.c.l.b16 %v1296
          %v1521 = vunpack.c.l.b16 %v1297
          %v1522 = vunpack.c.l.b16 %v1298
          %v1523 = vunpack.c.l.b16 %v1299
          %v1524 = vunpack.c.l.b16 %v1300
          %v1525 = vunpack.c.l.b16 %v1301
          %v1526 = vunpack.c.l.b16 %v1302
          %v1527 = vunpack.c.l.b16 %v1303
          %v1528 = vunpack.c.l.b16 %v1304
          %v1529 = vunpack.c.l.b16 %v1305
          %v1530 = vunpack.c.l.b16 %v1306
          %v1531 = vunpack.c.l.b16 %v1307
          %v1532 = vunpack.c.l.b16 %v1308
          %v1533 = vunpack.c.l.b16 %v1309
          %v1534 = vunpack.c.l.b16 %v1310
          %v1535 = vunpack.c.l.b16 %v1311
          %v1536 = vunpack.c.l.b16 %v1312
          %v1537 = vunpack.c.l.b16 %v1313
          %v1538 = vunpack.c.l.b16 %v1314
          %v1539 = vunpack.c.l.b16 %v1315
          %v1540 = vunpack.c.l.b16 %v1316
          %v1541 = vunpack.c.l.b16 %v1317
          %v1542 = vunpack.c.l.b16 %v1318
          %v1543 = vunpack.c.l.b16 %v1319
          %v1544 = vunpack.c.l.b16 %v1320
          %v1545 = vunpack.c.l.b16 %v1321
          %v1546 = vunpack.c.l.b16 %v1322
          %v1547 = vunpack.c.l.b16 %v1323
          %v1548 = vunpack.c.l.b16 %v1324
          %v1549 = vunpack.c.l.b16 %v1325
          %v1550 = vunpack.c.l.b16 %v1326
          %v1551 = vunpack.c.l.b16 %v1327
          %v1552 = vunpack.c.l.b16 %v1328
          %v1553 = vunpack.c.l.b16 %v1329
          %v1554 = vunpack.c.l.b16 %v1330
          %v1555 = vunpack.c.l.b16 %v1331
          %v1556 = vunpack.c.l.b16 %v1332
          %v1557 = vunpack.c.l.b16 %v1333
          %v1558 = vunpack.c.l.b16 %v1334
          %v1559 = vunpack.c.l.b16 %v1335
          %v1560 = vunpack.c.l.b16 %v1336
          %v1561 = vunpack.c.l.b16 %v1337
          %v1562 = vunpack.c.l.b16 %v1338
          %v1563 = vunpack.c.l.b16 %v1339
          %v1564 = vunpack.c.l.b16 %v1340
          %v1565 = vunpack.c.l.b16 %v1341
          %v1566 = vunpack.c.l.b16 %v1342
          %v1567 = vunpack.c.l.b16 %v1343
          %v1568 = vunpack.c.l.b16 %v1344
          %v1569 = vunpack.c.l.b16 %v1345
          %v1570 = vunpack.c.l.b16 %v1346
          %v1571 = vunpack.c.l.b16 %v1347
          %v1572 = vunpack.c.l.b16 %v1348
          %v1573 = vunpack.c.l.b16 %v1349
          %v1574 = vunpack.c.l.b16 %v1350
          %v1575 = vunpack.c.l.b16 %v1351
          %v1576 = vunpack.c.l.b16 %v1352
          %v1577 = vunpack.c.l.b16 %v1353
          %v1578 = vunpack.c.l.b16 %v1354
          %v1579 = vunpack.c.l.b16 %v1355
          %v1580 = vunpack.c.l.b16 %v1356
          %v1581 = vunpack.c.l.b16 %v1357
          %v1582 = vunpack.c.l.b16 %v1358
          %v1583 = vunpack.c.l.b16 %v1359
          %v1584 = vunpack.c.l.b16 %v1360
          %v1585 = vunpack.c.l.b16 %v1361
          %v1586 = vunpack.c.l.b16 %v1362
          %v1587 = vunpack.c.l.b16 %v1363
          %v1588 = vunpack.c.l.b16 %v1364
          %v1589 = vunpack.c.l.b16 %v1365
          %v1590 = vunpack.c.l.b16 %v1366
          %v1591 = vunpack.c.l.b16 %v1367
          %v1592 = vunpack.c.l.b16 %v1368
          %v1593 = vunpack.c.l.b16 %v1369
          %v1594 = vunpack.c.l.b16 %v1370
          %v1595 = vunpack.c.l.b16 %v1371
          %v1596 = vunpack.c.l.b16 %v1372
          %v1597 = vunpack.c.l.b16 %v1373
          %v1598 = vunpack.c.l.b16 %v1374
          %v1599 = vunpack.c.l.b16 %v1375
          %v1600 = vunpack.c.l.b16 %v1376
          %v1601 = vunpack.c.l.b16 %v1377
          %v1602 = vpack.c.b16 %v1507, %v1506
          %v1603 = vpack.c.b16 %v1509, %v1508
          %v1604 = vpack.c.b16 %v1511, %v1510
          %v1605 = vpack.c.b16 %v1513, %v1512
          %v1606 = vpack.c.b16 %v1515, %v1514
          %v1607 = vpack.c.b16 %v1517, %v1516
          %v1608 = vpack.c.b16 %v1519, %v1518
          %v1609 = vpack.c.b16 %v1521, %v1520
          %v1610 = vpack.c.b16 %v1523, %v1522
          %v1611 = vpack.c.b16 %v1525, %v1524
          %v1612 = vpack.c.b16 %v1527, %v1526
          %v1613 = vpack.c.b16 %v1529, %v1528
          %v1614 = vpack.c.b16 %v1531, %v1530
          %v1615 = vpack.c.b16 %v1533, %v1532
          %v1616 = vpack.c.b16 %v1535, %v1534
          %v1617 = vpack.c.b16 %v1537, %v1536
          %v1618 = vpack.c.b16 %v1539, %v1538
          %v1619 = vpack.c.b16 %v1541, %v1540
          %v1620 = vpack.c.b16 %v1543, %v1542
          %v1621 = vpack.c.b16 %v1545, %v1544
          %v1622 = vpack.c.b16 %v1547, %v1546
          %v1623 = vpack.c.b16 %v1549, %v1548
          %v1624 = vpack.c.b16 %v1551, %v1550
          %v1625 = vpack.c.b16 %v1553, %v1552
          %v1626 = vpack.c.b16 %v1555, %v1554
          %v1627 = vpack.c.b16 %v1557, %v1556
          %v1628 = vpack.c.b16 %v1559, %v1558
          %v1629 = vpack.c.b16 %v1561, %v1560
          %v1630 = vpack.c.b16 %v1563, %v1562
          %v1631 = vpack.c.b16 %v1565, %v1564
          %v1632 = vpack.c.b16 %v1567, %v1566
          %v1633 = vpack.c.b16 %v1569, %v1568
          %v1634 = vpack.c.b16 %v1571, %v1570
          %v1635 = vpack.c.b16 %v1573, %v1572
          %v1636 = vpack.c.b16 %v1575, %v1574
          %v1637 = vpack.c.b16 %v1577, %v1576
          %v1638 = vpack.c.b16 %v1579, %v1578
          %v1639 = vpack.c.b16 %v1581, %v1580
          %v1640 = vpack.c.b16 %v1583, %v1582
          %v1641 = vpack.c.b16 %v1585, %v1584
          %v1642 = vpack.c.b16 %v1587, %v1586
          %v1643 = vpack.c.b16 %v1589, %v1588
          %v1644 = vpack.c.b16 %v1591, %v1590
          %v1645 = vpack.c.b16 %v1593, %v1592
          %v1646 = vpack.c.b16 %v1595, %v1594
          %v1647 = vpack.c.b16 %v1597, %v1596
          %v1648 = vpack.c.b16 %v1599, %v1598
          %v1649 = vpack.c.b16 %v1601, %v1600
          %1698 = vmatpush.bf16.msra.mxu0 %v1609
          %1699 = vmatpush.bf16.msra.mxu0 %v1608
          %1700 = vmatpush.bf16.msra.mxu0 %v1607
          %1701 = vmatpush.bf16.msra.mxu0 %v1606
          %1702 = vmatpush.bf16.msra.mxu0 %v1605
          %1703 = vmatpush.bf16.msra.mxu0 %v1604
          %1704 = vmatpush.bf16.msra.mxu0 %v1603
          %1705 = vmatpush.bf16.msra.mxu0 %v1602
          %1706 = vmatmul.bf16.gmra.mxu0 %v1398
          %v1707 = vpop.f32.mrf.mxu0
          %v1708 = vadd.f32 %v1379, %v1707
          %v1709 = vpop.f32.mrf.mxu0
          %v1710 = vadd.f32 %v1379, %v1709
          %1711 = vdwg.mxu0
          %1712 = vmatpush.bf16.msra.mxu0 %v1617
          %1713 = vmatpush.bf16.msra.mxu0 %v1616
          %1714 = vmatpush.bf16.msra.mxu0 %v1615
          %1715 = vmatpush.bf16.msra.mxu0 %v1614
          %1716 = vmatpush.bf16.msra.mxu0 %v1613
          %1717 = vmatpush.bf16.msra.mxu0 %v1612
          %1718 = vmatpush.bf16.msra.mxu0 %v1611
          %1719 = vmatpush.bf16.msra.mxu0 %v1610
          %1720 = vmatmul.bf16.gmra.mxu0 %v1399
          %v1721 = vpop.f32.mrf.mxu0
          %v1722 = vadd.f32 %v1708, %v1721
          %v1723 = vpop.f32.mrf.mxu0
          %v1724 = vadd.f32 %v1710, %v1723
          %1725 = vdwg.mxu0
          %1726 = vmatpush.bf16.msra.mxu0 %v1625
          %1727 = vmatpush.bf16.msra.mxu0 %v1624
          %1728 = vmatpush.bf16.msra.mxu0 %v1623
          %1729 = vmatpush.bf16.msra.mxu0 %v1622
          %1730 = vmatpush.bf16.msra.mxu0 %v1621
          %1731 = vmatpush.bf16.msra.mxu0 %v1620
          %1732 = vmatpush.bf16.msra.mxu0 %v1619
          %1733 = vmatpush.bf16.msra.mxu0 %v1618
          %1734 = vmatmul.bf16.gmra.mxu0 %v1400
          %v1735 = vpop.f32.mrf.mxu0
          %v1736 = vadd.f32 %v1722, %v1735
          %v1737 = vpop.f32.mrf.mxu0
          %v1738 = vadd.f32 %v1724, %v1737
          %1739 = vdwg.mxu0
          %1740 = vmatpush.bf16.msra.mxu0 %v1633
          %1741 = vmatpush.bf16.msra.mxu0 %v1632
          %1742 = vmatpush.bf16.msra.mxu0 %v1631
          %1743 = vmatpush.bf16.msra.mxu0 %v1630
          %1744 = vmatpush.bf16.msra.mxu0 %v1629
          %1745 = vmatpush.bf16.msra.mxu0 %v1628
          %1746 = vmatpush.bf16.msra.mxu0 %v1627
          %1747 = vmatpush.bf16.msra.mxu0 %v1626
          %1748 = vmatmul.bf16.gmra.mxu0 %v1401
          %v1749 = vpop.f32.mrf.mxu0
          %v1750 = vadd.f32 %v1736, %v1749
          %v1751 = vpop.f32.mrf.mxu0
          %v1752 = vadd.f32 %v1738, %v1751
          %1753 = vdwg.mxu0
          %1754 = vmatpush.bf16.msra.mxu0 %v1641
          %1755 = vmatpush.bf16.msra.mxu0 %v1640
          %1756 = vmatpush.bf16.msra.mxu0 %v1639
          %1757 = vmatpush.bf16.msra.mxu0 %v1638
          %1758 = vmatpush.bf16.msra.mxu0 %v1637
          %1759 = vmatpush.bf16.msra.mxu0 %v1636
          %1760 = vmatpush.bf16.msra.mxu0 %v1635
          %1761 = vmatpush.bf16.msra.mxu0 %v1634
          %1762 = vmatmul.bf16.gmra.mxu0 %v1402
          %v1763 = vpop.f32.mrf.mxu0
          %v1764 = vadd.f32 %v1750, %v1763
          %v1765 = vpop.f32.mrf.mxu0
          %v1766 = vadd.f32 %v1752, %v1765
          %1767 = vdwg.mxu0
          %1768 = vmatpush.bf16.msra.mxu0 %v1649
          %1769 = vmatpush.bf16.msra.mxu0 %v1648
          %1770 = vmatpush.bf16.msra.mxu0 %v1647
          %1771 = vmatpush.bf16.msra.mxu0 %v1646
          %1772 = vmatpush.bf16.msra.mxu0 %v1645
          %1773 = vmatpush.bf16.msra.mxu0 %v1644
          %1774 = vmatpush.bf16.msra.mxu0 %v1643
          %1775 = vmatpush.bf16.msra.mxu0 %v1642
          %1776 = vmatmul.bf16.gmra.mxu0 %v1403
          %v1777 = vpop.f32.mrf.mxu0
          %v1778 = vadd.f32 %v1764, %v1777
          %v1779 = vpop.f32.mrf.mxu0
          %v1780 = vadd.f32 %v1766, %v1779
          %1781 = vdwg.mxu0
          %v1782 = vld [vmem:[%s5] sm:$0xff]
          %v1783 = vld [vmem:[%s5 + $0x8] sm:$0xff]
          %v1784 = vld [vmem:[%s5 + $0x10] sm:$0xff]
          %v1785 = vld [vmem:[%s5 + $0x18] sm:$0xff]
          %v1786 = vld [vmem:[%s5 + $0x20] sm:$0xff]
          %v1787 = vld [vmem:[%s5 + $0x28] sm:$0xff]
          %v1788 = vld [vmem:[%s5 + $0x30] sm:$0xff]
          %v1789 = vld [vmem:[%s5 + $0x38] sm:$0xff]
          %v1790 = vld [vmem:[%s5 + $0x40] sm:$0xff]
          %v1791 = vld [vmem:[%s5 + $0x48] sm:$0xff]
          %v1792 = vld [vmem:[%s5 + $0x50] sm:$0xff]
          %v1793 = vld [vmem:[%s5 + $0x58] sm:$0xff]
          %v1794 = vld [vmem:[%s5 + $0x60] sm:$0xff]
          %v1795 = vld [vmem:[%s5 + $0x68] sm:$0xff]
          %v1796 = vld [vmem:[%s5 + $0x70] sm:$0xff]
          %v1797 = vld [vmem:[%s5 + $0x78] sm:$0xff]
          %v1798 = vld [vmem:[%s7] sm:$0x1]
          %v1799 = vperm.slane %v1798, 0
          %1800 = vmatpush.msra.mxu0 %v1797
          %1801 = vmatpush.msra.mxu0 %v1796
          %1802 = vmatpush.msra.mxu0 %v1795
          %1803 = vmatpush.msra.mxu0 %v1794
          %1804 = vmatpush.msra.mxu0 %v1793
          %1805 = vmatpush.msra.mxu0 %v1792
          %1806 = vmatpush.msra.mxu0 %v1791
          %1807 = vmatpush.msra.mxu0 %v1790
          %1808 = vmatpush.msra.mxu0 %v1789
          %1809 = vmatpush.msra.mxu0 %v1788
          %1810 = vmatpush.msra.mxu0 %v1787
          %1811 = vmatpush.msra.mxu0 %v1786
          %1812 = vmatpush.msra.mxu0 %v1785
          %1813 = vmatpush.msra.mxu0 %v1784
          %1814 = vmatpush.msra.mxu0 %v1783
          %1815 = vmatpush.msra.mxu0 %v1782
          %1816 = vmatmul.f32.gmra.mxu0 %v1778
          %v1817 = vpop.f32.mrf.mxu0
          %v1818 = vadd.f32 %v1799, %v1817
          %1819 = vmatmul.f32.gmra.mxu0 %v1780
          %v1820 = vpop.f32.mrf.mxu0
          %v1821 = vadd.f32 %v1799, %v1820
          %1822 = vdwg.mxu0
          %v1823 = vmul.f32 %v1818, 0.5
          %v1824 = vmul.f32 %v1821, 0.5
          %v1825 = vmul.f32 %v1818, 0.70710677
          %v1826 = vmul.f32 %v1821, 0.70710677
          %v1827 = vmul.f32 %v1825, %v1825
          %v1828 = vmin.f32 16.0, %v1827
          %v1829 = vmul.f32 %v1828, 2.1237322e-06
          %v1830 = vadd.f32 %v1829, 0.00028619796
          %v1831 = vmul.f32 %v1828, %v1830
          %v1832 = vadd.f32 %v1831, 0.0036580483
          %v1833 = vmul.f32 %v1828, %v1832
          %v1834 = vadd.f32 %v1833, 0.05243302
          %v1835 = vmul.f32 %v1828, %v1834
          %v1836 = vadd.f32 %v1835, 0.18741608
          %v1837 = vmul.f32 %v1828, %v1836
          %v1838 = vadd.f32 %v1837, 1.1283791
          %v1839 = vmul.f32 %v1825, %v1838
          %v1840 = vmul.f32 %v1828, 3.8918573e-05
          %v1841 = vadd.f32 %v1840, 0.001143296
          %v1842 = vmul.f32 %v1828, %v1841
          %v1843 = vadd.f32 %v1842, 0.014752088
          %v1844 = vmul.f32 %v1828, %v1843
          %v1845 = vadd.f32 %v1844, 0.112945676
          %v1846 = vmul.f32 %v1828, %v1845
          %v1847 = vadd.f32 %v1846, 0.4994258
          %v1848 = vmul.f32 %v1828, %v1847
          %v1849 = vadd.f32 %v1848, 1.0
          %v1850 = vrcp.pop %v1849
          %v1851 = vmul.f32 %v1849, %v1850
          %v1852 = vsub.f32 1.0, %v1851
          %v1853 = vmul.f32 %v1850, %v1852
          %v1854 = vadd.f32 %v1850, %v1853
          %vm1855 = vweird.f32 %v1849
          %vm1856 = vweird.f32 %v1850
          %vm1857 = vmor %vm1855, %vm1856
          %v1858 = vsel %vm1857, %v1850, %v1854
          %v1859 = vand.u32 2147483647, %v1849
          %vm1860 = vcmp.eq.f32.partialorder %v1859, 8.507059e+37
          %v1861 = vand.u32 %v1849, 2147483648
          %v1862 = vor.u32 1.1754944e-38, %v1861
          %v1863 = vsel %vm1860, %v1862, %v1858
          %v1864 = vmul.f32 %v1839, %v1863
          %v1865 = vmin.f32 %v1864, 1.0
          %v1866 = vmax.f32 %v1865, -1.0
          %v1867 = vmul.f32 %v1826, %v1826
          %v1868 = vmin.f32 16.0, %v1867
          %v1869 = vmul.f32 %v1868, 2.1237322e-06
          %v1870 = vadd.f32 %v1869, 0.00028619796
          %v1871 = vmul.f32 %v1868, %v1870
          %v1872 = vadd.f32 %v1871, 0.0036580483
          %v1873 = vmul.f32 %v1868, %v1872
          %v1874 = vadd.f32 %v1873, 0.05243302
          %v1875 = vmul.f32 %v1868, %v1874
          %v1876 = vadd.f32 %v1875, 0.18741608
          %v1877 = vmul.f32 %v1868, %v1876
          %v1878 = vadd.f32 %v1877, 1.1283791
          %v1879 = vmul.f32 %v1826, %v1878
          %v1880 = vmul.f32 %v1868, 3.8918573e-05
          %v1881 = vadd.f32 %v1880, 0.001143296
          %v1882 = vmul.f32 %v1868, %v1881
          %v1883 = vadd.f32 %v1882, 0.014752088
          %v1884 = vmul.f32 %v1868, %v1883
          %v1885 = vadd.f32 %v1884, 0.112945676
          %v1886 = vmul.f32 %v1868, %v1885
          %v1887 = vadd.f32 %v1886, 0.4994258
          %v1888 = vmul.f32 %v1868, %v1887
          %v1889 = vadd.f32 %v1888, 1.0
          %v1890 = vrcp.pop %v1889
          %v1891 = vmul.f32 %v1889, %v1890
          %v1892 = vsub.f32 1.0, %v1891
          %v1893 = vmul.f32 %v1890, %v1892
          %v1894 = vadd.f32 %v1890, %v1893
          %vm1895 = vweird.f32 %v1889
          %vm1896 = vweird.f32 %v1890
          %vm1897 = vmor %vm1895, %vm1896
          %v1898 = vsel %vm1897, %v1890, %v1894
          %v1899 = vand.u32 2147483647, %v1889
          %vm1900 = vcmp.eq.f32.partialorder %v1899, 8.507059e+37
          %v1901 = vand.u32 %v1889, 2147483648
          %v1902 = vor.u32 1.1754944e-38, %v1901
          %v1903 = vsel %vm1900, %v1902, %v1898
          %v1904 = vmul.f32 %v1879, %v1903
          %v1905 = vmin.f32 %v1904, 1.0
          %v1906 = vmax.f32 %v1905, -1.0
          %v1907 = vadd.f32 %v1866, 1.0
          %v1908 = vadd.f32 %v1906, 1.0
          %v1909 = vmul.f32 %v1823, %v1907
          %v1910 = vmul.f32 %v1824, %v1908
          %v1911 = vld [vmem:[%s5 + $0x80] sm:$0xff]
          %v1912 = vld [vmem:[%s5 + $0x88] sm:$0xff]
          %v1913 = vld [vmem:[%s5 + $0x90] sm:$0xff]
          %v1914 = vld [vmem:[%s5 + $0x98] sm:$0xff]
          %v1915 = vld [vmem:[%s5 + $0xa0] sm:$0xff]
          %v1916 = vld [vmem:[%s5 + $0xa8] sm:$0xff]
          %v1917 = vld [vmem:[%s5 + $0xb0] sm:$0xff]
          %v1918 = vld [vmem:[%s5 + $0xb8] sm:$0xff]
          %v1919 = vld [vmem:[%s7 + $0x1] sm:$0x1]
          %v1920 = vperm.slane %v1919, 0
          %vm1921 = vcmask 523264
          %v1923 = vsel %vm1921, %v1909, 0
          %v1926 = vsel %vm1921, %v1910, 0
          %1928 = vmatpush.msra.mxu0 0.0
          %1929 = vmatpush.msra.mxu0 0.0
          %1930 = vmatpush.msra.mxu0 0.0
          %1931 = vmatpush.msra.mxu0 0.0
          %1932 = vmatpush.msra.mxu0 0.0
          %1933 = vmatpush.msra.mxu0 0.0
          %1934 = vmatpush.msra.mxu0 0.0
          %1935 = vmatpush.msra.mxu0 0.0
          %1936 = vmatpush.msra.mxu0 %v1918
          %1937 = vmatpush.msra.mxu0 %v1917
          %1938 = vmatpush.msra.mxu0 %v1916
          %1939 = vmatpush.msra.mxu0 %v1915
          %1940 = vmatpush.msra.mxu0 %v1914
          %1941 = vmatpush.msra.mxu0 %v1913
          %1942 = vmatpush.msra.mxu0 %v1912
          %1943 = vmatpush.msra.mxu0 %v1911
          %1944 = vmatmul.f32.gmra.mxu0 %v1923
          %v1945 = vpop.f32.mrf.mxu0
          %v1946 = vadd.f32 %v1920, %v1945
          %1947 = vmatmul.f32.gmra.mxu0 %v1926
          %v1948 = vpop.f32.mrf.mxu0
          %v1949 = vadd.f32 %v1920, %v1948
          %1950 = vdwg.mxu0
          %v1951 = vsel %vm1921, %v1946, 0.0
          %1952 = vadd.xlane.f32.xlu0 %v1951
          %v1953 = vpop.xlane.xlu0 %1952
          %v1954 = vsel %vm1921, %v1949, 0.0
          %1955 = vadd.xlane.f32.xlu0 %v1954
          %v1956 = vpop.xlane.xlu0 %1955
          %v1957 = vrcp.pop 64.0
          %v1958 = vmul.f32 64.0, %v1957
          %v1959 = vsub.f32 1.0, %v1958
          %v1960 = vmul.f32 %v1957, %v1959
          %v1961 = vadd.f32 %v1957, %v1960
          %vm1962 = vweird.f32 %v1957
          %v1963 = vsel %vm1962, %v1957, %v1961
          %v1964 = vmul.f32 %v1953, %v1963
          %v1965 = vmul.f32 %v1956, %v1963
          %v1966 = vsub.f32 %v1946, %v1964
          %v1967 = vsub.f32 %v1949, %v1965
          %v1968 = vmul.f32 %v1966, %v1966
          %v1969 = vmul.f32 %v1967, %v1967
          %v1970 = vsel %vm1921, %v1968, 0.0
          %1971 = vadd.xlane.f32.xlu0 %v1970
          %v1972 = vpop.xlane.xlu0 %1971
          %v1973 = vsel %vm1921, %v1969, 0.0
          %1974 = vadd.xlane.f32.xlu0 %v1973
          %v1975 = vpop.xlane.xlu0 %1974
          %v1976 = vmul.f32 %v1972, %v1963
          %v1977 = vmul.f32 %v1975, %v1963
          %v1978 = vadd.f32 %v1976, 1e-05
          %v1979 = vadd.f32 %v1977, 1e-05
          %v1980 = vrsqrt.pop %v1978
          %v1981 = vmul.f32 %v1980, %v1978
          %v1982 = vmul.f32 %v1981, %v1980
          %v1983 = vmul.f32 0.5, %v1982
          %v1984 = vsub.f32 1.5, %v1983
          %v1985 = vmul.f32 %v1980, %v1984
          %vm1986 = vweird.f32 %v1978
          %vm1987 = vweird.f32 %v1980
          %vm1988 = vmor %vm1986, %vm1987
          %v1989 = vsel %vm1988, %v1980, %v1985
          %v1990 = vrsqrt.pop %v1979
          %v1991 = vmul.f32 %v1990, %v1979
          %v1992 = vmul.f32 %v1991, %v1990
          %v1993 = vmul.f32 0.5, %v1992
          %v1994 = vsub.f32 1.5, %v1993
          %v1995 = vmul.f32 %v1990, %v1994
          %vm1996 = vweird.f32 %v1979
          %vm1997 = vweird.f32 %v1990
          %vm1998 = vmor %vm1996, %vm1997
          %v1999 = vsel %vm1998, %v1990, %v1995
          %v2000 = vmul.f32 %v1966, %v1989
          %v2001 = vmul.f32 %v1967, %v1999
          %v2002 = vld [vmem:[%s7 + $0x2] sm:$0x1]
          %v2003 = vperm.slane %v2002, 0
          %v2004 = vmul.f32 %v2000, %v2003
          %v2005 = vmul.f32 %v2001, %v2003
          %v2006 = vld [vmem:[%s7 + $0x3] sm:$0x1]
          %v2007 = vperm.slane %v2006, 0
          %v2008 = vadd.f32 %v2004, %v2007
          %v2009 = vadd.f32 %v2005, %v2007
          %v2010 = vld [vmem:[%s4 + $0xc0] sm:$0xf]
          %v2011 = vld [vmem:[%s4 + $0xc4] sm:$0xf]
          %v2012 = vld [vmem:[%s4 + $0xc8] sm:$0xf]
          %v2013 = vld [vmem:[%s4 + $0xcc] sm:$0xf]
          %v2014 = vld [vmem:[%s4 + $0xd0] sm:$0xf]
          %v2015 = vld [vmem:[%s4 + $0xd4] sm:$0xf]
          %v2016 = vld [vmem:[%s4 + $0xd8] sm:$0xf]
          %v2017 = vld [vmem:[%s4 + $0xdc] sm:$0xf]
          %v2018 = vunpack.c.l.bf16 %v2010
          %v2019 = vunpack.c.l.bf16 %v2011
          %v2020 = vunpack.c.l.bf16 %v2012
          %v2021 = vunpack.c.l.bf16 %v2013
          %v2022 = vunpack.c.l.bf16 %v2014
          %v2023 = vunpack.c.l.bf16 %v2015
          %v2024 = vunpack.c.l.bf16 %v2016
          %v2025 = vunpack.c.l.bf16 %v2017
          %v2026 = vld [vmem:[%s6 + $0x3] sm:$0x1]
          %v2027 = vperm.slane %v2026, 0
          %v2029 = vsel %vm1921, %v2008, 0
          %v2032 = vsel %vm1921, %v2009, 0
          %2034 = vmatpush.msra.mxu0 0.0
          %2035 = vmatpush.msra.mxu0 0.0
          %2036 = vmatpush.msra.mxu0 0.0
          %2037 = vmatpush.msra.mxu0 0.0
          %2038 = vmatpush.msra.mxu0 0.0
          %2039 = vmatpush.msra.mxu0 0.0
          %2040 = vmatpush.msra.mxu0 0.0
          %2041 = vmatpush.msra.mxu0 0.0
          %2042 = vmatpush.msra.mxu0 %v2025
          %2043 = vmatpush.msra.mxu0 %v2024
          %2044 = vmatpush.msra.mxu0 %v2023
          %2045 = vmatpush.msra.mxu0 %v2022
          %2046 = vmatpush.msra.mxu0 %v2021
          %2047 = vmatpush.msra.mxu0 %v2020
          %2048 = vmatpush.msra.mxu0 %v2019
          %2049 = vmatpush.msra.mxu0 %v2018
          %2050 = vmatmul.f32.gmra.mxu0 %v2029
          %v2051 = vpop.f32.mrf.mxu0
          %v2052 = vadd.f32 %v2027, %v2051
          %2053 = vmatmul.f32.gmra.mxu0 %v2032
          %v2054 = vpop.f32.mrf.mxu0
          %v2055 = vadd.f32 %v2027, %v2054
          %2056 = vdwg.mxu0
          %v2057 = vmul.f32 %v2052, 0.5
          %v2058 = vmul.f32 %v2055, 0.5
          %v2059 = vmul.f32 %v2052, 0.70710677
          %v2060 = vmul.f32 %v2055, 0.70710677
          %v2061 = vmul.f32 %v2059, %v2059
          %v2062 = vmin.f32 16.0, %v2061
          %v2063 = vmul.f32 %v2062, 2.1237322e-06
          %v2064 = vadd.f32 %v2063, 0.00028619796
          %v2065 = vmul.f32 %v2062, %v2064
          %v2066 = vadd.f32 %v2065, 0.0036580483
          %v2067 = vmul.f32 %v2062, %v2066
          %v2068 = vadd.f32 %v2067, 0.05243302
          %v2069 = vmul.f32 %v2062, %v2068
          %v2070 = vadd.f32 %v2069, 0.18741608
          %v2071 = vmul.f32 %v2062, %v2070
          %v2072 = vadd.f32 %v2071, 1.1283791
          %v2073 = vmul.f32 %v2059, %v2072
          %v2074 = vmul.f32 %v2062, 3.8918573e-05
          %v2075 = vadd.f32 %v2074, 0.001143296
          %v2076 = vmul.f32 %v2062, %v2075
          %v2077 = vadd.f32 %v2076, 0.014752088
          %v2078 = vmul.f32 %v2062, %v2077
          %v2079 = vadd.f32 %v2078, 0.112945676
          %v2080 = vmul.f32 %v2062, %v2079
          %v2081 = vadd.f32 %v2080, 0.4994258
          %v2082 = vmul.f32 %v2062, %v2081
          %v2083 = vadd.f32 %v2082, 1.0
          %v2084 = vrcp.pop %v2083
          %v2085 = vmul.f32 %v2083, %v2084
          %v2086 = vsub.f32 1.0, %v2085
          %v2087 = vmul.f32 %v2084, %v2086
          %v2088 = vadd.f32 %v2084, %v2087
          %vm2089 = vweird.f32 %v2083
          %vm2090 = vweird.f32 %v2084
          %vm2091 = vmor %vm2089, %vm2090
          %v2092 = vsel %vm2091, %v2084, %v2088
          %v2093 = vand.u32 2147483647, %v2083
          %vm2094 = vcmp.eq.f32.partialorder %v2093, 8.507059e+37
          %v2095 = vand.u32 %v2083, 2147483648
          %v2096 = vor.u32 1.1754944e-38, %v2095
          %v2097 = vsel %vm2094, %v2096, %v2092
          %v2098 = vmul.f32 %v2073, %v2097
          %v2099 = vmin.f32 %v2098, 1.0
          %v2100 = vmax.f32 %v2099, -1.0
          %v2101 = vmul.f32 %v2060, %v2060
          %v2102 = vmin.f32 16.0, %v2101
          %v2103 = vmul.f32 %v2102, 2.1237322e-06
          %v2104 = vadd.f32 %v2103, 0.00028619796
          %v2105 = vmul.f32 %v2102, %v2104
          %v2106 = vadd.f32 %v2105, 0.0036580483
          %v2107 = vmul.f32 %v2102, %v2106
          %v2108 = vadd.f32 %v2107, 0.05243302
          %v2109 = vmul.f32 %v2102, %v2108
          %v2110 = vadd.f32 %v2109, 0.18741608
          %v2111 = vmul.f32 %v2102, %v2110
          %v2112 = vadd.f32 %v2111, 1.1283791
          %v2113 = vmul.f32 %v2060, %v2112
          %v2114 = vmul.f32 %v2102, 3.8918573e-05
          %v2115 = vadd.f32 %v2114, 0.001143296
          %v2116 = vmul.f32 %v2102, %v2115
          %v2117 = vadd.f32 %v2116, 0.014752088
          %v2118 = vmul.f32 %v2102, %v2117
          %v2119 = vadd.f32 %v2118, 0.112945676
          %v2120 = vmul.f32 %v2102, %v2119
          %v2121 = vadd.f32 %v2120, 0.4994258
          %v2122 = vmul.f32 %v2102, %v2121
          %v2123 = vadd.f32 %v2122, 1.0
          %v2124 = vrcp.pop %v2123
          %v2125 = vmul.f32 %v2123, %v2124
          %v2126 = vsub.f32 1.0, %v2125
          %v2127 = vmul.f32 %v2124, %v2126
          %v2128 = vadd.f32 %v2124, %v2127
          %vm2129 = vweird.f32 %v2123
          %vm2130 = vweird.f32 %v2124
          %vm2131 = vmor %vm2129, %vm2130
          %v2132 = vsel %vm2131, %v2124, %v2128
          %v2133 = vand.u32 2147483647, %v2123
          %vm2134 = vcmp.eq.f32.partialorder %v2133, 8.507059e+37
          %v2135 = vand.u32 %v2123, 2147483648
          %v2136 = vor.u32 1.1754944e-38, %v2135
          %v2137 = vsel %vm2134, %v2136, %v2132
          %v2138 = vmul.f32 %v2113, %v2137
          %v2139 = vmin.f32 %v2138, 1.0
          %v2140 = vmax.f32 %v2139, -1.0
          %v2141 = vadd.f32 %v2100, 1.0
          %v2142 = vadd.f32 %v2140, 1.0
          %v2143 = vmul.f32 %v2057, %v2141
          %v2144 = vmul.f32 %v2058, %v2142
          %v2145 = vld [vmem:[%s4 + $0xe0] sm:$0xf]
          %v2146 = vld [vmem:[%s4 + $0xe4] sm:$0xf]
          %v2147 = vld [vmem:[%s4 + $0xe8] sm:$0xf]
          %v2148 = vld [vmem:[%s4 + $0xec] sm:$0xf]
          %v2149 = vld [vmem:[%s4 + $0xf0] sm:$0xf]
          %v2150 = vld [vmem:[%s4 + $0xf4] sm:$0xf]
          %v2151 = vld [vmem:[%s4 + $0xf8] sm:$0xf]
          %v2152 = vld [vmem:[%s4 + $0xfc] sm:$0xf]
          %v2153 = vld [vmem:[%s4 + $0x100] sm:$0xf]
          %v2154 = vld [vmem:[%s4 + $0x104] sm:$0xf]
          %v2155 = vld [vmem:[%s4 + $0x108] sm:$0xf]
          %v2156 = vld [vmem:[%s4 + $0x10c] sm:$0xf]
          %v2157 = vld [vmem:[%s4 + $0x110] sm:$0xf]
          %v2158 = vld [vmem:[%s4 + $0x114] sm:$0xf]
          %v2159 = vld [vmem:[%s4 + $0x118] sm:$0xf]
          %v2160 = vld [vmem:[%s4 + $0x11c] sm:$0xf]
          %v2161 = vunpack.c.l.bf16 %v2145
          %v2162 = vunpack.c.l.bf16 %v2146
          %v2163 = vunpack.c.l.bf16 %v2147
          %v2164 = vunpack.c.l.bf16 %v2148
          %v2165 = vunpack.c.l.bf16 %v2149
          %v2166 = vunpack.c.l.bf16 %v2150
          %v2167 = vunpack.c.l.bf16 %v2151
          %v2168 = vunpack.c.l.bf16 %v2152
          %v2169 = vunpack.c.l.bf16 %v2153
          %v2170 = vunpack.c.l.bf16 %v2154
          %v2171 = vunpack.c.l.bf16 %v2155
          %v2172 = vunpack.c.l.bf16 %v2156
          %v2173 = vunpack.c.l.bf16 %v2157
          %v2174 = vunpack.c.l.bf16 %v2158
          %v2175 = vunpack.c.l.bf16 %v2159
          %v2176 = vunpack.c.l.bf16 %v2160
          %v2177 = vld [vmem:[%s6 + $0x4] sm:$0x1]
          %v2178 = vperm.slane %v2177, 0
          %2179 = vmatpush.msra.mxu0 %v2176
          %2180 = vmatpush.msra.mxu0 %v2175
          %2181 = vmatpush.msra.mxu0 %v2174
          %2182 = vmatpush.msra.mxu0 %v2173
          %2183 = vmatpush.msra.mxu0 %v2172
          %2184 = vmatpush.msra.mxu0 %v2171
          %2185 = vmatpush.msra.mxu0 %v2170
          %2186 = vmatpush.msra.mxu0 %v2169
          %2187 = vmatpush.msra.mxu0 %v2168
          %2188 = vmatpush.msra.mxu0 %v2167
          %2189 = vmatpush.msra.mxu0 %v2166
          %2190 = vmatpush.msra.mxu0 %v2165
          %2191 = vmatpush.msra.mxu0 %v2164
          %2192 = vmatpush.msra.mxu0 %v2163
          %2193 = vmatpush.msra.mxu0 %v2162
          %2194 = vmatpush.msra.mxu0 %v2161
          %2195 = vmatmul.f32.gmra.mxu0 %v2143
          %v2196 = vpop.f32.mrf.mxu0
          %v2197 = vadd.f32 %v2178, %v2196
          %2198 = vmatmul.f32.gmra.mxu0 %v2144
          %v2199 = vpop.f32.mrf.mxu0
          %v2200 = vadd.f32 %v2178, %v2199
          %2201 = vdwg.mxu0
          %v2202 = vld [vmem:[%s4 + $0x120] sm:$0xf]
          %v2203 = vld [vmem:[%s4 + $0x124] sm:$0xf]
          %v2204 = vld [vmem:[%s4 + $0x128] sm:$0xf]
          %v2205 = vld [vmem:[%s4 + $0x12c] sm:$0xf]
          %v2206 = vld [vmem:[%s4 + $0x130] sm:$0xf]
          %v2207 = vld [vmem:[%s4 + $0x134] sm:$0xf]
          %v2208 = vld [vmem:[%s4 + $0x138] sm:$0xf]
          %v2209 = vld [vmem:[%s4 + $0x13c] sm:$0xf]
          %v2210 = vld [vmem:[%s4 + $0x140] sm:$0xf]
          %v2211 = vld [vmem:[%s4 + $0x144] sm:$0xf]
          %v2212 = vld [vmem:[%s4 + $0x148] sm:$0xf]
          %v2213 = vld [vmem:[%s4 + $0x14c] sm:$0xf]
          %v2214 = vld [vmem:[%s4 + $0x150] sm:$0xf]
          %v2215 = vld [vmem:[%s4 + $0x154] sm:$0xf]
          %v2216 = vld [vmem:[%s4 + $0x158] sm:$0xf]
          %v2217 = vld [vmem:[%s4 + $0x15c] sm:$0xf]
          %v2218 = vunpack.c.l.bf16 %v2202
          %v2219 = vunpack.c.l.bf16 %v2203
          %v2220 = vunpack.c.l.bf16 %v2204
          %v2221 = vunpack.c.l.bf16 %v2205
          %v2222 = vunpack.c.l.bf16 %v2206
          %v2223 = vunpack.c.l.bf16 %v2207
          %v2224 = vunpack.c.l.bf16 %v2208
          %v2225 = vunpack.c.l.bf16 %v2209
          %v2226 = vunpack.c.l.bf16 %v2210
          %v2227 = vunpack.c.l.bf16 %v2211
          %v2228 = vunpack.c.l.bf16 %v2212
          %v2229 = vunpack.c.l.bf16 %v2213
          %v2230 = vunpack.c.l.bf16 %v2214
          %v2231 = vunpack.c.l.bf16 %v2215
          %v2232 = vunpack.c.l.bf16 %v2216
          %v2233 = vunpack.c.l.bf16 %v2217
          %v2234 = vld [vmem:[%s6 + $0x5] sm:$0x1]
          %v2235 = vperm.slane %v2234, 0
          %2236 = vmatpush.msra.mxu0 %v2233
          %2237 = vmatpush.msra.mxu0 %v2232
          %2238 = vmatpush.msra.mxu0 %v2231
          %2239 = vmatpush.msra.mxu0 %v2230
          %2240 = vmatpush.msra.mxu0 %v2229
          %2241 = vmatpush.msra.mxu0 %v2228
          %2242 = vmatpush.msra.mxu0 %v2227
          %2243 = vmatpush.msra.mxu0 %v2226
          %2244 = vmatpush.msra.mxu0 %v2225
          %2245 = vmatpush.msra.mxu0 %v2224
          %2246 = vmatpush.msra.mxu0 %v2223
          %2247 = vmatpush.msra.mxu0 %v2222
          %2248 = vmatpush.msra.mxu0 %v2221
          %2249 = vmatpush.msra.mxu0 %v2220
          %2250 = vmatpush.msra.mxu0 %v2219
          %2251 = vmatpush.msra.mxu0 %v2218
          %2252 = vmatmul.f32.gmra.mxu0 %v2197
          %v2253 = vpop.f32.mrf.mxu0
          %v2254 = vadd.f32 %v2235, %v2253
          %2255 = vmatmul.f32.gmra.mxu0 %v2200
          %v2256 = vpop.f32.mrf.mxu0
          %v2257 = vadd.f32 %v2235, %v2256
          %2258 = vdwg.mxu0
          %2259 = vst [vmem:[%s503] sm:$0xff] %v2254
          %2260 = vst [vmem:[%s503 + $0x8] sm:$0xff] %v2257
          %v2261 = vld [vmem:[%s9] sm:$0x1]
          %v2262 = vld [vmem:[%s9 + $0x1] sm:$0x1]
          %v2263 = vld [vmem:[%s9 + $0x2] sm:$0x3]
          %v2264 = vld [vmem:[%s8] sm:$0x6]
          %v2265 = vld [vmem:[%s8 + $0x8] sm:$0x6]
          %v2266 = vld [vmem:[%s4 + $0x160] sm:$0xf]
          %v2267 = vld [vmem:[%s4 + $0x164] sm:$0xf]
          %v2268 = vld [vmem:[%s4 + $0x168] sm:$0xf]
          %v2269 = vld [vmem:[%s4 + $0x16c] sm:$0xf]
          %v2270 = vld [vmem:[%s4 + $0x170] sm:$0xf]
          %v2271 = vld [vmem:[%s4 + $0x174] sm:$0xf]
          %v2272 = vld [vmem:[%s4 + $0x178] sm:$0xf]
          %v2273 = vld [vmem:[%s4 + $0x17c] sm:$0xf]
          %v2274 = vld [vmem:[%s4 + $0x180] sm:$0xf]
          %v2275 = vld [vmem:[%s4 + $0x184] sm:$0xf]
          %v2276 = vld [vmem:[%s4 + $0x188] sm:$0xf]
          %v2277 = vld [vmem:[%s4 + $0x18c] sm:$0xf]
          %v2278 = vld [vmem:[%s4 + $0x190] sm:$0xf]
          %v2279 = vld [vmem:[%s4 + $0x194] sm:$0xf]
          %v2280 = vld [vmem:[%s4 + $0x198] sm:$0xf]
          %v2281 = vld [vmem:[%s4 + $0x19c] sm:$0xf]
          %v2282 = vunpack.c.l.bf16 %v2266
          %v2283 = vunpack.c.l.bf16 %v2267
          %v2284 = vunpack.c.l.bf16 %v2268
          %v2285 = vunpack.c.l.bf16 %v2269
          %v2286 = vunpack.c.l.bf16 %v2270
          %v2287 = vunpack.c.l.bf16 %v2271
          %v2288 = vunpack.c.l.bf16 %v2272
          %v2289 = vunpack.c.l.bf16 %v2273
          %v2290 = vunpack.c.l.bf16 %v2274
          %v2291 = vunpack.c.l.bf16 %v2275
          %v2292 = vunpack.c.l.bf16 %v2276
          %v2293 = vunpack.c.l.bf16 %v2277
          %v2294 = vunpack.c.l.bf16 %v2278
          %v2295 = vunpack.c.l.bf16 %v2279
          %v2296 = vunpack.c.l.bf16 %v2280
          %v2297 = vunpack.c.l.bf16 %v2281
          %v2298 = vld [vmem:[%s6 + $0x6] sm:$0x1]
          %2299 = vmatpush.msra.mxu0 %v2297
          %2300 = vmatpush.msra.mxu0 %v2296
          %2301 = vmatpush.msra.mxu0 %v2295
          %2302 = vmatpush.msra.mxu0 %v2294
          %2303 = vmatpush.msra.mxu0 %v2293
          %2304 = vmatpush.msra.mxu0 %v2292
          %2305 = vmatpush.msra.mxu0 %v2291
          %2306 = vmatpush.msra.mxu0 %v2290
          %2307 = vmatpush.msra.mxu0 %v2289
          %2308 = vmatpush.msra.mxu0 %v2288
          %2309 = vmatpush.msra.mxu0 %v2287
          %2310 = vmatpush.msra.mxu0 %v2286
          %2311 = vmatpush.msra.mxu0 %v2285
          %2312 = vmatpush.msra.mxu0 %v2284
          %2313 = vmatpush.msra.mxu0 %v2283
          %2314 = vmatpush.msra.mxu0 %v2282
          %2315 = vmatmul.f32.gmra.mxu0 %v2261
          %v2316 = vpop.f32.mrf.mxu0
          %v2317 = vadd.f32 %v2298, %v2316
          %2318 = vdwg.mxu0
          %v2319 = vld [vmem:[%s4 + $0x1a0] sm:$0xf]
          %v2320 = vld [vmem:[%s4 + $0x1a4] sm:$0xf]
          %v2321 = vld [vmem:[%s4 + $0x1a8] sm:$0xf]
          %v2322 = vld [vmem:[%s4 + $0x1ac] sm:$0xf]
          %v2323 = vld [vmem:[%s4 + $0x1b0] sm:$0xf]
          %v2324 = vld [vmem:[%s4 + $0x1b4] sm:$0xf]
          %v2325 = vld [vmem:[%s4 + $0x1b8] sm:$0xf]
          %v2326 = vld [vmem:[%s4 + $0x1bc] sm:$0xf]
          %v2327 = vld [vmem:[%s4 + $0x1c0] sm:$0xf]
          %v2328 = vld [vmem:[%s4 + $0x1c4] sm:$0xf]
          %v2329 = vld [vmem:[%s4 + $0x1c8] sm:$0xf]
          %v2330 = vld [vmem:[%s4 + $0x1cc] sm:$0xf]
          %v2331 = vld [vmem:[%s4 + $0x1d0] sm:$0xf]
          %v2332 = vld [vmem:[%s4 + $0x1d4] sm:$0xf]
          %v2333 = vld [vmem:[%s4 + $0x1d8] sm:$0xf]
          %v2334 = vld [vmem:[%s4 + $0x1dc] sm:$0xf]
          %v2335 = vunpack.c.l.bf16 %v2319
          %v2336 = vunpack.c.l.bf16 %v2320
          %v2337 = vunpack.c.l.bf16 %v2321
          %v2338 = vunpack.c.l.bf16 %v2322
          %v2339 = vunpack.c.l.bf16 %v2323
          %v2340 = vunpack.c.l.bf16 %v2324
          %v2341 = vunpack.c.l.bf16 %v2325
          %v2342 = vunpack.c.l.bf16 %v2326
          %v2343 = vunpack.c.l.bf16 %v2327
          %v2344 = vunpack.c.l.bf16 %v2328
          %v2345 = vunpack.c.l.bf16 %v2329
          %v2346 = vunpack.c.l.bf16 %v2330
          %v2347 = vunpack.c.l.bf16 %v2331
          %v2348 = vunpack.c.l.bf16 %v2332
          %v2349 = vunpack.c.l.bf16 %v2333
          %v2350 = vunpack.c.l.bf16 %v2334
          %v2351 = vld [vmem:[%s6 + $0x7] sm:$0x1]
          %2352 = vmatpush.msra.mxu0 %v2350
          %2353 = vmatpush.msra.mxu0 %v2349
          %2354 = vmatpush.msra.mxu0 %v2348
          %2355 = vmatpush.msra.mxu0 %v2347
          %2356 = vmatpush.msra.mxu0 %v2346
          %2357 = vmatpush.msra.mxu0 %v2345
          %2358 = vmatpush.msra.mxu0 %v2344
          %2359 = vmatpush.msra.mxu0 %v2343
          %2360 = vmatpush.msra.mxu0 %v2342
          %2361 = vmatpush.msra.mxu0 %v2341
          %2362 = vmatpush.msra.mxu0 %v2340
          %2363 = vmatpush.msra.mxu0 %v2339
          %2364 = vmatpush.msra.mxu0 %v2338
          %2365 = vmatpush.msra.mxu0 %v2337
          %2366 = vmatpush.msra.mxu0 %v2336
          %2367 = vmatpush.msra.mxu0 %v2335
          %2368 = vmatmul.f32.gmra.mxu0 %v2262
          %v2369 = vpop.f32.mrf.mxu0
          %v2370 = vadd.f32 %v2351, %v2369
          %2371 = vdwg.mxu0
          %vm2372 = vcmask 1041408
          %v2373 = vsel %vm2372, %v2263, 0.0
          %v2374 = vrot.slane %v2373, 4
          %v2375 = vadd.f32 %v2373, %v2374
          %v2376 = vrot.slane %v2375, 2
          %v2377 = vadd.f32 %v2375, %v2376
          %v2378 = vrot.slane %v2377, 1
          %v2379 = vadd.f32 %v2377, %v2378
          %v2380 = vrcp.pop 2.0
          %v2381 = vmul.f32 2.0, %v2380
          %v2382 = vsub.f32 1.0, %v2381
          %v2383 = vmul.f32 %v2380, %v2382
          %v2384 = vadd.f32 %v2380, %v2383
          %vm2385 = vweird.f32 %v2380
          %v2386 = vsel %vm2385, %v2380, %v2384
          %v2387 = vmul.f32 %v2379, %v2386
          %v2388 = vld [vmem:[%s4 + $0x1e0] sm:$0xf]
          %v2389 = vld [vmem:[%s4 + $0x1e4] sm:$0xf]
          %v2390 = vld [vmem:[%s4 + $0x1e8] sm:$0xf]
          %v2391 = vld [vmem:[%s4 + $0x1ec] sm:$0xf]
          %v2392 = vld [vmem:[%s4 + $0x1f0] sm:$0xf]
          %v2393 = vld [vmem:[%s4 + $0x1f4] sm:$0xf]
          %v2394 = vld [vmem:[%s4 + $0x1f8] sm:$0xf]
          %v2395 = vld [vmem:[%s4 + $0x1fc] sm:$0xf]
          %v2396 = vld [vmem:[%s4 + $0x200] sm:$0xf]
          %v2397 = vld [vmem:[%s4 + $0x204] sm:$0xf]
          %v2398 = vld [vmem:[%s4 + $0x208] sm:$0xf]
          %v2399 = vld [vmem:[%s4 + $0x20c] sm:$0xf]
          %v2400 = vld [vmem:[%s4 + $0x210] sm:$0xf]
          %v2401 = vld [vmem:[%s4 + $0x214] sm:$0xf]
          %v2402 = vld [vmem:[%s4 + $0x218] sm:$0xf]
          %v2403 = vld [vmem:[%s4 + $0x21c] sm:$0xf]
          %v2404 = vld [vmem:[%s4 + $0x220] sm:$0xf]
          %v2405 = vld [vmem:[%s4 + $0x224] sm:$0xf]
          %v2406 = vld [vmem:[%s4 + $0x228] sm:$0xf]
          %v2407 = vld [vmem:[%s4 + $0x22c] sm:$0xf]
          %v2408 = vld [vmem:[%s4 + $0x230] sm:$0xf]
          %v2409 = vld [vmem:[%s4 + $0x234] sm:$0xf]
          %v2410 = vld [vmem:[%s4 + $0x238] sm:$0xf]
          %v2411 = vld [vmem:[%s4 + $0x23c] sm:$0xf]
          %v2412 = vld [vmem:[%s4 + $0x240] sm:$0xf]
          %v2413 = vld [vmem:[%s4 + $0x244] sm:$0xf]
          %v2414 = vld [vmem:[%s4 + $0x248] sm:$0xf]
          %v2415 = vld [vmem:[%s4 + $0x24c] sm:$0xf]
          %v2416 = vld [vmem:[%s4 + $0x250] sm:$0xf]
          %v2417 = vld [vmem:[%s4 + $0x254] sm:$0xf]
          %v2418 = vld [vmem:[%s4 + $0x258] sm:$0xf]
          %v2419 = vld [vmem:[%s4 + $0x25c] sm:$0xf]
          %v2420 = vunpack.c.l.bf16 %v2388
          %v2421 = vunpack.c.l.bf16 %v2389
          %v2422 = vunpack.c.l.bf16 %v2390
          %v2423 = vunpack.c.l.bf16 %v2391
          %v2424 = vunpack.c.l.bf16 %v2392
          %v2425 = vunpack.c.l.bf16 %v2393
          %v2426 = vunpack.c.l.bf16 %v2394
          %v2427 = vunpack.c.l.bf16 %v2395
          %v2428 = vunpack.c.l.bf16 %v2396
          %v2429 = vunpack.c.l.bf16 %v2397
          %v2430 = vunpack.c.l.bf16 %v2398
          %v2431 = vunpack.c.l.bf16 %v2399
          %v2432 = vunpack.c.l.bf16 %v2400
          %v2433 = vunpack.c.l.bf16 %v2401
          %v2434 = vunpack.c.l.bf16 %v2402
          %v2435 = vunpack.c.l.bf16 %v2403
          %v2436 = vunpack.c.l.bf16 %v2404
          %v2437 = vunpack.c.l.bf16 %v2405
          %v2438 = vunpack.c.l.bf16 %v2406
          %v2439 = vunpack.c.l.bf16 %v2407
          %v2440 = vunpack.c.l.bf16 %v2408
          %v2441 = vunpack.c.l.bf16 %v2409
          %v2442 = vunpack.c.l.bf16 %v2410
          %v2443 = vunpack.c.l.bf16 %v2411
          %v2444 = vunpack.c.l.bf16 %v2412
          %v2445 = vunpack.c.l.bf16 %v2413
          %v2446 = vunpack.c.l.bf16 %v2414
          %v2447 = vunpack.c.l.bf16 %v2415
          %v2448 = vunpack.c.l.bf16 %v2416
          %v2449 = vunpack.c.l.bf16 %v2417
          %v2450 = vunpack.c.l.bf16 %v2418
          %v2451 = vunpack.c.l.bf16 %v2419
          %v2452 = vld [vmem:[%s6 + $0x8] sm:$0x1]
          %v2453 = vperm.slane %v2452, 0
          %v2456 = vrot.slane %v2264, 1
          %v2457 = vrot.slane %v2265, 1
          %2460 = vmatpush.msra.mxu0 %v2435
          %2461 = vmatpush.msra.mxu0 %v2434
          %2462 = vmatpush.msra.mxu0 %v2433
          %2463 = vmatpush.msra.mxu0 %v2432
          %2464 = vmatpush.msra.mxu0 %v2431
          %2465 = vmatpush.msra.mxu0 %v2430
          %2466 = vmatpush.msra.mxu0 %v2429
          %2467 = vmatpush.msra.mxu0 %v2428
          %2468 = vmatpush.msra.mxu0 %v2427
          %2469 = vmatpush.msra.mxu0 %v2426
          %2470 = vmatpush.msra.mxu0 %v2425
          %2471 = vmatpush.msra.mxu0 %v2424
          %2472 = vmatpush.msra.mxu0 %v2423
          %2473 = vmatpush.msra.mxu0 %v2422
          %2474 = vmatpush.msra.mxu0 %v2421
          %2475 = vmatpush.msra.mxu0 %v2420
          %2476 = vmatmul.f32.gmra.mxu0 %v2456
          %v2477 = vpop.f32.mrf.mxu0
          %v2478 = vadd.f32 %v2453, %v2477
          %2479 = vdwg.mxu0
          %2480 = vmatpush.msra.mxu0 %v2451
          %2481 = vmatpush.msra.mxu0 %v2450
          %2482 = vmatpush.msra.mxu0 %v2449
          %2483 = vmatpush.msra.mxu0 %v2448
          %2484 = vmatpush.msra.mxu0 %v2447
          %2485 = vmatpush.msra.mxu0 %v2446
          %2486 = vmatpush.msra.mxu0 %v2445
          %2487 = vmatpush.msra.mxu0 %v2444
          %2488 = vmatpush.msra.mxu0 %v2443
          %2489 = vmatpush.msra.mxu0 %v2442
          %2490 = vmatpush.msra.mxu0 %v2441
          %2491 = vmatpush.msra.mxu0 %v2440
          %2492 = vmatpush.msra.mxu0 %v2439
          %2493 = vmatpush.msra.mxu0 %v2438
          %2494 = vmatpush.msra.mxu0 %v2437
          %2495 = vmatpush.msra.mxu0 %v2436
          %2496 = vmatmul.f32.gmra.mxu0 %v2457
          %v2497 = vpop.f32.mrf.mxu0
          %v2498 = vadd.f32 %v2478, %v2497
          %2499 = vdwg.mxu0
          %v2500 = vsel %vm2372, %v2498, 0.0
          %v2501 = vrot.slane %v2500, 4
          %v2502 = vadd.f32 %v2500, %v2501
          %v2503 = vrot.slane %v2502, 2
          %v2504 = vadd.f32 %v2502, %v2503
          %v2505 = vrot.slane %v2504, 1
          %v2506 = vadd.f32 %v2504, %v2505
          %v2507 = vmul.f32 %v2506, %v2386
          %v2508 = vld [vmem:[%s6 + $0x9] sm:$0x1]
          %v2509 = vld [vmem:[%s4 + $0x260] sm:$0xf]
          %v2510 = vld [vmem:[%s4 + $0x264] sm:$0xf]
          %v2511 = vld [vmem:[%s4 + $0x268] sm:$0xf]
          %v2512 = vld [vmem:[%s4 + $0x26c] sm:$0xf]
          %v2513 = vld [vmem:[%s4 + $0x270] sm:$0xf]
          %v2514 = vld [vmem:[%s4 + $0x274] sm:$0xf]
          %v2515 = vld [vmem:[%s4 + $0x278] sm:$0xf]
          %v2516 = vld [vmem:[%s4 + $0x27c] sm:$0xf]
          %v2517 = vld [vmem:[%s4 + $0x280] sm:$0xf]
          %v2518 = vld [vmem:[%s4 + $0x284] sm:$0xf]
          %v2519 = vld [vmem:[%s4 + $0x288] sm:$0xf]
          %v2520 = vld [vmem:[%s4 + $0x28c] sm:$0xf]
          %v2521 = vld [vmem:[%s4 + $0x290] sm:$0xf]
          %v2522 = vld [vmem:[%s4 + $0x294] sm:$0xf]
          %v2523 = vld [vmem:[%s4 + $0x298] sm:$0xf]
          %v2524 = vld [vmem:[%s4 + $0x29c] sm:$0xf]
          %v2525 = vunpack.c.l.bf16 %v2509
          %v2526 = vunpack.c.l.bf16 %v2510
          %v2527 = vunpack.c.l.bf16 %v2511
          %v2528 = vunpack.c.l.bf16 %v2512
          %v2529 = vunpack.c.l.bf16 %v2513
          %v2530 = vunpack.c.l.bf16 %v2514
          %v2531 = vunpack.c.l.bf16 %v2515
          %v2532 = vunpack.c.l.bf16 %v2516
          %v2533 = vunpack.c.l.bf16 %v2517
          %v2534 = vunpack.c.l.bf16 %v2518
          %v2535 = vunpack.c.l.bf16 %v2519
          %v2536 = vunpack.c.l.bf16 %v2520
          %v2537 = vunpack.c.l.bf16 %v2521
          %v2538 = vunpack.c.l.bf16 %v2522
          %v2539 = vunpack.c.l.bf16 %v2523
          %v2540 = vunpack.c.l.bf16 %v2524
          %2541 = vmatpush.msra.mxu0 %v2540
          %2542 = vmatpush.msra.mxu0 %v2539
          %2543 = vmatpush.msra.mxu0 %v2538
          %2544 = vmatpush.msra.mxu0 %v2537
          %2545 = vmatpush.msra.mxu0 %v2536
          %2546 = vmatpush.msra.mxu0 %v2535
          %2547 = vmatpush.msra.mxu0 %v2534
          %2548 = vmatpush.msra.mxu0 %v2533
          %2549 = vmatpush.msra.mxu0 %v2532
          %2550 = vmatpush.msra.mxu0 %v2531
          %2551 = vmatpush.msra.mxu0 %v2530
          %2552 = vmatpush.msra.mxu0 %v2529
          %2553 = vmatpush.msra.mxu0 %v2528
          %2554 = vmatpush.msra.mxu0 %v2527
          %2555 = vmatpush.msra.mxu0 %v2526
          %2556 = vmatpush.msra.mxu0 %v2525
          %2557 = vmatmul.f32.gmra.mxu0 %v2317
          %v2558 = vpop.f32.mrf.mxu0
          %v2559 = vadd.f32 0.0, %v2558
          %2560 = vdwg.mxu0
          %v2561 = vadd.f32 %v2508, %v2559
          %v2562 = vld [vmem:[%s4 + $0x2a0] sm:$0xf]
          %v2563 = vld [vmem:[%s4 + $0x2a4] sm:$0xf]
          %v2564 = vld [vmem:[%s4 + $0x2a8] sm:$0xf]
          %v2565 = vld [vmem:[%s4 + $0x2ac] sm:$0xf]
          %v2566 = vld [vmem:[%s4 + $0x2b0] sm:$0xf]
          %v2567 = vld [vmem:[%s4 + $0x2b4] sm:$0xf]
          %v2568 = vld [vmem:[%s4 + $0x2b8] sm:$0xf]
          %v2569 = vld [vmem:[%s4 + $0x2bc] sm:$0xf]
          %v2570 = vld [vmem:[%s4 + $0x2c0] sm:$0xf]
          %v2571 = vld [vmem:[%s4 + $0x2c4] sm:$0xf]
          %v2572 = vld [vmem:[%s4 + $0x2c8] sm:$0xf]
          %v2573 = vld [vmem:[%s4 + $0x2cc] sm:$0xf]
          %v2574 = vld [vmem:[%s4 + $0x2d0] sm:$0xf]
          %v2575 = vld [vmem:[%s4 + $0x2d4] sm:$0xf]
          %v2576 = vld [vmem:[%s4 + $0x2d8] sm:$0xf]
          %v2577 = vld [vmem:[%s4 + $0x2dc] sm:$0xf]
          %v2578 = vunpack.c.l.bf16 %v2562
          %v2579 = vunpack.c.l.bf16 %v2563
          %v2580 = vunpack.c.l.bf16 %v2564
          %v2581 = vunpack.c.l.bf16 %v2565
          %v2582 = vunpack.c.l.bf16 %v2566
          %v2583 = vunpack.c.l.bf16 %v2567
          %v2584 = vunpack.c.l.bf16 %v2568
          %v2585 = vunpack.c.l.bf16 %v2569
          %v2586 = vunpack.c.l.bf16 %v2570
          %v2587 = vunpack.c.l.bf16 %v2571
          %v2588 = vunpack.c.l.bf16 %v2572
          %v2589 = vunpack.c.l.bf16 %v2573
          %v2590 = vunpack.c.l.bf16 %v2574
          %v2591 = vunpack.c.l.bf16 %v2575
          %v2592 = vunpack.c.l.bf16 %v2576
          %v2593 = vunpack.c.l.bf16 %v2577
          %2594 = vmatpush.msra.mxu0 %v2593
          %2595 = vmatpush.msra.mxu0 %v2592
          %2596 = vmatpush.msra.mxu0 %v2591
          %2597 = vmatpush.msra.mxu0 %v2590
          %2598 = vmatpush.msra.mxu0 %v2589
          %2599 = vmatpush.msra.mxu0 %v2588
          %2600 = vmatpush.msra.mxu0 %v2587
          %2601 = vmatpush.msra.mxu0 %v2586
          %2602 = vmatpush.msra.mxu0 %v2585
          %2603 = vmatpush.msra.mxu0 %v2584
          %2604 = vmatpush.msra.mxu0 %v2583
          %2605 = vmatpush.msra.mxu0 %v2582
          %2606 = vmatpush.msra.mxu0 %v2581
          %2607 = vmatpush.msra.mxu0 %v2580
          %2608 = vmatpush.msra.mxu0 %v2579
          %2609 = vmatpush.msra.mxu0 %v2578
          %2610 = vmatmul.f32.gmra.mxu0 %v2370
          %v2611 = vpop.f32.mrf.mxu0
          %v2612 = vadd.f32 0.0, %v2611
          %2613 = vdwg.mxu0
          %v2614 = vadd.f32 %v2561, %v2612
          %v2615 = vld [vmem:[%s4 + $0x2e0] sm:$0xf]
          %v2616 = vld [vmem:[%s4 + $0x2e4] sm:$0xf]
          %v2617 = vld [vmem:[%s4 + $0x2e8] sm:$0xf]
          %v2618 = vld [vmem:[%s4 + $0x2ec] sm:$0xf]
          %v2619 = vld [vmem:[%s4 + $0x2f0] sm:$0xf]
          %v2620 = vld [vmem:[%s4 + $0x2f4] sm:$0xf]
          %v2621 = vld [vmem:[%s4 + $0x2f8] sm:$0xf]
          %v2622 = vld [vmem:[%s4 + $0x2fc] sm:$0xf]
          %v2623 = vld [vmem:[%s4 + $0x300] sm:$0xf]
          %v2624 = vld [vmem:[%s4 + $0x304] sm:$0xf]
          %v2625 = vld [vmem:[%s4 + $0x308] sm:$0xf]
          %v2626 = vld [vmem:[%s4 + $0x30c] sm:$0xf]
          %v2627 = vld [vmem:[%s4 + $0x310] sm:$0xf]
          %v2628 = vld [vmem:[%s4 + $0x314] sm:$0xf]
          %v2629 = vld [vmem:[%s4 + $0x318] sm:$0xf]
          %v2630 = vld [vmem:[%s4 + $0x31c] sm:$0xf]
          %v2631 = vunpack.c.l.bf16 %v2615
          %v2632 = vunpack.c.l.bf16 %v2616
          %v2633 = vunpack.c.l.bf16 %v2617
          %v2634 = vunpack.c.l.bf16 %v2618
          %v2635 = vunpack.c.l.bf16 %v2619
          %v2636 = vunpack.c.l.bf16 %v2620
          %v2637 = vunpack.c.l.bf16 %v2621
          %v2638 = vunpack.c.l.bf16 %v2622
          %v2639 = vunpack.c.l.bf16 %v2623
          %v2640 = vunpack.c.l.bf16 %v2624
          %v2641 = vunpack.c.l.bf16 %v2625
          %v2642 = vunpack.c.l.bf16 %v2626
          %v2643 = vunpack.c.l.bf16 %v2627
          %v2644 = vunpack.c.l.bf16 %v2628
          %v2645 = vunpack.c.l.bf16 %v2629
          %v2646 = vunpack.c.l.bf16 %v2630
          %2647 = vmatpush.msra.mxu0 %v2646
          %2648 = vmatpush.msra.mxu0 %v2645
          %2649 = vmatpush.msra.mxu0 %v2644
          %2650 = vmatpush.msra.mxu0 %v2643
          %2651 = vmatpush.msra.mxu0 %v2642
          %2652 = vmatpush.msra.mxu0 %v2641
          %2653 = vmatpush.msra.mxu0 %v2640
          %2654 = vmatpush.msra.mxu0 %v2639
          %2655 = vmatpush.msra.mxu0 %v2638
          %2656 = vmatpush.msra.mxu0 %v2637
          %2657 = vmatpush.msra.mxu0 %v2636
          %2658 = vmatpush.msra.mxu0 %v2635
          %2659 = vmatpush.msra.mxu0 %v2634
          %2660 = vmatpush.msra.mxu0 %v2633
          %2661 = vmatpush.msra.mxu0 %v2632
          %2662 = vmatpush.msra.mxu0 %v2631
          %2663 = vmatmul.f32.gmra.mxu0 %v2387
          %v2664 = vpop.f32.mrf.mxu0
          %v2665 = vadd.f32 0.0, %v2664
          %2666 = vdwg.mxu0
          %v2667 = vadd.f32 %v2614, %v2665
          %v2668 = vld [vmem:[%s4 + $0x320] sm:$0xf]
          %v2669 = vld [vmem:[%s4 + $0x324] sm:$0xf]
          %v2670 = vld [vmem:[%s4 + $0x328] sm:$0xf]
          %v2671 = vld [vmem:[%s4 + $0x32c] sm:$0xf]
          %v2672 = vld [vmem:[%s4 + $0x330] sm:$0xf]
          %v2673 = vld [vmem:[%s4 + $0x334] sm:$0xf]
          %v2674 = vld [vmem:[%s4 + $0x338] sm:$0xf]
          %v2675 = vld [vmem:[%s4 + $0x33c] sm:$0xf]
          %v2676 = vld [vmem:[%s4 + $0x340] sm:$0xf]
          %v2677 = vld [vmem:[%s4 + $0x344] sm:$0xf]
          %v2678 = vld [vmem:[%s4 + $0x348] sm:$0xf]
          %v2679 = vld [vmem:[%s4 + $0x34c] sm:$0xf]
          %v2680 = vld [vmem:[%s4 + $0x350] sm:$0xf]
          %v2681 = vld [vmem:[%s4 + $0x354] sm:$0xf]
          %v2682 = vld [vmem:[%s4 + $0x358] sm:$0xf]
          %v2683 = vld [vmem:[%s4 + $0x35c] sm:$0xf]
          %v2684 = vunpack.c.l.bf16 %v2668
          %v2685 = vunpack.c.l.bf16 %v2669
          %v2686 = vunpack.c.l.bf16 %v2670
          %v2687 = vunpack.c.l.bf16 %v2671
          %v2688 = vunpack.c.l.bf16 %v2672
          %v2689 = vunpack.c.l.bf16 %v2673
          %v2690 = vunpack.c.l.bf16 %v2674
          %v2691 = vunpack.c.l.bf16 %v2675
          %v2692 = vunpack.c.l.bf16 %v2676
          %v2693 = vunpack.c.l.bf16 %v2677
          %v2694 = vunpack.c.l.bf16 %v2678
          %v2695 = vunpack.c.l.bf16 %v2679
          %v2696 = vunpack.c.l.bf16 %v2680
          %v2697 = vunpack.c.l.bf16 %v2681
          %v2698 = vunpack.c.l.bf16 %v2682
          %v2699 = vunpack.c.l.bf16 %v2683
          %2700 = vmatpush.msra.mxu0 %v2699
          %2701 = vmatpush.msra.mxu0 %v2698
          %2702 = vmatpush.msra.mxu0 %v2697
          %2703 = vmatpush.msra.mxu0 %v2696
          %2704 = vmatpush.msra.mxu0 %v2695
          %2705 = vmatpush.msra.mxu0 %v2694
          %2706 = vmatpush.msra.mxu0 %v2693
          %2707 = vmatpush.msra.mxu0 %v2692
          %2708 = vmatpush.msra.mxu0 %v2691
          %2709 = vmatpush.msra.mxu0 %v2690
          %2710 = vmatpush.msra.mxu0 %v2689
          %2711 = vmatpush.msra.mxu0 %v2688
          %2712 = vmatpush.msra.mxu0 %v2687
          %2713 = vmatpush.msra.mxu0 %v2686
          %2714 = vmatpush.msra.mxu0 %v2685
          %2715 = vmatpush.msra.mxu0 %v2684
          %2716 = vmatmul.f32.gmra.mxu0 %v2507
          %v2717 = vpop.f32.mrf.mxu0
          %v2718 = vadd.f32 0.0, %v2717
          %2719 = vdwg.mxu0
          %v2720 = vadd.f32 %v2667, %v2718
          %v2721 = vld [vmem:[%s9 + $0x4] sm:$0x1]
          %v2722 = vld [vmem:[%s9 + $0x5] sm:$0x1]
          %v2723 = vld [vmem:[%s9 + $0x6] sm:$0x3]
          %v2724 = vld [vmem:[%s8] sm:$0x18]
          %v2725 = vld [vmem:[%s8 + $0x8] sm:$0x18]
          %v2726 = vld [vmem:[%s4 + $0x360] sm:$0xf]
          %v2727 = vld [vmem:[%s4 + $0x364] sm:$0xf]
          %v2728 = vld [vmem:[%s4 + $0x368] sm:$0xf]
          %v2729 = vld [vmem:[%s4 + $0x36c] sm:$0xf]
          %v2730 = vld [vmem:[%s4 + $0x370] sm:$0xf]
          %v2731 = vld [vmem:[%s4 + $0x374] sm:$0xf]
          %v2732 = vld [vmem:[%s4 + $0x378] sm:$0xf]
          %v2733 = vld [vmem:[%s4 + $0x37c] sm:$0xf]
          %v2734 = vld [vmem:[%s4 + $0x380] sm:$0xf]
          %v2735 = vld [vmem:[%s4 + $0x384] sm:$0xf]
          %v2736 = vld [vmem:[%s4 + $0x388] sm:$0xf]
          %v2737 = vld [vmem:[%s4 + $0x38c] sm:$0xf]
          %v2738 = vld [vmem:[%s4 + $0x390] sm:$0xf]
          %v2739 = vld [vmem:[%s4 + $0x394] sm:$0xf]
          %v2740 = vld [vmem:[%s4 + $0x398] sm:$0xf]
          %v2741 = vld [vmem:[%s4 + $0x39c] sm:$0xf]
          %v2742 = vunpack.c.l.bf16 %v2726
          %v2743 = vunpack.c.l.bf16 %v2727
          %v2744 = vunpack.c.l.bf16 %v2728
          %v2745 = vunpack.c.l.bf16 %v2729
          %v2746 = vunpack.c.l.bf16 %v2730
          %v2747 = vunpack.c.l.bf16 %v2731
          %v2748 = vunpack.c.l.bf16 %v2732
          %v2749 = vunpack.c.l.bf16 %v2733
          %v2750 = vunpack.c.l.bf16 %v2734
          %v2751 = vunpack.c.l.bf16 %v2735
          %v2752 = vunpack.c.l.bf16 %v2736
          %v2753 = vunpack.c.l.bf16 %v2737
          %v2754 = vunpack.c.l.bf16 %v2738
          %v2755 = vunpack.c.l.bf16 %v2739
          %v2756 = vunpack.c.l.bf16 %v2740
          %v2757 = vunpack.c.l.bf16 %v2741
          %v2758 = vld [vmem:[%s6 + $0xa] sm:$0x1]
          %2759 = vmatpush.msra.mxu0 %v2757
          %2760 = vmatpush.msra.mxu0 %v2756
          %2761 = vmatpush.msra.mxu0 %v2755
          %2762 = vmatpush.msra.mxu0 %v2754
          %2763 = vmatpush.msra.mxu0 %v2753
          %2764 = vmatpush.msra.mxu0 %v2752
          %2765 = vmatpush.msra.mxu0 %v2751
          %2766 = vmatpush.msra.mxu0 %v2750
          %2767 = vmatpush.msra.mxu0 %v2749
          %2768 = vmatpush.msra.mxu0 %v2748
          %2769 = vmatpush.msra.mxu0 %v2747
          %2770 = vmatpush.msra.mxu0 %v2746
          %2771 = vmatpush.msra.mxu0 %v2745
          %2772 = vmatpush.msra.mxu0 %v2744
          %2773 = vmatpush.msra.mxu0 %v2743
          %2774 = vmatpush.msra.mxu0 %v2742
          %2775 = vmatmul.f32.gmra.mxu0 %v2721
          %v2776 = vpop.f32.mrf.mxu0
          %v2777 = vadd.f32 %v2758, %v2776
          %2778 = vdwg.mxu0
          %v2779 = vld [vmem:[%s4 + $0x3a0] sm:$0xf]
          %v2780 = vld [vmem:[%s4 + $0x3a4] sm:$0xf]
          %v2781 = vld [vmem:[%s4 + $0x3a8] sm:$0xf]
          %v2782 = vld [vmem:[%s4 + $0x3ac] sm:$0xf]
          %v2783 = vld [vmem:[%s4 + $0x3b0] sm:$0xf]
          %v2784 = vld [vmem:[%s4 + $0x3b4] sm:$0xf]
          %v2785 = vld [vmem:[%s4 + $0x3b8] sm:$0xf]
          %v2786 = vld [vmem:[%s4 + $0x3bc] sm:$0xf]
          %v2787 = vld [vmem:[%s4 + $0x3c0] sm:$0xf]
          %v2788 = vld [vmem:[%s4 + $0x3c4] sm:$0xf]
          %v2789 = vld [vmem:[%s4 + $0x3c8] sm:$0xf]
          %v2790 = vld [vmem:[%s4 + $0x3cc] sm:$0xf]
          %v2791 = vld [vmem:[%s4 + $0x3d0] sm:$0xf]
          %v2792 = vld [vmem:[%s4 + $0x3d4] sm:$0xf]
          %v2793 = vld [vmem:[%s4 + $0x3d8] sm:$0xf]
          %v2794 = vld [vmem:[%s4 + $0x3dc] sm:$0xf]
          %v2795 = vunpack.c.l.bf16 %v2779
          %v2796 = vunpack.c.l.bf16 %v2780
          %v2797 = vunpack.c.l.bf16 %v2781
          %v2798 = vunpack.c.l.bf16 %v2782
          %v2799 = vunpack.c.l.bf16 %v2783
          %v2800 = vunpack.c.l.bf16 %v2784
          %v2801 = vunpack.c.l.bf16 %v2785
          %v2802 = vunpack.c.l.bf16 %v2786
          %v2803 = vunpack.c.l.bf16 %v2787
          %v2804 = vunpack.c.l.bf16 %v2788
          %v2805 = vunpack.c.l.bf16 %v2789
          %v2806 = vunpack.c.l.bf16 %v2790
          %v2807 = vunpack.c.l.bf16 %v2791
          %v2808 = vunpack.c.l.bf16 %v2792
          %v2809 = vunpack.c.l.bf16 %v2793
          %v2810 = vunpack.c.l.bf16 %v2794
          %v2811 = vld [vmem:[%s6 + $0xb] sm:$0x1]
          %2812 = vmatpush.msra.mxu0 %v2810
          %2813 = vmatpush.msra.mxu0 %v2809
          %2814 = vmatpush.msra.mxu0 %v2808
          %2815 = vmatpush.msra.mxu0 %v2807
          %2816 = vmatpush.msra.mxu0 %v2806
          %2817 = vmatpush.msra.mxu0 %v2805
          %2818 = vmatpush.msra.mxu0 %v2804
          %2819 = vmatpush.msra.mxu0 %v2803
          %2820 = vmatpush.msra.mxu0 %v2802
          %2821 = vmatpush.msra.mxu0 %v2801
          %2822 = vmatpush.msra.mxu0 %v2800
          %2823 = vmatpush.msra.mxu0 %v2799
          %2824 = vmatpush.msra.mxu0 %v2798
          %2825 = vmatpush.msra.mxu0 %v2797
          %2826 = vmatpush.msra.mxu0 %v2796
          %2827 = vmatpush.msra.mxu0 %v2795
          %2828 = vmatmul.f32.gmra.mxu0 %v2722
          %v2829 = vpop.f32.mrf.mxu0
          %v2830 = vadd.f32 %v2811, %v2829
          %2831 = vdwg.mxu0
          %v2832 = vsel %vm2372, %v2723, 0.0
          %v2833 = vrot.slane %v2832, 4
          %v2834 = vadd.f32 %v2832, %v2833
          %v2835 = vrot.slane %v2834, 2
          %v2836 = vadd.f32 %v2834, %v2835
          %v2837 = vrot.slane %v2836, 1
          %v2838 = vadd.f32 %v2836, %v2837
          %v2839 = vmul.f32 %v2838, %v2386
          %v2840 = vld [vmem:[%s4 + $0x3e0] sm:$0xf]
          %v2841 = vld [vmem:[%s4 + $0x3e4] sm:$0xf]
          %v2842 = vld [vmem:[%s4 + $0x3e8] sm:$0xf]
          %v2843 = vld [vmem:[%s4 + $0x3ec] sm:$0xf]
          %v2844 = vld [vmem:[%s4 + $0x3f0] sm:$0xf]
          %v2845 = vld [vmem:[%s4 + $0x3f4] sm:$0xf]
          %v2846 = vld [vmem:[%s4 + $0x3f8] sm:$0xf]
          %v2847 = vld [vmem:[%s4 + $0x3fc] sm:$0xf]
          %v2848 = vld [vmem:[%s4 + $0x400] sm:$0xf]
          %v2849 = vld [vmem:[%s4 + $0x404] sm:$0xf]
          %v2850 = vld [vmem:[%s4 + $0x408] sm:$0xf]
          %v2851 = vld [vmem:[%s4 + $0x40c] sm:$0xf]
          %v2852 = vld [vmem:[%s4 + $0x410] sm:$0xf]
          %v2853 = vld [vmem:[%s4 + $0x414] sm:$0xf]
          %v2854 = vld [vmem:[%s4 + $0x418] sm:$0xf]
          %v2855 = vld [vmem:[%s4 + $0x41c] sm:$0xf]
          %v2856 = vld [vmem:[%s4 + $0x420] sm:$0xf]
          %v2857 = vld [vmem:[%s4 + $0x424] sm:$0xf]
          %v2858 = vld [vmem:[%s4 + $0x428] sm:$0xf]
          %v2859 = vld [vmem:[%s4 + $0x42c] sm:$0xf]
          %v2860 = vld [vmem:[%s4 + $0x430] sm:$0xf]
          %v2861 = vld [vmem:[%s4 + $0x434] sm:$0xf]
          %v2862 = vld [vmem:[%s4 + $0x438] sm:$0xf]
          %v2863 = vld [vmem:[%s4 + $0x43c] sm:$0xf]
          %v2864 = vld [vmem:[%s4 + $0x440] sm:$0xf]
          %v2865 = vld [vmem:[%s4 + $0x444] sm:$0xf]
          %v2866 = vld [vmem:[%s4 + $0x448] sm:$0xf]
          %v2867 = vld [vmem:[%s4 + $0x44c] sm:$0xf]
          %v2868 = vld [vmem:[%s4 + $0x450] sm:$0xf]
          %v2869 = vld [vmem:[%s4 + $0x454] sm:$0xf]
          %v2870 = vld [vmem:[%s4 + $0x458] sm:$0xf]
          %v2871 = vld [vmem:[%s4 + $0x45c] sm:$0xf]
          %v2872 = vunpack.c.l.bf16 %v2840
          %v2873 = vunpack.c.l.bf16 %v2841
          %v2874 = vunpack.c.l.bf16 %v2842
          %v2875 = vunpack.c.l.bf16 %v2843
          %v2876 = vunpack.c.l.bf16 %v2844
          %v2877 = vunpack.c.l.bf16 %v2845
          %v2878 = vunpack.c.l.bf16 %v2846
          %v2879 = vunpack.c.l.bf16 %v2847
          %v2880 = vunpack.c.l.bf16 %v2848
          %v2881 = vunpack.c.l.bf16 %v2849
          %v2882 = vunpack.c.l.bf16 %v2850
          %v2883 = vunpack.c.l.bf16 %v2851
          %v2884 = vunpack.c.l.bf16 %v2852
          %v2885 = vunpack.c.l.bf16 %v2853
          %v2886 = vunpack.c.l.bf16 %v2854
          %v2887 = vunpack.c.l.bf16 %v2855
          %v2888 = vunpack.c.l.bf16 %v2856
          %v2889 = vunpack.c.l.bf16 %v2857
          %v2890 = vunpack.c.l.bf16 %v2858
          %v2891 = vunpack.c.l.bf16 %v2859
          %v2892 = vunpack.c.l.bf16 %v2860
          %v2893 = vunpack.c.l.bf16 %v2861
          %v2894 = vunpack.c.l.bf16 %v2862
          %v2895 = vunpack.c.l.bf16 %v2863
          %v2896 = vunpack.c.l.bf16 %v2864
          %v2897 = vunpack.c.l.bf16 %v2865
          %v2898 = vunpack.c.l.bf16 %v2866
          %v2899 = vunpack.c.l.bf16 %v2867
          %v2900 = vunpack.c.l.bf16 %v2868
          %v2901 = vunpack.c.l.bf16 %v2869
          %v2902 = vunpack.c.l.bf16 %v2870
          %v2903 = vunpack.c.l.bf16 %v2871
          %v2904 = vld [vmem:[%s6 + $0xc] sm:$0x1]
          %v2905 = vperm.slane %v2904, 0
          %v2908 = vrot.slane %v2724, 3
          %v2909 = vrot.slane %v2725, 3
          %2912 = vmatpush.msra.mxu0 %v2887
          %2913 = vmatpush.msra.mxu0 %v2886
          %2914 = vmatpush.msra.mxu0 %v2885
          %2915 = vmatpush.msra.mxu0 %v2884
          %2916 = vmatpush.msra.mxu0 %v2883
          %2917 = vmatpush.msra.mxu0 %v2882
          %2918 = vmatpush.msra.mxu0 %v2881
          %2919 = vmatpush.msra.mxu0 %v2880
          %2920 = vmatpush.msra.mxu0 %v2879
          %2921 = vmatpush.msra.mxu0 %v2878
          %2922 = vmatpush.msra.mxu0 %v2877
          %2923 = vmatpush.msra.mxu0 %v2876
          %2924 = vmatpush.msra.mxu0 %v2875
          %2925 = vmatpush.msra.mxu0 %v2874
          %2926 = vmatpush.msra.mxu0 %v2873
          %2927 = vmatpush.msra.mxu0 %v2872
          %2928 = vmatmul.f32.gmra.mxu0 %v2908
          %v2929 = vpop.f32.mrf.mxu0
          %v2930 = vadd.f32 %v2905, %v2929
          %2931 = vdwg.mxu0
          %2932 = vmatpush.msra.mxu0 %v2903
          %2933 = vmatpush.msra.mxu0 %v2902
          %2934 = vmatpush.msra.mxu0 %v2901
          %2935 = vmatpush.msra.mxu0 %v2900
          %2936 = vmatpush.msra.mxu0 %v2899
          %2937 = vmatpush.msra.mxu0 %v2898
          %2938 = vmatpush.msra.mxu0 %v2897
          %2939 = vmatpush.msra.mxu0 %v2896
          %2940 = vmatpush.msra.mxu0 %v2895
          %2941 = vmatpush.msra.mxu0 %v2894
          %2942 = vmatpush.msra.mxu0 %v2893
          %2943 = vmatpush.msra.mxu0 %v2892
          %2944 = vmatpush.msra.mxu0 %v2891
          %2945 = vmatpush.msra.mxu0 %v2890
          %2946 = vmatpush.msra.mxu0 %v2889
          %2947 = vmatpush.msra.mxu0 %v2888
          %2948 = vmatmul.f32.gmra.mxu0 %v2909
          %v2949 = vpop.f32.mrf.mxu0
          %v2950 = vadd.f32 %v2930, %v2949
          %2951 = vdwg.mxu0
          %v2952 = vsel %vm2372, %v2950, 0.0
          %v2953 = vrot.slane %v2952, 4
          %v2954 = vadd.f32 %v2952, %v2953
          %v2955 = vrot.slane %v2954, 2
          %v2956 = vadd.f32 %v2954, %v2955
          %v2957 = vrot.slane %v2956, 1
          %v2958 = vadd.f32 %v2956, %v2957
          %v2959 = vmul.f32 %v2958, %v2386
          %v2960 = vld [vmem:[%s6 + $0xd] sm:$0x1]
          %v2961 = vld [vmem:[%s4 + $0x460] sm:$0xf]
          %v2962 = vld [vmem:[%s4 + $0x464] sm:$0xf]
          %v2963 = vld [vmem:[%s4 + $0x468] sm:$0xf]
          %v2964 = vld [vmem:[%s4 + $0x46c] sm:$0xf]
          %v2965 = vld [vmem:[%s4 + $0x470] sm:$0xf]
          %v2966 = vld [vmem:[%s4 + $0x474] sm:$0xf]
          %v2967 = vld [vmem:[%s4 + $0x478] sm:$0xf]
          %v2968 = vld [vmem:[%s4 + $0x47c] sm:$0xf]
          %v2969 = vld [vmem:[%s4 + $0x480] sm:$0xf]
          %v2970 = vld [vmem:[%s4 + $0x484] sm:$0xf]
          %v2971 = vld [vmem:[%s4 + $0x488] sm:$0xf]
          %v2972 = vld [vmem:[%s4 + $0x48c] sm:$0xf]
          %v2973 = vld [vmem:[%s4 + $0x490] sm:$0xf]
          %v2974 = vld [vmem:[%s4 + $0x494] sm:$0xf]
          %v2975 = vld [vmem:[%s4 + $0x498] sm:$0xf]
          %v2976 = vld [vmem:[%s4 + $0x49c] sm:$0xf]
          %v2977 = vunpack.c.l.bf16 %v2961
          %v2978 = vunpack.c.l.bf16 %v2962
          %v2979 = vunpack.c.l.bf16 %v2963
          %v2980 = vunpack.c.l.bf16 %v2964
          %v2981 = vunpack.c.l.bf16 %v2965
          %v2982 = vunpack.c.l.bf16 %v2966
          %v2983 = vunpack.c.l.bf16 %v2967
          %v2984 = vunpack.c.l.bf16 %v2968
          %v2985 = vunpack.c.l.bf16 %v2969
          %v2986 = vunpack.c.l.bf16 %v2970
          %v2987 = vunpack.c.l.bf16 %v2971
          %v2988 = vunpack.c.l.bf16 %v2972
          %v2989 = vunpack.c.l.bf16 %v2973
          %v2990 = vunpack.c.l.bf16 %v2974
          %v2991 = vunpack.c.l.bf16 %v2975
          %v2992 = vunpack.c.l.bf16 %v2976
          %2993 = vmatpush.msra.mxu0 %v2992
          %2994 = vmatpush.msra.mxu0 %v2991
          %2995 = vmatpush.msra.mxu0 %v2990
          %2996 = vmatpush.msra.mxu0 %v2989
          %2997 = vmatpush.msra.mxu0 %v2988
          %2998 = vmatpush.msra.mxu0 %v2987
          %2999 = vmatpush.msra.mxu0 %v2986
          %3000 = vmatpush.msra.mxu0 %v2985
          %3001 = vmatpush.msra.mxu0 %v2984
          %3002 = vmatpush.msra.mxu0 %v2983
          %3003 = vmatpush.msra.mxu0 %v2982
          %3004 = vmatpush.msra.mxu0 %v2981
          %3005 = vmatpush.msra.mxu0 %v2980
          %3006 = vmatpush.msra.mxu0 %v2979
          %3007 = vmatpush.msra.mxu0 %v2978
          %3008 = vmatpush.msra.mxu0 %v2977
          %3009 = vmatmul.f32.gmra.mxu0 %v2777
          %v3010 = vpop.f32.mrf.mxu0
          %v3011 = vadd.f32 0.0, %v3010
          %3012 = vdwg.mxu0
          %v3013 = vadd.f32 %v2960, %v3011
          %v3014 = vld [vmem:[%s4 + $0x4a0] sm:$0xf]
          %v3015 = vld [vmem:[%s4 + $0x4a4] sm:$0xf]
          %v3016 = vld [vmem:[%s4 + $0x4a8] sm:$0xf]
          %v3017 = vld [vmem:[%s4 + $0x4ac] sm:$0xf]
          %v3018 = vld [vmem:[%s4 + $0x4b0] sm:$0xf]
          %v3019 = vld [vmem:[%s4 + $0x4b4] sm:$0xf]
          %v3020 = vld [vmem:[%s4 + $0x4b8] sm:$0xf]
          %v3021 = vld [vmem:[%s4 + $0x4bc] sm:$0xf]
          %v3022 = vld [vmem:[%s4 + $0x4c0] sm:$0xf]
          %v3023 = vld [vmem:[%s4 + $0x4c4] sm:$0xf]
          %v3024 = vld [vmem:[%s4 + $0x4c8] sm:$0xf]
          %v3025 = vld [vmem:[%s4 + $0x4cc] sm:$0xf]
          %v3026 = vld [vmem:[%s4 + $0x4d0] sm:$0xf]
          %v3027 = vld [vmem:[%s4 + $0x4d4] sm:$0xf]
          %v3028 = vld [vmem:[%s4 + $0x4d8] sm:$0xf]
          %v3029 = vld [vmem:[%s4 + $0x4dc] sm:$0xf]
          %v3030 = vunpack.c.l.bf16 %v3014
          %v3031 = vunpack.c.l.bf16 %v3015
          %v3032 = vunpack.c.l.bf16 %v3016
          %v3033 = vunpack.c.l.bf16 %v3017
          %v3034 = vunpack.c.l.bf16 %v3018
          %v3035 = vunpack.c.l.bf16 %v3019
          %v3036 = vunpack.c.l.bf16 %v3020
          %v3037 = vunpack.c.l.bf16 %v3021
          %v3038 = vunpack.c.l.bf16 %v3022
          %v3039 = vunpack.c.l.bf16 %v3023
          %v3040 = vunpack.c.l.bf16 %v3024
          %v3041 = vunpack.c.l.bf16 %v3025
          %v3042 = vunpack.c.l.bf16 %v3026
          %v3043 = vunpack.c.l.bf16 %v3027
          %v3044 = vunpack.c.l.bf16 %v3028
          %v3045 = vunpack.c.l.bf16 %v3029
          %3046 = vmatpush.msra.mxu0 %v3045
          %3047 = vmatpush.msra.mxu0 %v3044
          %3048 = vmatpush.msra.mxu0 %v3043
          %3049 = vmatpush.msra.mxu0 %v3042
          %3050 = vmatpush.msra.mxu0 %v3041
          %3051 = vmatpush.msra.mxu0 %v3040
          %3052 = vmatpush.msra.mxu0 %v3039
          %3053 = vmatpush.msra.mxu0 %v3038
          %3054 = vmatpush.msra.mxu0 %v3037
          %3055 = vmatpush.msra.mxu0 %v3036
          %3056 = vmatpush.msra.mxu0 %v3035
          %3057 = vmatpush.msra.mxu0 %v3034
          %3058 = vmatpush.msra.mxu0 %v3033
          %3059 = vmatpush.msra.mxu0 %v3032
          %3060 = vmatpush.msra.mxu0 %v3031
          %3061 = vmatpush.msra.mxu0 %v3030
          %3062 = vmatmul.f32.gmra.mxu0 %v2830
          %v3063 = vpop.f32.mrf.mxu0
          %v3064 = vadd.f32 0.0, %v3063
          %3065 = vdwg.mxu0
          %v3066 = vadd.f32 %v3013, %v3064
          %v3067 = vld [vmem:[%s4 + $0x4e0] sm:$0xf]
          %v3068 = vld [vmem:[%s4 + $0x4e4] sm:$0xf]
          %v3069 = vld [vmem:[%s4 + $0x4e8] sm:$0xf]
          %v3070 = vld [vmem:[%s4 + $0x4ec] sm:$0xf]
          %v3071 = vld [vmem:[%s4 + $0x4f0] sm:$0xf]
          %v3072 = vld [vmem:[%s4 + $0x4f4] sm:$0xf]
          %v3073 = vld [vmem:[%s4 + $0x4f8] sm:$0xf]
          %v3074 = vld [vmem:[%s4 + $0x4fc] sm:$0xf]
          %v3075 = vld [vmem:[%s4 + $0x500] sm:$0xf]
          %v3076 = vld [vmem:[%s4 + $0x504] sm:$0xf]
          %v3077 = vld [vmem:[%s4 + $0x508] sm:$0xf]
          %v3078 = vld [vmem:[%s4 + $0x50c] sm:$0xf]
          %v3079 = vld [vmem:[%s4 + $0x510] sm:$0xf]
          %v3080 = vld [vmem:[%s4 + $0x514] sm:$0xf]
          %v3081 = vld [vmem:[%s4 + $0x518] sm:$0xf]
          %v3082 = vld [vmem:[%s4 + $0x51c] sm:$0xf]
          %v3083 = vunpack.c.l.bf16 %v3067
          %v3084 = vunpack.c.l.bf16 %v3068
          %v3085 = vunpack.c.l.bf16 %v3069
          %v3086 = vunpack.c.l.bf16 %v3070
          %v3087 = vunpack.c.l.bf16 %v3071
          %v3088 = vunpack.c.l.bf16 %v3072
          %v3089 = vunpack.c.l.bf16 %v3073
          %v3090 = vunpack.c.l.bf16 %v3074
          %v3091 = vunpack.c.l.bf16 %v3075
          %v3092 = vunpack.c.l.bf16 %v3076
          %v3093 = vunpack.c.l.bf16 %v3077
          %v3094 = vunpack.c.l.bf16 %v3078
          %v3095 = vunpack.c.l.bf16 %v3079
          %v3096 = vunpack.c.l.bf16 %v3080
          %v3097 = vunpack.c.l.bf16 %v3081
          %v3098 = vunpack.c.l.bf16 %v3082
          %3099 = vmatpush.msra.mxu0 %v3098
          %3100 = vmatpush.msra.mxu0 %v3097
          %3101 = vmatpush.msra.mxu0 %v3096
          %3102 = vmatpush.msra.mxu0 %v3095
          %3103 = vmatpush.msra.mxu0 %v3094
          %3104 = vmatpush.msra.mxu0 %v3093
          %3105 = vmatpush.msra.mxu0 %v3092
          %3106 = vmatpush.msra.mxu0 %v3091
          %3107 = vmatpush.msra.mxu0 %v3090
          %3108 = vmatpush.msra.mxu0 %v3089
          %3109 = vmatpush.msra.mxu0 %v3088
          %3110 = vmatpush.msra.mxu0 %v3087
          %3111 = vmatpush.msra.mxu0 %v3086
          %3112 = vmatpush.msra.mxu0 %v3085
          %3113 = vmatpush.msra.mxu0 %v3084
          %3114 = vmatpush.msra.mxu0 %v3083
          %3115 = vmatmul.f32.gmra.mxu0 %v2839
          %v3116 = vpop.f32.mrf.mxu0
          %v3117 = vadd.f32 0.0, %v3116
          %3118 = vdwg.mxu0
          %v3119 = vadd.f32 %v3066, %v3117
          %v3120 = vld [vmem:[%s4 + $0x520] sm:$0xf]
          %v3121 = vld [vmem:[%s4 + $0x524] sm:$0xf]
          %v3122 = vld [vmem:[%s4 + $0x528] sm:$0xf]
          %v3123 = vld [vmem:[%s4 + $0x52c] sm:$0xf]
          %v3124 = vld [vmem:[%s4 + $0x530] sm:$0xf]
          %v3125 = vld [vmem:[%s4 + $0x534] sm:$0xf]
          %v3126 = vld [vmem:[%s4 + $0x538] sm:$0xf]
          %v3127 = vld [vmem:[%s4 + $0x53c] sm:$0xf]
          %v3128 = vld [vmem:[%s4 + $0x540] sm:$0xf]
          %v3129 = vld [vmem:[%s4 + $0x544] sm:$0xf]
          %v3130 = vld [vmem:[%s4 + $0x548] sm:$0xf]
          %v3131 = vld [vmem:[%s4 + $0x54c] sm:$0xf]
          %v3132 = vld [vmem:[%s4 + $0x550] sm:$0xf]
          %v3133 = vld [vmem:[%s4 + $0x554] sm:$0xf]
          %v3134 = vld [vmem:[%s4 + $0x558] sm:$0xf]
          %v3135 = vld [vmem:[%s4 + $0x55c] sm:$0xf]
          %v3136 = vunpack.c.l.bf16 %v3120
          %v3137 = vunpack.c.l.bf16 %v3121
          %v3138 = vunpack.c.l.bf16 %v3122
          %v3139 = vunpack.c.l.bf16 %v3123
          %v3140 = vunpack.c.l.bf16 %v3124
          %v3141 = vunpack.c.l.bf16 %v3125
          %v3142 = vunpack.c.l.bf16 %v3126
          %v3143 = vunpack.c.l.bf16 %v3127
          %v3144 = vunpack.c.l.bf16 %v3128
          %v3145 = vunpack.c.l.bf16 %v3129
          %v3146 = vunpack.c.l.bf16 %v3130
          %v3147 = vunpack.c.l.bf16 %v3131
          %v3148 = vunpack.c.l.bf16 %v3132
          %v3149 = vunpack.c.l.bf16 %v3133
          %v3150 = vunpack.c.l.bf16 %v3134
          %v3151 = vunpack.c.l.bf16 %v3135
          %3152 = vmatpush.msra.mxu0 %v3151
          %3153 = vmatpush.msra.mxu0 %v3150
          %3154 = vmatpush.msra.mxu0 %v3149
          %3155 = vmatpush.msra.mxu0 %v3148
          %3156 = vmatpush.msra.mxu0 %v3147
          %3157 = vmatpush.msra.mxu0 %v3146
          %3158 = vmatpush.msra.mxu0 %v3145
          %3159 = vmatpush.msra.mxu0 %v3144
          %3160 = vmatpush.msra.mxu0 %v3143
          %3161 = vmatpush.msra.mxu0 %v3142
          %3162 = vmatpush.msra.mxu0 %v3141
          %3163 = vmatpush.msra.mxu0 %v3140
          %3164 = vmatpush.msra.mxu0 %v3139
          %3165 = vmatpush.msra.mxu0 %v3138
          %3166 = vmatpush.msra.mxu0 %v3137
          %3167 = vmatpush.msra.mxu0 %v3136
          %3168 = vmatmul.f32.gmra.mxu0 %v2959
          %v3169 = vpop.f32.mrf.mxu0
          %v3170 = vadd.f32 0.0, %v3169
          %3171 = vdwg.mxu0
          %v3172 = vadd.f32 %v3119, %v3170
          %v3174 = vrot.slane %v3172, 7
          %vm3176 = vcmask 1040384
          %v3177 = vsel %vm3176, %v2720, %v3174
          %3178 = vst [vmem:[%s507] sm:$0x3] %v3177
        $region68: #{mtpnet_forward.1} parent=59 // pred_fallthru
          _
        %p3179 = scmp.eq.s32.totalorder %s32, 3
        // Predicated region
        $region69: #{mtpnet_forward.1} parent=59 // pred_check
          %p3180 = pneg %p3179
        $region70: #{mtpnet_forward.1} parent=59 // pred_check_branch
          %3182 = sbr.rel (%p3180) target = $region72
        $region71: #{mtpnet_forward.1} parent=59 // pred_region
          %v3183 = vld [vmem:[#allocation2] sm:$0xff]
          %v3184 = vld [vmem:[%s8] ss:$8 sm:$0x3]
          %v3186 = vperm.slane %v3184, 0
          %v3187 = vperm.slane %v3184, 1
          %v3188 = vrot.slane %v3187, 4
          %v3189 = vsel %vm1268, %v3186, %v3188
          %v3191 = vadd.f32 %v3183, %v3189
          %v3192 = vld [vmem:[%s4] sm:$0xf]
          %v3193 = vld [vmem:[%s4 + $0x4] sm:$0xf]
          %v3194 = vld [vmem:[%s4 + $0x8] sm:$0xf]
          %v3195 = vld [vmem:[%s4 + $0xc] sm:$0xf]
          %v3196 = vld [vmem:[%s4 + $0x10] sm:$0xf]
          %v3197 = vld [vmem:[%s4 + $0x14] sm:$0xf]
          %v3198 = vld [vmem:[%s4 + $0x18] sm:$0xf]
          %v3199 = vld [vmem:[%s4 + $0x1c] sm:$0xf]
          %v3200 = vld [vmem:[%s4 + $0x20] sm:$0xf]
          %v3201 = vld [vmem:[%s4 + $0x24] sm:$0xf]
          %v3202 = vld [vmem:[%s4 + $0x28] sm:$0xf]
          %v3203 = vld [vmem:[%s4 + $0x2c] sm:$0xf]
          %v3204 = vld [vmem:[%s4 + $0x30] sm:$0xf]
          %v3205 = vld [vmem:[%s4 + $0x34] sm:$0xf]
          %v3206 = vld [vmem:[%s4 + $0x38] sm:$0xf]
          %v3207 = vld [vmem:[%s4 + $0x3c] sm:$0xf]
          %v3208 = vld [vmem:[%s4 + $0x40] sm:$0xf]
          %v3209 = vld [vmem:[%s4 + $0x44] sm:$0xf]
          %v3210 = vld [vmem:[%s4 + $0x48] sm:$0xf]
          %v3211 = vld [vmem:[%s4 + $0x4c] sm:$0xf]
          %v3212 = vld [vmem:[%s4 + $0x50] sm:$0xf]
          %v3213 = vld [vmem:[%s4 + $0x54] sm:$0xf]
          %v3214 = vld [vmem:[%s4 + $0x58] sm:$0xf]
          %v3215 = vld [vmem:[%s4 + $0x5c] sm:$0xf]
          %v3216 = vld [vmem:[%s4 + $0x60] sm:$0xf]
          %v3217 = vld [vmem:[%s4 + $0x64] sm:$0xf]
          %v3218 = vld [vmem:[%s4 + $0x68] sm:$0xf]
          %v3219 = vld [vmem:[%s4 + $0x6c] sm:$0xf]
          %v3220 = vld [vmem:[%s4 + $0x70] sm:$0xf]
          %v3221 = vld [vmem:[%s4 + $0x74] sm:$0xf]
          %v3222 = vld [vmem:[%s4 + $0x78] sm:$0xf]
          %v3223 = vld [vmem:[%s4 + $0x7c] sm:$0xf]
          %v3224 = vunpack.c.l.bf16 %v3192
          %v3225 = vunpack.c.l.bf16 %v3193
          %v3226 = vunpack.c.l.bf16 %v3194
          %v3227 = vunpack.c.l.bf16 %v3195
          %v3228 = vunpack.c.l.bf16 %v3196
          %v3229 = vunpack.c.l.bf16 %v3197
          %v3230 = vunpack.c.l.bf16 %v3198
          %v3231 = vunpack.c.l.bf16 %v3199
          %v3232 = vunpack.c.l.bf16 %v3200
          %v3233 = vunpack.c.l.bf16 %v3201
          %v3234 = vunpack.c.l.bf16 %v3202
          %v3235 = vunpack.c.l.bf16 %v3203
          %v3236 = vunpack.c.l.bf16 %v3204
          %v3237 = vunpack.c.l.bf16 %v3205
          %v3238 = vunpack.c.l.bf16 %v3206
          %v3239 = vunpack.c.l.bf16 %v3207
          %v3240 = vunpack.c.l.bf16 %v3208
          %v3241 = vunpack.c.l.bf16 %v3209
          %v3242 = vunpack.c.l.bf16 %v3210
          %v3243 = vunpack.c.l.bf16 %v3211
          %v3244 = vunpack.c.l.bf16 %v3212
          %v3245 = vunpack.c.l.bf16 %v3213
          %v3246 = vunpack.c.l.bf16 %v3214
          %v3247 = vunpack.c.l.bf16 %v3215
          %v3248 = vunpack.c.l.bf16 %v3216
          %v3249 = vunpack.c.l.bf16 %v3217
          %v3250 = vunpack.c.l.bf16 %v3218
          %v3251 = vunpack.c.l.bf16 %v3219
          %v3252 = vunpack.c.l.bf16 %v3220
          %v3253 = vunpack.c.l.bf16 %v3221
          %v3254 = vunpack.c.l.bf16 %v3222
          %v3255 = vunpack.c.l.bf16 %v3223
          %v3256 = vld [vmem:[%s6 + $0x1] sm:$0x1]
          %v3257 = vperm.slane %v3256, 0
          %3259 = vst [vmem:[#allocation1] ss:$2 sm:$0xff] %v3191
          %v3260 = vld.sshfl [vmem:[#allocation1] sm:$0xff pattern:$0x75316420]
          %v3261 = vld.sshfl [vmem:[#allocation1 + $0x8] sm:$0xff pattern:$0x75316420]
          %3264 = vmatpush.msra.mxu0 %v3239
          %3265 = vmatpush.msra.mxu0 %v3238
          %3266 = vmatpush.msra.mxu0 %v3237
          %3267 = vmatpush.msra.mxu0 %v3236
          %3268 = vmatpush.msra.mxu0 %v3235
          %3269 = vmatpush.msra.mxu0 %v3234
          %3270 = vmatpush.msra.mxu0 %v3233
          %3271 = vmatpush.msra.mxu0 %v3232
          %3272 = vmatpush.msra.mxu0 %v3231
          %3273 = vmatpush.msra.mxu0 %v3230
          %3274 = vmatpush.msra.mxu0 %v3229
          %3275 = vmatpush.msra.mxu0 %v3228
          %3276 = vmatpush.msra.mxu0 %v3227
          %3277 = vmatpush.msra.mxu0 %v3226
          %3278 = vmatpush.msra.mxu0 %v3225
          %3279 = vmatpush.msra.mxu0 %v3224
          %3280 = vmatmul.f32.gmra.mxu0 %v3260
          %v3281 = vpop.f32.mrf.mxu0
          %v3282 = vadd.f32 %v3257, %v3281
          %3283 = vdwg.mxu0
          %3284 = vmatpush.msra.mxu0 %v3255
          %3285 = vmatpush.msra.mxu0 %v3254
          %3286 = vmatpush.msra.mxu0 %v3253
          %3287 = vmatpush.msra.mxu0 %v3252
          %3288 = vmatpush.msra.mxu0 %v3251
          %3289 = vmatpush.msra.mxu0 %v3250
          %3290 = vmatpush.msra.mxu0 %v3249
          %3291 = vmatpush.msra.mxu0 %v3248
          %3292 = vmatpush.msra.mxu0 %v3247
          %3293 = vmatpush.msra.mxu0 %v3246
          %3294 = vmatpush.msra.mxu0 %v3245
          %3295 = vmatpush.msra.mxu0 %v3244
          %3296 = vmatpush.msra.mxu0 %v3243
          %3297 = vmatpush.msra.mxu0 %v3242
          %3298 = vmatpush.msra.mxu0 %v3241
          %3299 = vmatpush.msra.mxu0 %v3240
          %3300 = vmatmul.f32.gmra.mxu0 %v3261
          %v3301 = vpop.f32.mrf.mxu0
          %v3302 = vadd.f32 %v3282, %v3301
          %3303 = vdwg.mxu0
          %v3304 = vmul.f32 %v3302, 0.5
          %v3305 = vmul.f32 %v3302, 0.70710677
          %v3306 = vmul.f32 %v3305, %v3305
          %v3307 = vmin.f32 16.0, %v3306
          %v3308 = vmul.f32 %v3307, 2.1237322e-06
          %v3309 = vadd.f32 %v3308, 0.00028619796
          %v3310 = vmul.f32 %v3307, %v3309
          %v3311 = vadd.f32 %v3310, 0.0036580483
          %v3312 = vmul.f32 %v3307, %v3311
          %v3313 = vadd.f32 %v3312, 0.05243302
          %v3314 = vmul.f32 %v3307, %v3313
          %v3315 = vadd.f32 %v3314, 0.18741608
          %v3316 = vmul.f32 %v3307, %v3315
          %v3317 = vadd.f32 %v3316, 1.1283791
          %v3318 = vmul.f32 %v3305, %v3317
          %v3319 = vmul.f32 %v3307, 3.8918573e-05
          %v3320 = vadd.f32 %v3319, 0.001143296
          %v3321 = vmul.f32 %v3307, %v3320
          %v3322 = vadd.f32 %v3321, 0.014752088
          %v3323 = vmul.f32 %v3307, %v3322
          %v3324 = vadd.f32 %v3323, 0.112945676
          %v3325 = vmul.f32 %v3307, %v3324
          %v3326 = vadd.f32 %v3325, 0.4994258
          %v3327 = vmul.f32 %v3307, %v3326
          %v3328 = vadd.f32 %v3327, 1.0
          %v3329 = vrcp.pop %v3328
          %v3330 = vmul.f32 %v3328, %v3329
          %v3331 = vsub.f32 1.0, %v3330
          %v3332 = vmul.f32 %v3329, %v3331
          %v3333 = vadd.f32 %v3329, %v3332
          %vm3334 = vweird.f32 %v3328
          %vm3335 = vweird.f32 %v3329
          %vm3336 = vmor %vm3334, %vm3335
          %v3337 = vsel %vm3336, %v3329, %v3333
          %v3338 = vand.u32 2147483647, %v3328
          %vm3339 = vcmp.eq.f32.partialorder %v3338, 8.507059e+37
          %v3340 = vand.u32 %v3328, 2147483648
          %v3341 = vor.u32 1.1754944e-38, %v3340
          %v3342 = vsel %vm3339, %v3341, %v3337
          %v3343 = vmul.f32 %v3318, %v3342
          %v3344 = vmin.f32 %v3343, 1.0
          %v3345 = vmax.f32 %v3344, -1.0
          %v3346 = vadd.f32 %v3345, 1.0
          %v3347 = vmul.f32 %v3304, %v3346
          %v3348 = vld [vmem:[%s4 + $0x80] sm:$0xf]
          %v3349 = vld [vmem:[%s4 + $0x84] sm:$0xf]
          %v3350 = vld [vmem:[%s4 + $0x88] sm:$0xf]
          %v3351 = vld [vmem:[%s4 + $0x8c] sm:$0xf]
          %v3352 = vld [vmem:[%s4 + $0x90] sm:$0xf]
          %v3353 = vld [vmem:[%s4 + $0x94] sm:$0xf]
          %v3354 = vld [vmem:[%s4 + $0x98] sm:$0xf]
          %v3355 = vld [vmem:[%s4 + $0x9c] sm:$0xf]
          %v3356 = vld [vmem:[%s4 + $0xa0] sm:$0xf]
          %v3357 = vld [vmem:[%s4 + $0xa4] sm:$0xf]
          %v3358 = vld [vmem:[%s4 + $0xa8] sm:$0xf]
          %v3359 = vld [vmem:[%s4 + $0xac] sm:$0xf]
          %v3360 = vld [vmem:[%s4 + $0xb0] sm:$0xf]
          %v3361 = vld [vmem:[%s4 + $0xb4] sm:$0xf]
          %v3362 = vld [vmem:[%s4 + $0xb8] sm:$0xf]
          %v3363 = vld [vmem:[%s4 + $0xbc] sm:$0xf]
          %v3364 = vunpack.c.l.bf16 %v3348
          %v3365 = vunpack.c.l.bf16 %v3349
          %v3366 = vunpack.c.l.bf16 %v3350
          %v3367 = vunpack.c.l.bf16 %v3351
          %v3368 = vunpack.c.l.bf16 %v3352
          %v3369 = vunpack.c.l.bf16 %v3353
          %v3370 = vunpack.c.l.bf16 %v3354
          %v3371 = vunpack.c.l.bf16 %v3355
          %v3372 = vunpack.c.l.bf16 %v3356
          %v3373 = vunpack.c.l.bf16 %v3357
          %v3374 = vunpack.c.l.bf16 %v3358
          %v3375 = vunpack.c.l.bf16 %v3359
          %v3376 = vunpack.c.l.bf16 %v3360
          %v3377 = vunpack.c.l.bf16 %v3361
          %v3378 = vunpack.c.l.bf16 %v3362
          %v3379 = vunpack.c.l.bf16 %v3363
          %v3380 = vld [vmem:[%s6 + $0x2] sm:$0x1]
          %v3381 = vperm.slane %v3380, 0
          %3382 = vmatpush.msra.mxu0 %v3379
          %3383 = vmatpush.msra.mxu0 %v3378
          %3384 = vmatpush.msra.mxu0 %v3377
          %3385 = vmatpush.msra.mxu0 %v3376
          %3386 = vmatpush.msra.mxu0 %v3375
          %3387 = vmatpush.msra.mxu0 %v3374
          %3388 = vmatpush.msra.mxu0 %v3373
          %3389 = vmatpush.msra.mxu0 %v3372
          %3390 = vmatpush.msra.mxu0 %v3371
          %3391 = vmatpush.msra.mxu0 %v3370
          %3392 = vmatpush.msra.mxu0 %v3369
          %3393 = vmatpush.msra.mxu0 %v3368
          %3394 = vmatpush.msra.mxu0 %v3367
          %3395 = vmatpush.msra.mxu0 %v3366
          %3396 = vmatpush.msra.mxu0 %v3365
          %3397 = vmatpush.msra.mxu0 %v3364
          %3398 = vmatmul.f32.gmra.mxu0 %v3347
          %v3399 = vpop.f32.mrf.mxu0
          %v3400 = vadd.f32 %v3381, %v3399
          %3401 = vdwg.mxu0
          %3402 = vst [vmem:[%s463] sm:$0xf] %v3400
        $region72: #{mtpnet_forward.1} parent=59 // pred_fallthru
          _
        %s3403 = sand.u32 %s274, 1
        %s3404 = scalar_lea.sflag [#allocation4], %s3403
        %s3405 = sand.u32 %s274, 1
        %s3406 = smul.addr %s3405, 4
        %s3407 = scalar_lea.vmem [#allocation3], %s3406
        %p3408 = scmp.lt.s32.totalorder %s31, 1
        %s3409 = scalar_select %p3408, %s31, 1
        %s3410 = smul.addr %s3409, 2
        %s3411 = smul.addr %s3410, 8
        %s3412 = scalar_lea.vmem %s11, %s3411
        %p3413 = scmp.lt.s32.totalorder %s31, 1
        %s3414 = scalar_select %p3413, %s31, 1
        %s3415 = smul.addr %s3414, 2
        %s3416 = scalar_lea.vmem %s12, %s3415
        // Predicated region
        $region73: #{mtpnet_forward.1} parent=59 // pred_check
          %p3417 = pneg %p284
        $region74: #{mtpnet_forward.1} parent=59 // pred_check_branch
          %3419 = sbr.rel (%p3417) target = $region76
        $region75: #{mtpnet_forward.1} parent=59 // pred_region
          %3421 = vsyncadd %s3404, 0
          %s3422 = smul.addr %s31, 4
          %s3423 = scalar_lea.hbm %s10, %s3422
          %s3425 = sshll.u32 %s3407, 4
          %s3426 = int_to_ptr.vmem [resolvable:$true] %s3425
          %s3427 = sshll.u32 %s3423, 4
          %s3428 = int_to_ptr.hbm [resolvable:$true] %s3427
          %3430 = dma.vmem_to_hbm [thread:$0]  %s3426, 64, %s3428, %s3404
        $region76: #{mtpnet_forward.1} parent=59 // pred_fallthru
          _
        // Predicated region
        $region77: #{mtpnet_forward.1} parent=59 // pred_check
          %p3431 = pneg %p310
        $region78: #{mtpnet_forward.1} parent=59 // pred_check_branch
          %3433 = sbr.rel (%p3431) target = $region80
        $region79: #{mtpnet_forward.1} parent=59 // pred_region
          _
        $region80: #{mtpnet_forward.1} parent=59 // pred_fallthru
          _
        // Predicated region
        $region81: #{mtpnet_forward.1} parent=59 // pred_check
          %p3434 = pneg %p336
        $region82: #{mtpnet_forward.1} parent=59 // pred_check_branch
          %3436 = sbr.rel (%p3434) target = $region84
        $region83: #{mtpnet_forward.1} parent=59 // pred_region
          _
        $region84: #{mtpnet_forward.1} parent=59 // pred_fallthru
          _
      $region60: #{mtpnet_forward.1} parent=5 // pred_fallthru
        _
      %p3437 = scmp.le.s32.totalorder 2, %s22
      // Predicated region
      $region85: #{mtpnet_forward.1} parent=5 // pred_check
        %p3438 = pneg %p3437
      $region86: #{mtpnet_forward.1} parent=5 // pred_check_branch
        %3440 = sbr.rel (%p3438) target = $region88
      $region87: #{mtpnet_forward.1} parent=5 // pred_region
        %s3441 = ssub.s32 %s22, 2
        // Predicated region
        $region89: #{mtpnet_forward.1} parent=87 // pred_check
          %p3442 = pneg %p290
        $region90: #{mtpnet_forward.1} parent=87 // pred_check_branch
          %3444 = sbr.rel (%p3442) target = $region92
        $region91: #{mtpnet_forward.1} parent=87 // pred_region
          %s3445 = sand.u32 %s275, 1
          %s3446 = scalar_lea.sflag [#allocation4], %s3445
          %s3447 = sand.u32 %s275, 1
          %s3448 = smul.addr %s3447, 4
          %s3449 = scalar_lea.vmem [#allocation3], %s3448
          %3451 = dma.done %s3446, 64
        $region92: #{mtpnet_forward.1} parent=87 // pred_fallthru
          _
        // Predicated region
        $region93: #{mtpnet_forward.1} parent=87 // pred_check
          %p3452 = pneg %p316
        $region94: #{mtpnet_forward.1} parent=87 // pred_check_branch
          %3454 = sbr.rel (%p3452) target = $region96
        $region95: #{mtpnet_forward.1} parent=87 // pred_region
          %p3455 = scmp.lt.s32.totalorder %s33, 1
          %s3456 = scalar_select %p3455, %s33, 1
          %s3457 = smul.addr %s3456, 2
          %s3458 = smul.addr %s3457, 8
          %s3459 = scalar_lea.vmem %s11, %s3458
        $region96: #{mtpnet_forward.1} parent=87 // pred_fallthru
          _
        // Predicated region
        $region97: #{mtpnet_forward.1} parent=87 // pred_check
          %p3460 = pneg %p342
        $region98: #{mtpnet_forward.1} parent=87 // pred_check_branch
          %3462 = sbr.rel (%p3460) target = $region100
        $region99: #{mtpnet_forward.1} parent=87 // pred_region
          %p3463 = scmp.lt.s32.totalorder %s33, 1
          %s3464 = scalar_select %p3463, %s33, 1
          %s3465 = smul.addr %s3464, 2
          %s3466 = scalar_lea.vmem %s12, %s3465
        $region100: #{mtpnet_forward.1} parent=87 // pred_fallthru
          _
      $region88: #{mtpnet_forward.1} parent=5 // pred_fallthru
        _
    $region6: #{mtpnet_forward.1} parent=1 // loop_footer
      %s26 = sadd.s32 1, %s22
    $region7: #{mtpnet_forward.1} parent=1 // loop_footer_branch
      %21 = sbr.rel target = $region3
    $region8: #{mtpnet_forward.1} parent=1 // loop_exit
      _
    %3467 = vsyncpa [#allocation4], 1
    %s3468 = scalar_lea.sflag [#allocation4], 1
    %3469 = vsyncpa %s3468, 1

</llo_original>
